<compile_context>
chip_gen: v5e
topology: v5e:2x2
jax: 0.10.0
libtpu: 0.0.40
codegen_flags: <defaults>
</compile_context>

<pallas_src>
import math

import jax
import jax.numpy as jnp
from jax.experimental import pallas as pl
from jax.experimental.pallas import tpu as pltpu

# ------------------------- small, self-consistent config -------------------------
BATCH = 2
TOK_LEN = 8            # token sequence length fed to the encoder stand-in
VOCAB = 32
HIDDEN = 32            # stand-in for cfg.hidden_size
CONV_CH = 32           # conv_channels
SSM_N = 16             # ssm_dim
N_LAYERS = 2           # n_transformer_layers
N_HEADS = 4
HEAD_DIM = CONV_CH // N_HEADS
FFN = CONV_CH * 2      # dim_feedforward
FC_HID = 64
SEQ_LENGTH = 16        # constructor seq_length
L_MAX = 1 << (SEQ_LENGTH - 1).bit_length()            # 16
CONV_K = 8
CONV_PAD = 4
L_OUT = TOK_LEN + 2 * CONV_PAD - CONV_K + 1           # 9 valid conv positions
PAD_RIGHT = L_MAX + CONV_K - 1 - CONV_PAD - TOK_LEN   # extra right zero pad for im2col
BL = BATCH * L_MAX                                    # 32 flattened rows
LN_EPS = 1e-5


def _ln(x, g, b):
    """LayerNorm over the last (feature) dim. x: (R, C); g, b: (1, C)."""
    mu = jnp.mean(x, axis=-1, keepdims=True)
    var = jnp.mean(jnp.square(x - mu), axis=-1, keepdims=True)
    return (x - mu) * jax.lax.rsqrt(var + LN_EPS) * g + b


# ------------------------------- fused Pallas kernel ------------------------------
def fused_kernel(emb_ref, convw_ref, convb_ref, s4k_ref, s4d_ref,
                 wq_ref, bq_ref, wk_ref, bk_ref, wv_ref, bv_ref, wo_ref, bo_ref,
                 g1_ref, be1_ref, w1_ref, b1_ref, w2_ref, b2_ref, g2_ref, be2_ref,
                 fw1_ref, fb1_ref, fw2_ref, fb2_ref, o_ref):
    """Entire forward pass.

    emb:   (B, TOK_LEN, HIDDEN)              token embeddings (DNABERT stand-in output)
    convw: (CONV_K*HIDDEN, CONV_CH)          im2col-flattened conv weight
    convb: (1, CONV_CH)
    s4k:   (L_MAX, CONV_CH)                  S4D causal conv kernel (time, channel)
    s4d:   (1, CONV_CH)                      S4 skip term D
    per-layer stacks (leading dim N_LAYERS): wq/bq/wk/bk/wv/bv/wo/bo, g1/be1,
                                             w1/b1 (FFN in), w2/b2 (FFN out), g2/be2
    fw1/fb1/fw2/fb2: FC head
    o:     (B, 1)                            sigmoid output
    """
    # ---------------- Conv1d(k=8, pad=4) + ReLU, via im2col (1 matmul / batch) ----
    emb = emb_ref[...]                                            # (B, TOK_LEN, H)
    wf = convw_ref[...]                                           # (K*H, C)
    bias = convb_ref[...]                                         # (1, C)
    zpad_l = jnp.zeros((CONV_PAD, HIDDEN), jnp.float32)
    zpad_r = jnp.zeros((PAD_RIGHT, HIDDEN), jnp.float32)
    conv_rows = []
    for b in range(BATCH):
        xp = jnp.concatenate([zpad_l, emb[b], zpad_r], axis=0)    # (L_MAX+K-1, H)
        patches = jnp.concatenate(
            [xp[kk:kk + L_MAX, :] for kk in range(CONV_K)], axis=-1)   # (L_MAX, K*H)
        cb = jnp.dot(patches, wf, preferred_element_type=jnp.float32) + bias
        conv_rows.append(jnp.maximum(cb, 0.0))                    # (L_MAX, C)
    x = jnp.concatenate(conv_rows, axis=0)                        # (B*L_MAX, C) = (32, 32)

    # time index of each flattened row within its batch element
    row = jax.lax.broadcasted_iota(jnp.int32, (BL, CONV_CH), 0)
    local_l = row % L_MAX
    # zero the padded time steps (== F.pad(conv_out) up to l_max in the reference)
    x = jnp.where(local_l < L_OUT, x, 0.0)

    # ---------------- S4: causal depthwise SSM conv + D skip ---------------------
    # y[l] = sum_{t<=l} K[t] * x[l-t] + D * x[l], per channel.  Accumulated entirely
    # in registers; single logical result, no ref read-modify-write chain.
    # TODO(synk): S4Layer source was not provided; this implements the core
    # S4D-style causal SSM convolution + skip term only.
    ks = s4k_ref[...]                                             # (L_MAX, C)
    acc = x * s4d_ref[...]                                        # (BL, C)
    for t in range(L_MAX):
        if t == 0:
            sh = x
        else:
            sh = jnp.concatenate(
                [jnp.zeros((t, CONV_CH), jnp.float32), x[:BL - t, :]], axis=0)
            sh = jnp.where(local_l >= t, sh, 0.0)   # no leakage across the batch seam
        acc = acc + sh * ks[t:t + 1, :]
    x = acc                                                       # (BL, C)

    # ---------------- 2x TransformerEncoderLayer (post-norm, ReLU FFN) -----------
    scale = 1.0 / math.sqrt(HEAD_DIM)
    for li in range(N_LAYERS):
        # full-width Q/K/V projections on the batch-flattened activation
        q = jnp.dot(x, wq_ref[li], preferred_element_type=jnp.float32) + bq_ref[li]
        k = jnp.dot(x, wk_ref[li], preferred_element_type=jnp.float32) + bk_ref[li]
        v = jnp.dot(x, wv_ref[li], preferred_element_type=jnp.float32) + bv_ref[li]
        per_batch = []
        for b in range(BATCH):
            r0 = b * L_MAX
            heads = []
            for h in range(N_HEADS):
                c0 = h * HEAD_DIM
                qh = q[r0:r0 + L_MAX, c0:c0 + HEAD_DIM]           # (L_MAX, dh)
                # keys/values restricted to the L_OUT valid positions -> identical
                # to the reference, which slices to l_out before the transformer.
                kh = k[r0:r0 + L_OUT, c0:c0 + HEAD_DIM]           # (L_OUT, dh)
                vh = v[r0:r0 + L_OUT, c0:c0 + HEAD_DIM]
                s = jax.lax.dot_general(qh, kh, (((1,), (1,)), ((), ())),
                                        preferred_element_type=jnp.float32) * scale
                s = s - jnp.max(s, axis=-1, keepdims=True)
                e = jnp.exp(s)
                p = e * pl.reciprocal(jnp.sum(e, axis=-1, keepdims=True), approx=True)
                heads.append(jnp.dot(p, vh, preferred_element_type=jnp.float32))
            per_batch.append(jnp.concatenate(heads, axis=-1))     # (L_MAX, C)
        attn = jnp.concatenate(per_batch, axis=0)                 # (BL, C)
        attn = jnp.dot(attn, wo_ref[li],
                       preferred_element_type=jnp.float32) + bo_ref[li]
        y1 = _ln(x + attn, g1_ref[li], be1_ref[li])
        ff = jnp.maximum(jnp.dot(y1, w1_ref[li],
                                 preferred_element_type=jnp.float32) + b1_ref[li], 0.0)
        ff = jnp.dot(ff, w2_ref[li],
                     preferred_element_type=jnp.float32) + b2_ref[li]
        x = _ln(y1 + ff, g2_ref[li], be2_ref[li])

    # ---------------- AdaptiveMaxPool1d(1) over valid positions + FC head --------
    pooled = jnp.concatenate(
        [jnp.max(x[b * L_MAX:b * L_MAX + L_OUT, :], axis=0, keepdims=True)
         for b in range(BATCH)], axis=0)                          # (B, C)
    h1 = jnp.maximum(jnp.dot(pooled, fw1_ref[...],
                             preferred_element_type=jnp.float32) + fb1_ref[...], 0.0)
    z = jnp.dot(h1, fw2_ref[...],
                preferred_element_type=jnp.float32) + fb2_ref[...]
    o_ref[...] = pl.reciprocal(1.0 + jnp.exp(-z), approx=True)    # sigmoid, (B, 1)


# ------------------------------- parameter init ------------------------------------
def _make_s4_params(key):
    k1, k2, k3, k4 = jax.random.split(key, 4)
    log_dt = jax.random.uniform(k1, (CONV_CH,), jnp.float32,
                                minval=math.log(1e-3), maxval=math.log(1e-1))
    dt = jnp.exp(log_dt)                                               # (C,)
    a = -0.5 + 1j * math.pi * jnp.arange(SSM_N, dtype=jnp.float32)     # (N,) S4D-Lin
    cc = (jax.random.normal(k2, (CONV_CH, SSM_N), jnp.float32)
          + 1j * jax.random.normal(k3, (CONV_CH, SSM_N), jnp.float32)) * (0.5 ** 0.5)
    dt_a = dt[:, None] * a[None, :]                                    # (C, N)
    ell = jnp.arange(L_MAX, dtype=jnp.float32)
    vand = jnp.exp(dt_a[:, :, None] * ell[None, None, :])              # (C, N, L)
    coeff = cc * (jnp.exp(dt_a) - 1.0) / a                             # (C, N)
    kern = 2.0 * jnp.einsum("dn,dnl->dl", coeff, vand).real            # (C, L)
    d_skip = jax.random.normal(k4, (CONV_CH,), jnp.float32)
    return kern.astype(jnp.float32), d_skip


def init_params(key):
    ks = iter(jax.random.split(key, 64))

    def nrm(shape, scale=0.05):
        return scale * jax.random.normal(next(ks), shape, dtype=jnp.float32)

    def stack_nrm(shape, scale=0.05):
        return jnp.stack([nrm(shape, scale) for _ in range(N_LAYERS)])

    p = {}
    # TODO(synk): the pretrained DNABERT-2 encoder cannot be reproduced in-script;
    # a deterministic token-embedding table stands in for its output.
    p["emb"] = nrm((VOCAB, HIDDEN), 0.5)
    # Conv weight stored already im2col-flattened: row index = tap*HIDDEN + in_ch.
    p["conv_w"] = nrm((CONV_K, HIDDEN, CONV_CH), 0.1).reshape(CONV_K * HIDDEN, CONV_CH)
    p["conv_b"] = jnp.zeros((1, CONV_CH), jnp.float32)

    kern, d_skip = _make_s4_params(next(ks))
    p["s4_K"] = kern.T                                   # (L_MAX, C)
    p["s4_D"] = d_skip.reshape(1, CONV_CH)

    # transformer layer weights, stacked over layers (leading dim = N_LAYERS)
    p["wq"] = stack_nrm((CONV_CH, CONV_CH))
    p["wk"] = stack_nrm((CONV_CH, CONV_CH))
    p["wv"] = stack_nrm((CONV_CH, CONV_CH))
    p["wo"] = stack_nrm((CONV_CH, CONV_CH))
    p["bq"] = jnp.zeros((N_LAYERS, 1, CONV_CH), jnp.float32)
    p["bk"] = jnp.zeros((N_LAYERS, 1, CONV_CH), jnp.float32)
    p["bv"] = jnp.zeros((N_LAYERS, 1, CONV_CH), jnp.float32)
    p["bo"] = jnp.zeros((N_LAYERS, 1, CONV_CH), jnp.float32)
    p["g1"] = jnp.ones((N_LAYERS, 1, CONV_CH), jnp.float32)
    p["be1"] = jnp.zeros((N_LAYERS, 1, CONV_CH), jnp.float32)
    p["w1"] = stack_nrm((CONV_CH, FFN))
    p["b1"] = jnp.zeros((N_LAYERS, 1, FFN), jnp.float32)
    p["w2"] = stack_nrm((FFN, CONV_CH))
    p["b2"] = jnp.zeros((N_LAYERS, 1, CONV_CH), jnp.float32)
    p["g2"] = jnp.ones((N_LAYERS, 1, CONV_CH), jnp.float32)
    p["be2"] = jnp.zeros((N_LAYERS, 1, CONV_CH), jnp.float32)

    p["fc_w1"] = nrm((CONV_CH, FC_HID))
    p["fc_b1"] = jnp.zeros((1, FC_HID), jnp.float32)
    p["fc_w2"] = nrm((FC_HID, 1))
    p["fc_b2"] = jnp.zeros((1, 1), jnp.float32)
    return p


# ---------------------------------- forward ----------------------------------------
def forward(params, input_ids):
    # Embedding lookup (stand-in for DNABERT-2) is the only op outside the kernel.
    emb = jnp.take(params["emb"], input_ids, axis=0)               # (B, TOK_LEN, H)

    args = (emb, params["conv_w"], params["conv_b"], params["s4_K"], params["s4_D"],
            params["wq"], params["bq"], params["wk"], params["bk"],
            params["wv"], params["bv"], params["wo"], params["bo"],
            params["g1"], params["be1"], params["w1"], params["b1"],
            params["w2"], params["b2"], params["g2"], params["be2"],
            params["fc_w1"], params["fc_b1"], params["fc_w2"], params["fc_b2"])

    # Single fused pallas_call, grid=() -> one TensorCore.  When scaling BATCH /
    # seq_length up, add a leading batch grid axis with
    # dimension_semantics=("parallel",) so the second v7x TensorCore is used.
    out = pl.pallas_call(
        fused_kernel,
        out_shape=jax.ShapeDtypeStruct((BATCH, 1), jnp.float32),
        in_specs=[pl.BlockSpec(memory_space=pltpu.MemorySpace.VMEM)
                  for _ in range(len(args))],
        out_specs=pl.BlockSpec(memory_space=pltpu.MemorySpace.VMEM),
    )(*args)
    return out[:, 0]                                               # (B,)


if __name__ == "__main__":
    key = jax.random.PRNGKey(0)
    pkey, dkey = jax.random.split(key)
    params = init_params(pkey)
    input_ids = jax.random.randint(dkey, (BATCH, TOK_LEN), 0, VOCAB, dtype=jnp.int32)

    logits = jax.jit(forward)(params, input_ids)
    jax.block_until_ready(logits)
    assert logits.shape == (BATCH,)
    assert bool(jnp.all(jnp.isfinite(logits)))
    print("KERNEL_OK")
</pallas_src>

<mosaic_0001>
module attributes {stable_mosaic.version = 11 : i64} {
  func.func @fused_kernel(%arg0: memref<2x8x32xf32, #tpu.memory_space<vmem>>, %arg1: memref<256x32xf32, #tpu.memory_space<vmem>>, %arg2: memref<1x32xf32, #tpu.memory_space<vmem>>, %arg3: memref<16x32xf32, #tpu.memory_space<vmem>>, %arg4: memref<1x32xf32, #tpu.memory_space<vmem>>, %arg5: memref<2x32x32xf32, #tpu.memory_space<vmem>>, %arg6: memref<2x1x32xf32, #tpu.memory_space<vmem>>, %arg7: memref<2x32x32xf32, #tpu.memory_space<vmem>>, %arg8: memref<2x1x32xf32, #tpu.memory_space<vmem>>, %arg9: memref<2x32x32xf32, #tpu.memory_space<vmem>>, %arg10: memref<2x1x32xf32, #tpu.memory_space<vmem>>, %arg11: memref<2x32x32xf32, #tpu.memory_space<vmem>>, %arg12: memref<2x1x32xf32, #tpu.memory_space<vmem>>, %arg13: memref<2x1x32xf32, #tpu.memory_space<vmem>>, %arg14: memref<2x1x32xf32, #tpu.memory_space<vmem>>, %arg15: memref<2x32x64xf32, #tpu.memory_space<vmem>>, %arg16: memref<2x1x64xf32, #tpu.memory_space<vmem>>, %arg17: memref<2x64x32xf32, #tpu.memory_space<vmem>>, %arg18: memref<2x1x32xf32, #tpu.memory_space<vmem>>, %arg19: memref<2x1x32xf32, #tpu.memory_space<vmem>>, %arg20: memref<2x1x32xf32, #tpu.memory_space<vmem>>, %arg21: memref<32x64xf32, #tpu.memory_space<vmem>>, %arg22: memref<1x64xf32, #tpu.memory_space<vmem>>, %arg23: memref<64x1xf32, #tpu.memory_space<vmem>>, %arg24: memref<1x1xf32, #tpu.memory_space<vmem>>, %arg25: memref<2x1xf32, #tpu.memory_space<vmem>>) attributes {dimension_semantics = [], scalar_prefetch = 0 : i64, scratch_operands = 0 : i64, tpu.core_type = #tpu.core_type<tc>} {
    %c0 = arith.constant 0 : index
    %c0_0 = arith.constant 0 : index
    %c0_1 = arith.constant 0 : index
    %0 = vector.load %arg0[%c0, %c0_0, %c0_1] : memref<2x8x32xf32, #tpu.memory_space<vmem>>, vector<2x8x32xf32>
    %c0_2 = arith.constant 0 : index
    %c0_3 = arith.constant 0 : index
    %1 = vector.load %arg1[%c0_2, %c0_3] : memref<256x32xf32, #tpu.memory_space<vmem>>, vector<256x32xf32>
    %c0_4 = arith.constant 0 : index
    %c0_5 = arith.constant 0 : index
    %2 = vector.load %arg2[%c0_4, %c0_5] : memref<1x32xf32, #tpu.memory_space<vmem>>, vector<1x32xf32>
    %cst = arith.constant 0.000000e+00 : f32
    %3 = vector.broadcast %cst : f32 to vector<4x32xf32>
    %cst_6 = arith.constant 0.000000e+00 : f32
    %4 = vector.broadcast %cst_6 : f32 to vector<11x32xf32>
    %5 = vector.extract_strided_slice %0 {offsets = [0, 0, 0], sizes = [1, 8, 32], strides = [1, 1, 1]} : vector<2x8x32xf32> to vector<1x8x32xf32>
    %6 = vector.shape_cast %5 : vector<1x8x32xf32> to vector<8x32xf32>
    %7 = tpu.concatenate %3, %6, %4 in 0 : vector<4x32xf32>, vector<8x32xf32>, vector<11x32xf32> -> vector<23x32xf32>
    %8 = vector.extract_strided_slice %7 {offsets = [0, 0], sizes = [16, 32], strides = [1, 1]} : vector<23x32xf32> to vector<16x32xf32>
    %9 = vector.extract_strided_slice %7 {offsets = [1, 0], sizes = [16, 32], strides = [1, 1]} : vector<23x32xf32> to vector<16x32xf32>
    %10 = vector.extract_strided_slice %7 {offsets = [2, 0], sizes = [16, 32], strides = [1, 1]} : vector<23x32xf32> to vector<16x32xf32>
    %11 = vector.extract_strided_slice %7 {offsets = [3, 0], sizes = [16, 32], strides = [1, 1]} : vector<23x32xf32> to vector<16x32xf32>
    %12 = vector.extract_strided_slice %7 {offsets = [4, 0], sizes = [16, 32], strides = [1, 1]} : vector<23x32xf32> to vector<16x32xf32>
    %13 = vector.extract_strided_slice %7 {offsets = [5, 0], sizes = [16, 32], strides = [1, 1]} : vector<23x32xf32> to vector<16x32xf32>
    %14 = vector.extract_strided_slice %7 {offsets = [6, 0], sizes = [16, 32], strides = [1, 1]} : vector<23x32xf32> to vector<16x32xf32>
    %15 = vector.extract_strided_slice %7 {offsets = [7, 0], sizes = [16, 32], strides = [1, 1]} : vector<23x32xf32> to vector<16x32xf32>
    %16 = tpu.concatenate %8, %9, %10, %11, %12, %13, %14, %15 in 1 : vector<16x32xf32>, vector<16x32xf32>, vector<16x32xf32>, vector<16x32xf32>, vector<16x32xf32>, vector<16x32xf32>, vector<16x32xf32>, vector<16x32xf32> -> vector<16x256xf32>
    %cst_7 = arith.constant dense<0.000000e+00> : vector<16x32xf32>
    %17 = tpu.matmul %16, %1, %cst_7 {dimension_numbers = #tpu.dot_dimension_numbers<[1], [0], [0], [1], [0, 0, 1, 1], [], []>} : vector<16x256xf32>, vector<256x32xf32>, vector<16x32xf32> -> vector<16x32xf32>
    %18 = vector.broadcast %2 : vector<1x32xf32> to vector<16x32xf32>
    %19 = arith.addf %17, %18 : vector<16x32xf32>
    %cst_8 = arith.constant 0.000000e+00 : f32
    %20 = vector.broadcast %cst_8 : f32 to vector<16x32xf32>
    %21 = arith.maximumf %19, %20 : vector<16x32xf32>
    %22 = vector.extract_strided_slice %0 {offsets = [1, 0, 0], sizes = [1, 8, 32], strides = [1, 1, 1]} : vector<2x8x32xf32> to vector<1x8x32xf32>
    %23 = vector.shape_cast %22 : vector<1x8x32xf32> to vector<8x32xf32>
    %24 = tpu.concatenate %3, %23, %4 in 0 : vector<4x32xf32>, vector<8x32xf32>, vector<11x32xf32> -> vector<23x32xf32>
    %25 = vector.extract_strided_slice %24 {offsets = [0, 0], sizes = [16, 32], strides = [1, 1]} : vector<23x32xf32> to vector<16x32xf32>
    %26 = vector.extract_strided_slice %24 {offsets = [1, 0], sizes = [16, 32], strides = [1, 1]} : vector<23x32xf32> to vector<16x32xf32>
    %27 = vector.extract_strided_slice %24 {offsets = [2, 0], sizes = [16, 32], strides = [1, 1]} : vector<23x32xf32> to vector<16x32xf32>
    %28 = vector.extract_strided_slice %24 {offsets = [3, 0], sizes = [16, 32], strides = [1, 1]} : vector<23x32xf32> to vector<16x32xf32>
    %29 = vector.extract_strided_slice %24 {offsets = [4, 0], sizes = [16, 32], strides = [1, 1]} : vector<23x32xf32> to vector<16x32xf32>
    %30 = vector.extract_strided_slice %24 {offsets = [5, 0], sizes = [16, 32], strides = [1, 1]} : vector<23x32xf32> to vector<16x32xf32>
    %31 = vector.extract_strided_slice %24 {offsets = [6, 0], sizes = [16, 32], strides = [1, 1]} : vector<23x32xf32> to vector<16x32xf32>
    %32 = vector.extract_strided_slice %24 {offsets = [7, 0], sizes = [16, 32], strides = [1, 1]} : vector<23x32xf32> to vector<16x32xf32>
    %33 = tpu.concatenate %25, %26, %27, %28, %29, %30, %31, %32 in 1 : vector<16x32xf32>, vector<16x32xf32>, vector<16x32xf32>, vector<16x32xf32>, vector<16x32xf32>, vector<16x32xf32>, vector<16x32xf32>, vector<16x32xf32> -> vector<16x256xf32>
    %cst_9 = arith.constant dense<0.000000e+00> : vector<16x32xf32>
    %34 = tpu.matmul %33, %1, %cst_9 {dimension_numbers = #tpu.dot_dimension_numbers<[1], [0], [0], [1], [0, 0, 1, 1], [], []>} : vector<16x256xf32>, vector<256x32xf32>, vector<16x32xf32> -> vector<16x32xf32>
    %35 = vector.broadcast %2 : vector<1x32xf32> to vector<16x32xf32>
    %36 = arith.addf %34, %35 : vector<16x32xf32>
    %cst_10 = arith.constant 0.000000e+00 : f32
    %37 = vector.broadcast %cst_10 : f32 to vector<16x32xf32>
    %38 = arith.maximumf %36, %37 : vector<16x32xf32>
    %39 = tpu.concatenate %21, %38 in 0 : vector<16x32xf32>, vector<16x32xf32> -> vector<32x32xf32>
    %40 = tpu.iota {dimensions = array<i32: 0>} : vector<32x32xi32>
    %c16_i32 = arith.constant 16 : i32
    %c0_i32 = arith.constant 0 : i32
    %41 = arith.cmpi eq, %c16_i32, %c0_i32 : i32
    %c1_i32 = arith.constant 1 : i32
    %42 = arith.select %41, %c1_i32, %c16_i32 : i32
    %43 = vector.broadcast %42 : i32 to vector<32x32xi32>
    %44 = arith.remsi %40, %43 : vector<32x32xi32>
    %c0_i32_11 = arith.constant 0 : i32
    %45 = vector.broadcast %c0_i32_11 : i32 to vector<32x32xi32>
    %46 = arith.cmpi ne, %44, %45 : vector<32x32xi32>
    %c0_i32_12 = arith.constant 0 : i32
    %47 = vector.broadcast %c0_i32_12 : i32 to vector<32x32xi32>
    %48 = arith.cmpi slt, %44, %47 : vector<32x32xi32>
    %c0_i32_13 = arith.constant 0 : i32
    %49 = arith.cmpi slt, %42, %c0_i32_13 : i32
    %50 = vector.broadcast %49 : i1 to vector<32x32xi1>
    %51 = vector.broadcast %50 : vector<32x32xi1> to vector<32x32xi1>
    %52 = arith.xori %48, %51 : vector<32x32xi1>
    %53 = arith.andi %52, %46 : vector<32x32xi1>
    %54 = vector.broadcast %42 : i32 to vector<32x32xi32>
    %55 = arith.addi %44, %54 : vector<32x32xi32>
    %56 = arith.select %53, %55, %44 : vector<32x32xi1>, vector<32x32xi32>
    %c9_i32 = arith.constant 9 : i32
    %57 = vector.broadcast %c9_i32 : i32 to vector<32x32xi32>
    %58 = arith.cmpi slt, %56, %57 : vector<32x32xi32>
    %cst_14 = arith.constant 0.000000e+00 : f32
    %59 = vector.broadcast %cst_14 : f32 to vector<32x32xf32>
    %60 = arith.select %58, %39, %59 : vector<32x32xi1>, vector<32x32xf32>
    %c0_15 = arith.constant 0 : index
    %c0_16 = arith.constant 0 : index
    %61 = vector.load %arg3[%c0_15, %c0_16] : memref<16x32xf32, #tpu.memory_space<vmem>>, vector<16x32xf32>
    %c0_17 = arith.constant 0 : index
    %c0_18 = arith.constant 0 : index
    %62 = vector.load %arg4[%c0_17, %c0_18] : memref<1x32xf32, #tpu.memory_space<vmem>>, vector<1x32xf32>
    %63 = vector.broadcast %62 : vector<1x32xf32> to vector<32x32xf32>
    %64 = arith.mulf %60, %63 : vector<32x32xf32>
    %65 = vector.extract_strided_slice %61 {offsets = [0, 0], sizes = [1, 32], strides = [1, 1]} : vector<16x32xf32> to vector<1x32xf32>
    %66 = vector.broadcast %65 : vector<1x32xf32> to vector<32x32xf32>
    %67 = arith.mulf %60, %66 : vector<32x32xf32>
    %68 = arith.addf %64, %67 : vector<32x32xf32>
    %cst_19 = arith.constant 0.000000e+00 : f32
    %69 = vector.broadcast %cst_19 : f32 to vector<1x32xf32>
    %70 = vector.extract_strided_slice %60 {offsets = [0, 0], sizes = [31, 32], strides = [1, 1]} : vector<32x32xf32> to vector<31x32xf32>
    %71 = tpu.concatenate %69, %70 in 0 : vector<1x32xf32>, vector<31x32xf32> -> vector<32x32xf32>
    %c1_i32_20 = arith.constant 1 : i32
    %72 = vector.broadcast %c1_i32_20 : i32 to vector<32x32xi32>
    %73 = arith.cmpi sge, %56, %72 : vector<32x32xi32>
    %cst_21 = arith.constant 0.000000e+00 : f32
    %74 = vector.broadcast %cst_21 : f32 to vector<32x32xf32>
    %75 = arith.select %73, %71, %74 : vector<32x32xi1>, vector<32x32xf32>
    %76 = vector.extract_strided_slice %61 {offsets = [1, 0], sizes = [1, 32], strides = [1, 1]} : vector<16x32xf32> to vector<1x32xf32>
    %77 = vector.broadcast %76 : vector<1x32xf32> to vector<32x32xf32>
    %78 = arith.mulf %75, %77 : vector<32x32xf32>
    %79 = arith.addf %68, %78 : vector<32x32xf32>
    %cst_22 = arith.constant 0.000000e+00 : f32
    %80 = vector.broadcast %cst_22 : f32 to vector<2x32xf32>
    %81 = vector.extract_strided_slice %60 {offsets = [0, 0], sizes = [30, 32], strides = [1, 1]} : vector<32x32xf32> to vector<30x32xf32>
    %82 = tpu.concatenate %80, %81 in 0 : vector<2x32xf32>, vector<30x32xf32> -> vector<32x32xf32>
    %c2_i32 = arith.constant 2 : i32
    %83 = vector.broadcast %c2_i32 : i32 to vector<32x32xi32>
    %84 = arith.cmpi sge, %56, %83 : vector<32x32xi32>
    %cst_23 = arith.constant 0.000000e+00 : f32
    %85 = vector.broadcast %cst_23 : f32 to vector<32x32xf32>
    %86 = arith.select %84, %82, %85 : vector<32x32xi1>, vector<32x32xf32>
    %87 = vector.extract_strided_slice %61 {offsets = [2, 0], sizes = [1, 32], strides = [1, 1]} : vector<16x32xf32> to vector<1x32xf32>
    %88 = vector.broadcast %87 : vector<1x32xf32> to vector<32x32xf32>
    %89 = arith.mulf %86, %88 : vector<32x32xf32>
    %90 = arith.addf %79, %89 : vector<32x32xf32>
    %cst_24 = arith.constant 0.000000e+00 : f32
    %91 = vector.broadcast %cst_24 : f32 to vector<3x32xf32>
    %92 = vector.extract_strided_slice %60 {offsets = [0, 0], sizes = [29, 32], strides = [1, 1]} : vector<32x32xf32> to vector<29x32xf32>
    %93 = tpu.concatenate %91, %92 in 0 : vector<3x32xf32>, vector<29x32xf32> -> vector<32x32xf32>
    %c3_i32 = arith.constant 3 : i32
    %94 = vector.broadcast %c3_i32 : i32 to vector<32x32xi32>
    %95 = arith.cmpi sge, %56, %94 : vector<32x32xi32>
    %cst_25 = arith.constant 0.000000e+00 : f32
    %96 = vector.broadcast %cst_25 : f32 to vector<32x32xf32>
    %97 = arith.select %95, %93, %96 : vector<32x32xi1>, vector<32x32xf32>
    %98 = vector.extract_strided_slice %61 {offsets = [3, 0], sizes = [1, 32], strides = [1, 1]} : vector<16x32xf32> to vector<1x32xf32>
    %99 = vector.broadcast %98 : vector<1x32xf32> to vector<32x32xf32>
    %100 = arith.mulf %97, %99 : vector<32x32xf32>
    %101 = arith.addf %90, %100 : vector<32x32xf32>
    %cst_26 = arith.constant 0.000000e+00 : f32
    %102 = vector.broadcast %cst_26 : f32 to vector<4x32xf32>
    %103 = vector.extract_strided_slice %60 {offsets = [0, 0], sizes = [28, 32], strides = [1, 1]} : vector<32x32xf32> to vector<28x32xf32>
    %104 = tpu.concatenate %102, %103 in 0 : vector<4x32xf32>, vector<28x32xf32> -> vector<32x32xf32>
    %c4_i32 = arith.constant 4 : i32
    %105 = vector.broadcast %c4_i32 : i32 to vector<32x32xi32>
    %106 = arith.cmpi sge, %56, %105 : vector<32x32xi32>
    %cst_27 = arith.constant 0.000000e+00 : f32
    %107 = vector.broadcast %cst_27 : f32 to vector<32x32xf32>
    %108 = arith.select %106, %104, %107 : vector<32x32xi1>, vector<32x32xf32>
    %109 = vector.extract_strided_slice %61 {offsets = [4, 0], sizes = [1, 32], strides = [1, 1]} : vector<16x32xf32> to vector<1x32xf32>
    %110 = vector.broadcast %109 : vector<1x32xf32> to vector<32x32xf32>
    %111 = arith.mulf %108, %110 : vector<32x32xf32>
    %112 = arith.addf %101, %111 : vector<32x32xf32>
    %cst_28 = arith.constant 0.000000e+00 : f32
    %113 = vector.broadcast %cst_28 : f32 to vector<5x32xf32>
    %114 = vector.extract_strided_slice %60 {offsets = [0, 0], sizes = [27, 32], strides = [1, 1]} : vector<32x32xf32> to vector<27x32xf32>
    %115 = tpu.concatenate %113, %114 in 0 : vector<5x32xf32>, vector<27x32xf32> -> vector<32x32xf32>
    %c5_i32 = arith.constant 5 : i32
    %116 = vector.broadcast %c5_i32 : i32 to vector<32x32xi32>
    %117 = arith.cmpi sge, %56, %116 : vector<32x32xi32>
    %cst_29 = arith.constant 0.000000e+00 : f32
    %118 = vector.broadcast %cst_29 : f32 to vector<32x32xf32>
    %119 = arith.select %117, %115, %118 : vector<32x32xi1>, vector<32x32xf32>
    %120 = vector.extract_strided_slice %61 {offsets = [5, 0], sizes = [1, 32], strides = [1, 1]} : vector<16x32xf32> to vector<1x32xf32>
    %121 = vector.broadcast %120 : vector<1x32xf32> to vector<32x32xf32>
    %122 = arith.mulf %119, %121 : vector<32x32xf32>
    %123 = arith.addf %112, %122 : vector<32x32xf32>
    %cst_30 = arith.constant 0.000000e+00 : f32
    %124 = vector.broadcast %cst_30 : f32 to vector<6x32xf32>
    %125 = vector.extract_strided_slice %60 {offsets = [0, 0], sizes = [26, 32], strides = [1, 1]} : vector<32x32xf32> to vector<26x32xf32>
    %126 = tpu.concatenate %124, %125 in 0 : vector<6x32xf32>, vector<26x32xf32> -> vector<32x32xf32>
    %c6_i32 = arith.constant 6 : i32
    %127 = vector.broadcast %c6_i32 : i32 to vector<32x32xi32>
    %128 = arith.cmpi sge, %56, %127 : vector<32x32xi32>
    %cst_31 = arith.constant 0.000000e+00 : f32
    %129 = vector.broadcast %cst_31 : f32 to vector<32x32xf32>
    %130 = arith.select %128, %126, %129 : vector<32x32xi1>, vector<32x32xf32>
    %131 = vector.extract_strided_slice %61 {offsets = [6, 0], sizes = [1, 32], strides = [1, 1]} : vector<16x32xf32> to vector<1x32xf32>
    %132 = vector.broadcast %131 : vector<1x32xf32> to vector<32x32xf32>
    %133 = arith.mulf %130, %132 : vector<32x32xf32>
    %134 = arith.addf %123, %133 : vector<32x32xf32>
    %cst_32 = arith.constant 0.000000e+00 : f32
    %135 = vector.broadcast %cst_32 : f32 to vector<7x32xf32>
    %136 = vector.extract_strided_slice %60 {offsets = [0, 0], sizes = [25, 32], strides = [1, 1]} : vector<32x32xf32> to vector<25x32xf32>
    %137 = tpu.concatenate %135, %136 in 0 : vector<7x32xf32>, vector<25x32xf32> -> vector<32x32xf32>
    %c7_i32 = arith.constant 7 : i32
    %138 = vector.broadcast %c7_i32 : i32 to vector<32x32xi32>
    %139 = arith.cmpi sge, %56, %138 : vector<32x32xi32>
    %cst_33 = arith.constant 0.000000e+00 : f32
    %140 = vector.broadcast %cst_33 : f32 to vector<32x32xf32>
    %141 = arith.select %139, %137, %140 : vector<32x32xi1>, vector<32x32xf32>
    %142 = vector.extract_strided_slice %61 {offsets = [7, 0], sizes = [1, 32], strides = [1, 1]} : vector<16x32xf32> to vector<1x32xf32>
    %143 = vector.broadcast %142 : vector<1x32xf32> to vector<32x32xf32>
    %144 = arith.mulf %141, %143 : vector<32x32xf32>
    %145 = arith.addf %134, %144 : vector<32x32xf32>
    %cst_34 = arith.constant 0.000000e+00 : f32
    %146 = vector.broadcast %cst_34 : f32 to vector<8x32xf32>
    %147 = vector.extract_strided_slice %60 {offsets = [0, 0], sizes = [24, 32], strides = [1, 1]} : vector<32x32xf32> to vector<24x32xf32>
    %148 = tpu.concatenate %146, %147 in 0 : vector<8x32xf32>, vector<24x32xf32> -> vector<32x32xf32>
    %c8_i32 = arith.constant 8 : i32
    %149 = vector.broadcast %c8_i32 : i32 to vector<32x32xi32>
    %150 = arith.cmpi sge, %56, %149 : vector<32x32xi32>
    %cst_35 = arith.constant 0.000000e+00 : f32
    %151 = vector.broadcast %cst_35 : f32 to vector<32x32xf32>
    %152 = arith.select %150, %148, %151 : vector<32x32xi1>, vector<32x32xf32>
    %153 = vector.extract_strided_slice %61 {offsets = [8, 0], sizes = [1, 32], strides = [1, 1]} : vector<16x32xf32> to vector<1x32xf32>
    %154 = vector.broadcast %153 : vector<1x32xf32> to vector<32x32xf32>
    %155 = arith.mulf %152, %154 : vector<32x32xf32>
    %156 = arith.addf %145, %155 : vector<32x32xf32>
    %cst_36 = arith.constant 0.000000e+00 : f32
    %157 = vector.broadcast %cst_36 : f32 to vector<9x32xf32>
    %158 = vector.extract_strided_slice %60 {offsets = [0, 0], sizes = [23, 32], strides = [1, 1]} : vector<32x32xf32> to vector<23x32xf32>
    %159 = tpu.concatenate %157, %158 in 0 : vector<9x32xf32>, vector<23x32xf32> -> vector<32x32xf32>
    %c9_i32_37 = arith.constant 9 : i32
    %160 = vector.broadcast %c9_i32_37 : i32 to vector<32x32xi32>
    %161 = arith.cmpi sge, %56, %160 : vector<32x32xi32>
    %cst_38 = arith.constant 0.000000e+00 : f32
    %162 = vector.broadcast %cst_38 : f32 to vector<32x32xf32>
    %163 = arith.select %161, %159, %162 : vector<32x32xi1>, vector<32x32xf32>
    %164 = vector.extract_strided_slice %61 {offsets = [9, 0], sizes = [1, 32], strides = [1, 1]} : vector<16x32xf32> to vector<1x32xf32>
    %165 = vector.broadcast %164 : vector<1x32xf32> to vector<32x32xf32>
    %166 = arith.mulf %163, %165 : vector<32x32xf32>
    %167 = arith.addf %156, %166 : vector<32x32xf32>
    %cst_39 = arith.constant 0.000000e+00 : f32
    %168 = vector.broadcast %cst_39 : f32 to vector<10x32xf32>
    %169 = vector.extract_strided_slice %60 {offsets = [0, 0], sizes = [22, 32], strides = [1, 1]} : vector<32x32xf32> to vector<22x32xf32>
    %170 = tpu.concatenate %168, %169 in 0 : vector<10x32xf32>, vector<22x32xf32> -> vector<32x32xf32>
    %c10_i32 = arith.constant 10 : i32
    %171 = vector.broadcast %c10_i32 : i32 to vector<32x32xi32>
    %172 = arith.cmpi sge, %56, %171 : vector<32x32xi32>
    %cst_40 = arith.constant 0.000000e+00 : f32
    %173 = vector.broadcast %cst_40 : f32 to vector<32x32xf32>
    %174 = arith.select %172, %170, %173 : vector<32x32xi1>, vector<32x32xf32>
    %175 = vector.extract_strided_slice %61 {offsets = [10, 0], sizes = [1, 32], strides = [1, 1]} : vector<16x32xf32> to vector<1x32xf32>
    %176 = vector.broadcast %175 : vector<1x32xf32> to vector<32x32xf32>
    %177 = arith.mulf %174, %176 : vector<32x32xf32>
    %178 = arith.addf %167, %177 : vector<32x32xf32>
    %cst_41 = arith.constant 0.000000e+00 : f32
    %179 = vector.broadcast %cst_41 : f32 to vector<11x32xf32>
    %180 = vector.extract_strided_slice %60 {offsets = [0, 0], sizes = [21, 32], strides = [1, 1]} : vector<32x32xf32> to vector<21x32xf32>
    %181 = tpu.concatenate %179, %180 in 0 : vector<11x32xf32>, vector<21x32xf32> -> vector<32x32xf32>
    %c11_i32 = arith.constant 11 : i32
    %182 = vector.broadcast %c11_i32 : i32 to vector<32x32xi32>
    %183 = arith.cmpi sge, %56, %182 : vector<32x32xi32>
    %cst_42 = arith.constant 0.000000e+00 : f32
    %184 = vector.broadcast %cst_42 : f32 to vector<32x32xf32>
    %185 = arith.select %183, %181, %184 : vector<32x32xi1>, vector<32x32xf32>
    %186 = vector.extract_strided_slice %61 {offsets = [11, 0], sizes = [1, 32], strides = [1, 1]} : vector<16x32xf32> to vector<1x32xf32>
    %187 = vector.broadcast %186 : vector<1x32xf32> to vector<32x32xf32>
    %188 = arith.mulf %185, %187 : vector<32x32xf32>
    %189 = arith.addf %178, %188 : vector<32x32xf32>
    %cst_43 = arith.constant 0.000000e+00 : f32
    %190 = vector.broadcast %cst_43 : f32 to vector<12x32xf32>
    %191 = vector.extract_strided_slice %60 {offsets = [0, 0], sizes = [20, 32], strides = [1, 1]} : vector<32x32xf32> to vector<20x32xf32>
    %192 = tpu.concatenate %190, %191 in 0 : vector<12x32xf32>, vector<20x32xf32> -> vector<32x32xf32>
    %c12_i32 = arith.constant 12 : i32
    %193 = vector.broadcast %c12_i32 : i32 to vector<32x32xi32>
    %194 = arith.cmpi sge, %56, %193 : vector<32x32xi32>
    %cst_44 = arith.constant 0.000000e+00 : f32
    %195 = vector.broadcast %cst_44 : f32 to vector<32x32xf32>
    %196 = arith.select %194, %192, %195 : vector<32x32xi1>, vector<32x32xf32>
    %197 = vector.extract_strided_slice %61 {offsets = [12, 0], sizes = [1, 32], strides = [1, 1]} : vector<16x32xf32> to vector<1x32xf32>
    %198 = vector.broadcast %197 : vector<1x32xf32> to vector<32x32xf32>
    %199 = arith.mulf %196, %198 : vector<32x32xf32>
    %200 = arith.addf %189, %199 : vector<32x32xf32>
    %cst_45 = arith.constant 0.000000e+00 : f32
    %201 = vector.broadcast %cst_45 : f32 to vector<13x32xf32>
    %202 = vector.extract_strided_slice %60 {offsets = [0, 0], sizes = [19, 32], strides = [1, 1]} : vector<32x32xf32> to vector<19x32xf32>
    %203 = tpu.concatenate %201, %202 in 0 : vector<13x32xf32>, vector<19x32xf32> -> vector<32x32xf32>
    %c13_i32 = arith.constant 13 : i32
    %204 = vector.broadcast %c13_i32 : i32 to vector<32x32xi32>
    %205 = arith.cmpi sge, %56, %204 : vector<32x32xi32>
    %cst_46 = arith.constant 0.000000e+00 : f32
    %206 = vector.broadcast %cst_46 : f32 to vector<32x32xf32>
    %207 = arith.select %205, %203, %206 : vector<32x32xi1>, vector<32x32xf32>
    %208 = vector.extract_strided_slice %61 {offsets = [13, 0], sizes = [1, 32], strides = [1, 1]} : vector<16x32xf32> to vector<1x32xf32>
    %209 = vector.broadcast %208 : vector<1x32xf32> to vector<32x32xf32>
    %210 = arith.mulf %207, %209 : vector<32x32xf32>
    %211 = arith.addf %200, %210 : vector<32x32xf32>
    %cst_47 = arith.constant 0.000000e+00 : f32
    %212 = vector.broadcast %cst_47 : f32 to vector<14x32xf32>
    %213 = vector.extract_strided_slice %60 {offsets = [0, 0], sizes = [18, 32], strides = [1, 1]} : vector<32x32xf32> to vector<18x32xf32>
    %214 = tpu.concatenate %212, %213 in 0 : vector<14x32xf32>, vector<18x32xf32> -> vector<32x32xf32>
    %c14_i32 = arith.constant 14 : i32
    %215 = vector.broadcast %c14_i32 : i32 to vector<32x32xi32>
    %216 = arith.cmpi sge, %56, %215 : vector<32x32xi32>
    %cst_48 = arith.constant 0.000000e+00 : f32
    %217 = vector.broadcast %cst_48 : f32 to vector<32x32xf32>
    %218 = arith.select %216, %214, %217 : vector<32x32xi1>, vector<32x32xf32>
    %219 = vector.extract_strided_slice %61 {offsets = [14, 0], sizes = [1, 32], strides = [1, 1]} : vector<16x32xf32> to vector<1x32xf32>
    %220 = vector.broadcast %219 : vector<1x32xf32> to vector<32x32xf32>
    %221 = arith.mulf %218, %220 : vector<32x32xf32>
    %222 = arith.addf %211, %221 : vector<32x32xf32>
    %cst_49 = arith.constant 0.000000e+00 : f32
    %223 = vector.broadcast %cst_49 : f32 to vector<15x32xf32>
    %224 = vector.extract_strided_slice %60 {offsets = [0, 0], sizes = [17, 32], strides = [1, 1]} : vector<32x32xf32> to vector<17x32xf32>
    %225 = tpu.concatenate %223, %224 in 0 : vector<15x32xf32>, vector<17x32xf32> -> vector<32x32xf32>
    %c15_i32 = arith.constant 15 : i32
    %226 = vector.broadcast %c15_i32 : i32 to vector<32x32xi32>
    %227 = arith.cmpi sge, %56, %226 : vector<32x32xi32>
    %cst_50 = arith.constant 0.000000e+00 : f32
    %228 = vector.broadcast %cst_50 : f32 to vector<32x32xf32>
    %229 = arith.select %227, %225, %228 : vector<32x32xi1>, vector<32x32xf32>
    %230 = vector.extract_strided_slice %61 {offsets = [15, 0], sizes = [1, 32], strides = [1, 1]} : vector<16x32xf32> to vector<1x32xf32>
    %231 = vector.broadcast %230 : vector<1x32xf32> to vector<32x32xf32>
    %232 = arith.mulf %229, %231 : vector<32x32xf32>
    %233 = arith.addf %222, %232 : vector<32x32xf32>
    %c0_51 = arith.constant 0 : index
    %c0_52 = arith.constant 0 : index
    %c0_53 = arith.constant 0 : index
    %234 = vector.load %arg5[%c0_51, %c0_52, %c0_53] : memref<2x32x32xf32, #tpu.memory_space<vmem>>, vector<1x32x32xf32>
    %235 = vector.shape_cast %234 : vector<1x32x32xf32> to vector<32x32xf32>
    %cst_54 = arith.constant dense<0.000000e+00> : vector<32x32xf32>
    %236 = tpu.matmul %233, %235, %cst_54 {dimension_numbers = #tpu.dot_dimension_numbers<[1], [0], [0], [1], [0, 0, 1, 1], [], []>} : vector<32x32xf32>, vector<32x32xf32>, vector<32x32xf32> -> vector<32x32xf32>
    %c0_55 = arith.constant 0 : index
    %c0_56 = arith.constant 0 : index
    %c0_57 = arith.constant 0 : index
    %237 = vector.load %arg6[%c0_55, %c0_56, %c0_57] : memref<2x1x32xf32, #tpu.memory_space<vmem>>, vector<1x1x32xf32>
    %238 = vector.shape_cast %237 : vector<1x1x32xf32> to vector<1x32xf32>
    %239 = vector.broadcast %238 : vector<1x32xf32> to vector<32x32xf32>
    %240 = arith.addf %236, %239 : vector<32x32xf32>
    %c0_58 = arith.constant 0 : index
    %c0_59 = arith.constant 0 : index
    %c0_60 = arith.constant 0 : index
    %241 = vector.load %arg7[%c0_58, %c0_59, %c0_60] : memref<2x32x32xf32, #tpu.memory_space<vmem>>, vector<1x32x32xf32>
    %242 = vector.shape_cast %241 : vector<1x32x32xf32> to vector<32x32xf32>
    %cst_61 = arith.constant dense<0.000000e+00> : vector<32x32xf32>
    %243 = tpu.matmul %233, %242, %cst_61 {dimension_numbers = #tpu.dot_dimension_numbers<[1], [0], [0], [1], [0, 0, 1, 1], [], []>} : vector<32x32xf32>, vector<32x32xf32>, vector<32x32xf32> -> vector<32x32xf32>
    %c0_62 = arith.constant 0 : index
    %c0_63 = arith.constant 0 : index
    %c0_64 = arith.constant 0 : index
    %244 = vector.load %arg8[%c0_62, %c0_63, %c0_64] : memref<2x1x32xf32, #tpu.memory_space<vmem>>, vector<1x1x32xf32>
    %245 = vector.shape_cast %244 : vector<1x1x32xf32> to vector<1x32xf32>
    %246 = vector.broadcast %245 : vector<1x32xf32> to vector<32x32xf32>
    %247 = arith.addf %243, %246 : vector<32x32xf32>
    %c0_65 = arith.constant 0 : index
    %c0_66 = arith.constant 0 : index
    %c0_67 = arith.constant 0 : index
    %248 = vector.load %arg9[%c0_65, %c0_66, %c0_67] : memref<2x32x32xf32, #tpu.memory_space<vmem>>, vector<1x32x32xf32>
    %249 = vector.shape_cast %248 : vector<1x32x32xf32> to vector<32x32xf32>
    %cst_68 = arith.constant dense<0.000000e+00> : vector<32x32xf32>
    %250 = tpu.matmul %233, %249, %cst_68 {dimension_numbers = #tpu.dot_dimension_numbers<[1], [0], [0], [1], [0, 0, 1, 1], [], []>} : vector<32x32xf32>, vector<32x32xf32>, vector<32x32xf32> -> vector<32x32xf32>
    %c0_69 = arith.constant 0 : index
    %c0_70 = arith.constant 0 : index
    %c0_71 = arith.constant 0 : index
    %251 = vector.load %arg10[%c0_69, %c0_70, %c0_71] : memref<2x1x32xf32, #tpu.memory_space<vmem>>, vector<1x1x32xf32>
    %252 = vector.shape_cast %251 : vector<1x1x32xf32> to vector<1x32xf32>
    %253 = vector.broadcast %252 : vector<1x32xf32> to vector<32x32xf32>
    %254 = arith.addf %250, %253 : vector<32x32xf32>
    %255 = vector.extract_strided_slice %240 {offsets = [0, 0], sizes = [16, 8], strides = [1, 1]} : vector<32x32xf32> to vector<16x8xf32>
    %256 = vector.extract_strided_slice %247 {offsets = [0, 0], sizes = [9, 8], strides = [1, 1]} : vector<32x32xf32> to vector<9x8xf32>
    %257 = vector.extract_strided_slice %254 {offsets = [0, 0], sizes = [9, 8], strides = [1, 1]} : vector<32x32xf32> to vector<9x8xf32>
    %cst_72 = arith.constant dense<0.000000e+00> : vector<16x9xf32>
    %258 = tpu.matmul %255, %256, %cst_72 {dimension_numbers = #tpu.dot_dimension_numbers<[1], [1], [0], [0], [0, 0, 1, 0], [], []>} : vector<16x8xf32>, vector<9x8xf32>, vector<16x9xf32> -> vector<16x9xf32>
    %cst_73 = arith.constant 0.353553385 : f32
    %259 = vector.broadcast %cst_73 : f32 to vector<16x9xf32>
    %260 = arith.mulf %258, %259 : vector<16x9xf32>
    %cst_74 = arith.constant dense<0xFF800000> : vector<16xf32>
    %261 = vector.multi_reduction <maximumf>, %260, %cst_74 [1] : vector<16x9xf32> to vector<16xf32>
    %262 = vector.shape_cast %261 : vector<16xf32> to vector<16x1xf32>
    %263 = vector.broadcast %262 : vector<16x1xf32> to vector<16x9xf32>
    %264 = arith.subf %260, %263 : vector<16x9xf32>
    %265 = math.exp %264 : vector<16x9xf32>
    %cst_75 = arith.constant dense<0.000000e+00> : vector<16xf32>
    %266 = vector.multi_reduction <add>, %265, %cst_75 [1] : vector<16x9xf32> to vector<16xf32>
    %267 = vector.shape_cast %266 : vector<16xf32> to vector<16x1xf32>
    %268 = tpu.reciprocal %267 {approx = true} : vector<16x1xf32> -> vector<16x1xf32>
    %269 = vector.broadcast %268 : vector<16x1xf32> to vector<16x9xf32>
    %270 = arith.mulf %265, %269 : vector<16x9xf32>
    %cst_76 = arith.constant dense<0.000000e+00> : vector<16x8xf32>
    %271 = tpu.matmul %270, %257, %cst_76 {dimension_numbers = #tpu.dot_dimension_numbers<[1], [0], [0], [1], [0, 0, 1, 1], [], []>} : vector<16x9xf32>, vector<9x8xf32>, vector<16x8xf32> -> vector<16x8xf32>
    %272 = vector.extract_strided_slice %240 {offsets = [0, 8], sizes = [16, 8], strides = [1, 1]} : vector<32x32xf32> to vector<16x8xf32>
    %273 = vector.extract_strided_slice %247 {offsets = [0, 8], sizes = [9, 8], strides = [1, 1]} : vector<32x32xf32> to vector<9x8xf32>
    %274 = vector.extract_strided_slice %254 {offsets = [0, 8], sizes = [9, 8], strides = [1, 1]} : vector<32x32xf32> to vector<9x8xf32>
    %cst_77 = arith.constant dense<0.000000e+00> : vector<16x9xf32>
    %275 = tpu.matmul %272, %273, %cst_77 {dimension_numbers = #tpu.dot_dimension_numbers<[1], [1], [0], [0], [0, 0, 1, 0], [], []>} : vector<16x8xf32>, vector<9x8xf32>, vector<16x9xf32> -> vector<16x9xf32>
    %cst_78 = arith.constant 0.353553385 : f32
    %276 = vector.broadcast %cst_78 : f32 to vector<16x9xf32>
    %277 = arith.mulf %275, %276 : vector<16x9xf32>
    %cst_79 = arith.constant dense<0xFF800000> : vector<16xf32>
    %278 = vector.multi_reduction <maximumf>, %277, %cst_79 [1] : vector<16x9xf32> to vector<16xf32>
    %279 = vector.shape_cast %278 : vector<16xf32> to vector<16x1xf32>
    %280 = vector.broadcast %279 : vector<16x1xf32> to vector<16x9xf32>
    %281 = arith.subf %277, %280 : vector<16x9xf32>
    %282 = math.exp %281 : vector<16x9xf32>
    %cst_80 = arith.constant dense<0.000000e+00> : vector<16xf32>
    %283 = vector.multi_reduction <add>, %282, %cst_80 [1] : vector<16x9xf32> to vector<16xf32>
    %284 = vector.shape_cast %283 : vector<16xf32> to vector<16x1xf32>
    %285 = tpu.reciprocal %284 {approx = true} : vector<16x1xf32> -> vector<16x1xf32>
    %286 = vector.broadcast %285 : vector<16x1xf32> to vector<16x9xf32>
    %287 = arith.mulf %282, %286 : vector<16x9xf32>
    %cst_81 = arith.constant dense<0.000000e+00> : vector<16x8xf32>
    %288 = tpu.matmul %287, %274, %cst_81 {dimension_numbers = #tpu.dot_dimension_numbers<[1], [0], [0], [1], [0, 0, 1, 1], [], []>} : vector<16x9xf32>, vector<9x8xf32>, vector<16x8xf32> -> vector<16x8xf32>
    %289 = vector.extract_strided_slice %240 {offsets = [0, 16], sizes = [16, 8], strides = [1, 1]} : vector<32x32xf32> to vector<16x8xf32>
    %290 = vector.extract_strided_slice %247 {offsets = [0, 16], sizes = [9, 8], strides = [1, 1]} : vector<32x32xf32> to vector<9x8xf32>
    %291 = vector.extract_strided_slice %254 {offsets = [0, 16], sizes = [9, 8], strides = [1, 1]} : vector<32x32xf32> to vector<9x8xf32>
    %cst_82 = arith.constant dense<0.000000e+00> : vector<16x9xf32>
    %292 = tpu.matmul %289, %290, %cst_82 {dimension_numbers = #tpu.dot_dimension_numbers<[1], [1], [0], [0], [0, 0, 1, 0], [], []>} : vector<16x8xf32>, vector<9x8xf32>, vector<16x9xf32> -> vector<16x9xf32>
    %cst_83 = arith.constant 0.353553385 : f32
    %293 = vector.broadcast %cst_83 : f32 to vector<16x9xf32>
    %294 = arith.mulf %292, %293 : vector<16x9xf32>
    %cst_84 = arith.constant dense<0xFF800000> : vector<16xf32>
    %295 = vector.multi_reduction <maximumf>, %294, %cst_84 [1] : vector<16x9xf32> to vector<16xf32>
    %296 = vector.shape_cast %295 : vector<16xf32> to vector<16x1xf32>
    %297 = vector.broadcast %296 : vector<16x1xf32> to vector<16x9xf32>
    %298 = arith.subf %294, %297 : vector<16x9xf32>
    %299 = math.exp %298 : vector<16x9xf32>
    %cst_85 = arith.constant dense<0.000000e+00> : vector<16xf32>
    %300 = vector.multi_reduction <add>, %299, %cst_85 [1] : vector<16x9xf32> to vector<16xf32>
    %301 = vector.shape_cast %300 : vector<16xf32> to vector<16x1xf32>
    %302 = tpu.reciprocal %301 {approx = true} : vector<16x1xf32> -> vector<16x1xf32>
    %303 = vector.broadcast %302 : vector<16x1xf32> to vector<16x9xf32>
    %304 = arith.mulf %299, %303 : vector<16x9xf32>
    %cst_86 = arith.constant dense<0.000000e+00> : vector<16x8xf32>
    %305 = tpu.matmul %304, %291, %cst_86 {dimension_numbers = #tpu.dot_dimension_numbers<[1], [0], [0], [1], [0, 0, 1, 1], [], []>} : vector<16x9xf32>, vector<9x8xf32>, vector<16x8xf32> -> vector<16x8xf32>
    %306 = vector.extract_strided_slice %240 {offsets = [0, 24], sizes = [16, 8], strides = [1, 1]} : vector<32x32xf32> to vector<16x8xf32>
    %307 = vector.extract_strided_slice %247 {offsets = [0, 24], sizes = [9, 8], strides = [1, 1]} : vector<32x32xf32> to vector<9x8xf32>
    %308 = vector.extract_strided_slice %254 {offsets = [0, 24], sizes = [9, 8], strides = [1, 1]} : vector<32x32xf32> to vector<9x8xf32>
    %cst_87 = arith.constant dense<0.000000e+00> : vector<16x9xf32>
    %309 = tpu.matmul %306, %307, %cst_87 {dimension_numbers = #tpu.dot_dimension_numbers<[1], [1], [0], [0], [0, 0, 1, 0], [], []>} : vector<16x8xf32>, vector<9x8xf32>, vector<16x9xf32> -> vector<16x9xf32>
    %cst_88 = arith.constant 0.353553385 : f32
    %310 = vector.broadcast %cst_88 : f32 to vector<16x9xf32>
    %311 = arith.mulf %309, %310 : vector<16x9xf32>
    %cst_89 = arith.constant dense<0xFF800000> : vector<16xf32>
    %312 = vector.multi_reduction <maximumf>, %311, %cst_89 [1] : vector<16x9xf32> to vector<16xf32>
    %313 = vector.shape_cast %312 : vector<16xf32> to vector<16x1xf32>
    %314 = vector.broadcast %313 : vector<16x1xf32> to vector<16x9xf32>
    %315 = arith.subf %311, %314 : vector<16x9xf32>
    %316 = math.exp %315 : vector<16x9xf32>
    %cst_90 = arith.constant dense<0.000000e+00> : vector<16xf32>
    %317 = vector.multi_reduction <add>, %316, %cst_90 [1] : vector<16x9xf32> to vector<16xf32>
    %318 = vector.shape_cast %317 : vector<16xf32> to vector<16x1xf32>
    %319 = tpu.reciprocal %318 {approx = true} : vector<16x1xf32> -> vector<16x1xf32>
    %320 = vector.broadcast %319 : vector<16x1xf32> to vector<16x9xf32>
    %321 = arith.mulf %316, %320 : vector<16x9xf32>
    %cst_91 = arith.constant dense<0.000000e+00> : vector<16x8xf32>
    %322 = tpu.matmul %321, %308, %cst_91 {dimension_numbers = #tpu.dot_dimension_numbers<[1], [0], [0], [1], [0, 0, 1, 1], [], []>} : vector<16x9xf32>, vector<9x8xf32>, vector<16x8xf32> -> vector<16x8xf32>
    %323 = tpu.concatenate %271, %288, %305, %322 in 1 : vector<16x8xf32>, vector<16x8xf32>, vector<16x8xf32>, vector<16x8xf32> -> vector<16x32xf32>
    %324 = vector.extract_strided_slice %240 {offsets = [16, 0], sizes = [16, 8], strides = [1, 1]} : vector<32x32xf32> to vector<16x8xf32>
    %325 = vector.extract_strided_slice %247 {offsets = [16, 0], sizes = [9, 8], strides = [1, 1]} : vector<32x32xf32> to vector<9x8xf32>
    %326 = vector.extract_strided_slice %254 {offsets = [16, 0], sizes = [9, 8], strides = [1, 1]} : vector<32x32xf32> to vector<9x8xf32>
    %cst_92 = arith.constant dense<0.000000e+00> : vector<16x9xf32>
    %327 = tpu.matmul %324, %325, %cst_92 {dimension_numbers = #tpu.dot_dimension_numbers<[1], [1], [0], [0], [0, 0, 1, 0], [], []>} : vector<16x8xf32>, vector<9x8xf32>, vector<16x9xf32> -> vector<16x9xf32>
    %cst_93 = arith.constant 0.353553385 : f32
    %328 = vector.broadcast %cst_93 : f32 to vector<16x9xf32>
    %329 = arith.mulf %327, %328 : vector<16x9xf32>
    %cst_94 = arith.constant dense<0xFF800000> : vector<16xf32>
    %330 = vector.multi_reduction <maximumf>, %329, %cst_94 [1] : vector<16x9xf32> to vector<16xf32>
    %331 = vector.shape_cast %330 : vector<16xf32> to vector<16x1xf32>
    %332 = vector.broadcast %331 : vector<16x1xf32> to vector<16x9xf32>
    %333 = arith.subf %329, %332 : vector<16x9xf32>
    %334 = math.exp %333 : vector<16x9xf32>
    %cst_95 = arith.constant dense<0.000000e+00> : vector<16xf32>
    %335 = vector.multi_reduction <add>, %334, %cst_95 [1] : vector<16x9xf32> to vector<16xf32>
    %336 = vector.shape_cast %335 : vector<16xf32> to vector<16x1xf32>
    %337 = tpu.reciprocal %336 {approx = true} : vector<16x1xf32> -> vector<16x1xf32>
    %338 = vector.broadcast %337 : vector<16x1xf32> to vector<16x9xf32>
    %339 = arith.mulf %334, %338 : vector<16x9xf32>
    %cst_96 = arith.constant dense<0.000000e+00> : vector<16x8xf32>
    %340 = tpu.matmul %339, %326, %cst_96 {dimension_numbers = #tpu.dot_dimension_numbers<[1], [0], [0], [1], [0, 0, 1, 1], [], []>} : vector<16x9xf32>, vector<9x8xf32>, vector<16x8xf32> -> vector<16x8xf32>
    %341 = vector.extract_strided_slice %240 {offsets = [16, 8], sizes = [16, 8], strides = [1, 1]} : vector<32x32xf32> to vector<16x8xf32>
    %342 = vector.extract_strided_slice %247 {offsets = [16, 8], sizes = [9, 8], strides = [1, 1]} : vector<32x32xf32> to vector<9x8xf32>
    %343 = vector.extract_strided_slice %254 {offsets = [16, 8], sizes = [9, 8], strides = [1, 1]} : vector<32x32xf32> to vector<9x8xf32>
    %cst_97 = arith.constant dense<0.000000e+00> : vector<16x9xf32>
    %344 = tpu.matmul %341, %342, %cst_97 {dimension_numbers = #tpu.dot_dimension_numbers<[1], [1], [0], [0], [0, 0, 1, 0], [], []>} : vector<16x8xf32>, vector<9x8xf32>, vector<16x9xf32> -> vector<16x9xf32>
    %cst_98 = arith.constant 0.353553385 : f32
    %345 = vector.broadcast %cst_98 : f32 to vector<16x9xf32>
    %346 = arith.mulf %344, %345 : vector<16x9xf32>
    %cst_99 = arith.constant dense<0xFF800000> : vector<16xf32>
    %347 = vector.multi_reduction <maximumf>, %346, %cst_99 [1] : vector<16x9xf32> to vector<16xf32>
    %348 = vector.shape_cast %347 : vector<16xf32> to vector<16x1xf32>
    %349 = vector.broadcast %348 : vector<16x1xf32> to vector<16x9xf32>
    %350 = arith.subf %346, %349 : vector<16x9xf32>
    %351 = math.exp %350 : vector<16x9xf32>
    %cst_100 = arith.constant dense<0.000000e+00> : vector<16xf32>
    %352 = vector.multi_reduction <add>, %351, %cst_100 [1] : vector<16x9xf32> to vector<16xf32>
    %353 = vector.shape_cast %352 : vector<16xf32> to vector<16x1xf32>
    %354 = tpu.reciprocal %353 {approx = true} : vector<16x1xf32> -> vector<16x1xf32>
    %355 = vector.broadcast %354 : vector<16x1xf32> to vector<16x9xf32>
    %356 = arith.mulf %351, %355 : vector<16x9xf32>
    %cst_101 = arith.constant dense<0.000000e+00> : vector<16x8xf32>
    %357 = tpu.matmul %356, %343, %cst_101 {dimension_numbers = #tpu.dot_dimension_numbers<[1], [0], [0], [1], [0, 0, 1, 1], [], []>} : vector<16x9xf32>, vector<9x8xf32>, vector<16x8xf32> -> vector<16x8xf32>
    %358 = vector.extract_strided_slice %240 {offsets = [16, 16], sizes = [16, 8], strides = [1, 1]} : vector<32x32xf32> to vector<16x8xf32>
    %359 = vector.extract_strided_slice %247 {offsets = [16, 16], sizes = [9, 8], strides = [1, 1]} : vector<32x32xf32> to vector<9x8xf32>
    %360 = vector.extract_strided_slice %254 {offsets = [16, 16], sizes = [9, 8], strides = [1, 1]} : vector<32x32xf32> to vector<9x8xf32>
    %cst_102 = arith.constant dense<0.000000e+00> : vector<16x9xf32>
    %361 = tpu.matmul %358, %359, %cst_102 {dimension_numbers = #tpu.dot_dimension_numbers<[1], [1], [0], [0], [0, 0, 1, 0], [], []>} : vector<16x8xf32>, vector<9x8xf32>, vector<16x9xf32> -> vector<16x9xf32>
    %cst_103 = arith.constant 0.353553385 : f32
    %362 = vector.broadcast %cst_103 : f32 to vector<16x9xf32>
    %363 = arith.mulf %361, %362 : vector<16x9xf32>
    %cst_104 = arith.constant dense<0xFF800000> : vector<16xf32>
    %364 = vector.multi_reduction <maximumf>, %363, %cst_104 [1] : vector<16x9xf32> to vector<16xf32>
    %365 = vector.shape_cast %364 : vector<16xf32> to vector<16x1xf32>
    %366 = vector.broadcast %365 : vector<16x1xf32> to vector<16x9xf32>
    %367 = arith.subf %363, %366 : vector<16x9xf32>
    %368 = math.exp %367 : vector<16x9xf32>
    %cst_105 = arith.constant dense<0.000000e+00> : vector<16xf32>
    %369 = vector.multi_reduction <add>, %368, %cst_105 [1] : vector<16x9xf32> to vector<16xf32>
    %370 = vector.shape_cast %369 : vector<16xf32> to vector<16x1xf32>
    %371 = tpu.reciprocal %370 {approx = true} : vector<16x1xf32> -> vector<16x1xf32>
    %372 = vector.broadcast %371 : vector<16x1xf32> to vector<16x9xf32>
    %373 = arith.mulf %368, %372 : vector<16x9xf32>
    %cst_106 = arith.constant dense<0.000000e+00> : vector<16x8xf32>
    %374 = tpu.matmul %373, %360, %cst_106 {dimension_numbers = #tpu.dot_dimension_numbers<[1], [0], [0], [1], [0, 0, 1, 1], [], []>} : vector<16x9xf32>, vector<9x8xf32>, vector<16x8xf32> -> vector<16x8xf32>
    %375 = vector.extract_strided_slice %240 {offsets = [16, 24], sizes = [16, 8], strides = [1, 1]} : vector<32x32xf32> to vector<16x8xf32>
    %376 = vector.extract_strided_slice %247 {offsets = [16, 24], sizes = [9, 8], strides = [1, 1]} : vector<32x32xf32> to vector<9x8xf32>
    %377 = vector.extract_strided_slice %254 {offsets = [16, 24], sizes = [9, 8], strides = [1, 1]} : vector<32x32xf32> to vector<9x8xf32>
    %cst_107 = arith.constant dense<0.000000e+00> : vector<16x9xf32>
    %378 = tpu.matmul %375, %376, %cst_107 {dimension_numbers = #tpu.dot_dimension_numbers<[1], [1], [0], [0], [0, 0, 1, 0], [], []>} : vector<16x8xf32>, vector<9x8xf32>, vector<16x9xf32> -> vector<16x9xf32>
    %cst_108 = arith.constant 0.353553385 : f32
    %379 = vector.broadcast %cst_108 : f32 to vector<16x9xf32>
    %380 = arith.mulf %378, %379 : vector<16x9xf32>
    %cst_109 = arith.constant dense<0xFF800000> : vector<16xf32>
    %381 = vector.multi_reduction <maximumf>, %380, %cst_109 [1] : vector<16x9xf32> to vector<16xf32>
    %382 = vector.shape_cast %381 : vector<16xf32> to vector<16x1xf32>
    %383 = vector.broadcast %382 : vector<16x1xf32> to vector<16x9xf32>
    %384 = arith.subf %380, %383 : vector<16x9xf32>
    %385 = math.exp %384 : vector<16x9xf32>
    %cst_110 = arith.constant dense<0.000000e+00> : vector<16xf32>
    %386 = vector.multi_reduction <add>, %385, %cst_110 [1] : vector<16x9xf32> to vector<16xf32>
    %387 = vector.shape_cast %386 : vector<16xf32> to vector<16x1xf32>
    %388 = tpu.reciprocal %387 {approx = true} : vector<16x1xf32> -> vector<16x1xf32>
    %389 = vector.broadcast %388 : vector<16x1xf32> to vector<16x9xf32>
    %390 = arith.mulf %385, %389 : vector<16x9xf32>
    %cst_111 = arith.constant dense<0.000000e+00> : vector<16x8xf32>
    %391 = tpu.matmul %390, %377, %cst_111 {dimension_numbers = #tpu.dot_dimension_numbers<[1], [0], [0], [1], [0, 0, 1, 1], [], []>} : vector<16x9xf32>, vector<9x8xf32>, vector<16x8xf32> -> vector<16x8xf32>
    %392 = tpu.concatenate %340, %357, %374, %391 in 1 : vector<16x8xf32>, vector<16x8xf32>, vector<16x8xf32>, vector<16x8xf32> -> vector<16x32xf32>
    %393 = tpu.concatenate %323, %392 in 0 : vector<16x32xf32>, vector<16x32xf32> -> vector<32x32xf32>
    %c0_112 = arith.constant 0 : index
    %c0_113 = arith.constant 0 : index
    %c0_114 = arith.constant 0 : index
    %394 = vector.load %arg11[%c0_112, %c0_113, %c0_114] : memref<2x32x32xf32, #tpu.memory_space<vmem>>, vector<1x32x32xf32>
    %395 = vector.shape_cast %394 : vector<1x32x32xf32> to vector<32x32xf32>
    %cst_115 = arith.constant dense<0.000000e+00> : vector<32x32xf32>
    %396 = tpu.matmul %393, %395, %cst_115 {dimension_numbers = #tpu.dot_dimension_numbers<[1], [0], [0], [1], [0, 0, 1, 1], [], []>} : vector<32x32xf32>, vector<32x32xf32>, vector<32x32xf32> -> vector<32x32xf32>
    %c0_116 = arith.constant 0 : index
    %c0_117 = arith.constant 0 : index
    %c0_118 = arith.constant 0 : index
    %397 = vector.load %arg12[%c0_116, %c0_117, %c0_118] : memref<2x1x32xf32, #tpu.memory_space<vmem>>, vector<1x1x32xf32>
    %398 = vector.shape_cast %397 : vector<1x1x32xf32> to vector<1x32xf32>
    %399 = vector.broadcast %398 : vector<1x32xf32> to vector<32x32xf32>
    %400 = arith.addf %396, %399 : vector<32x32xf32>
    %401 = arith.addf %233, %400 : vector<32x32xf32>
    %c0_119 = arith.constant 0 : index
    %c0_120 = arith.constant 0 : index
    %c0_121 = arith.constant 0 : index
    %402 = vector.load %arg13[%c0_119, %c0_120, %c0_121] : memref<2x1x32xf32, #tpu.memory_space<vmem>>, vector<1x1x32xf32>
    %403 = vector.shape_cast %402 : vector<1x1x32xf32> to vector<1x32xf32>
    %c0_122 = arith.constant 0 : index
    %c0_123 = arith.constant 0 : index
    %c0_124 = arith.constant 0 : index
    %404 = vector.load %arg14[%c0_122, %c0_123, %c0_124] : memref<2x1x32xf32, #tpu.memory_space<vmem>>, vector<1x1x32xf32>
    %405 = vector.shape_cast %404 : vector<1x1x32xf32> to vector<1x32xf32>
    %cst_125 = arith.constant dense<0.000000e+00> : vector<32xf32>
    %406 = vector.multi_reduction <add>, %401, %cst_125 [1] : vector<32x32xf32> to vector<32xf32>
    %407 = vector.shape_cast %406 : vector<32xf32> to vector<32x1xf32>
    %cst_126 = arith.constant 3.200000e+01 : f32
    %408 = vector.broadcast %cst_126 : f32 to vector<32x1xf32>
    %409 = arith.divf %407, %408 : vector<32x1xf32>
    %410 = vector.broadcast %409 : vector<32x1xf32> to vector<32x32xf32>
    %411 = arith.subf %401, %410 : vector<32x32xf32>
    %412 = arith.mulf %411, %411 : vector<32x32xf32>
    %cst_127 = arith.constant dense<0.000000e+00> : vector<32xf32>
    %413 = vector.multi_reduction <add>, %412, %cst_127 [1] : vector<32x32xf32> to vector<32xf32>
    %414 = vector.shape_cast %413 : vector<32xf32> to vector<32x1xf32>
    %cst_128 = arith.constant 3.200000e+01 : f32
    %415 = vector.broadcast %cst_128 : f32 to vector<32x1xf32>
    %416 = arith.divf %414, %415 : vector<32x1xf32>
    %417 = vector.broadcast %409 : vector<32x1xf32> to vector<32x32xf32>
    %418 = arith.subf %401, %417 : vector<32x32xf32>
    %cst_129 = arith.constant 9.99999974E-6 : f32
    %419 = vector.broadcast %cst_129 : f32 to vector<32x1xf32>
    %420 = arith.addf %416, %419 : vector<32x1xf32>
    %421 = math.rsqrt %420 : vector<32x1xf32>
    %422 = vector.broadcast %421 : vector<32x1xf32> to vector<32x32xf32>
    %423 = arith.mulf %418, %422 : vector<32x32xf32>
    %424 = vector.broadcast %403 : vector<1x32xf32> to vector<32x32xf32>
    %425 = arith.mulf %423, %424 : vector<32x32xf32>
    %426 = vector.broadcast %405 : vector<1x32xf32> to vector<32x32xf32>
    %427 = arith.addf %425, %426 : vector<32x32xf32>
    %c0_130 = arith.constant 0 : index
    %c0_131 = arith.constant 0 : index
    %c0_132 = arith.constant 0 : index
    %428 = vector.load %arg15[%c0_130, %c0_131, %c0_132] : memref<2x32x64xf32, #tpu.memory_space<vmem>>, vector<1x32x64xf32>
    %429 = vector.shape_cast %428 : vector<1x32x64xf32> to vector<32x64xf32>
    %cst_133 = arith.constant dense<0.000000e+00> : vector<32x64xf32>
    %430 = tpu.matmul %427, %429, %cst_133 {dimension_numbers = #tpu.dot_dimension_numbers<[1], [0], [0], [1], [0, 0, 1, 1], [], []>} : vector<32x32xf32>, vector<32x64xf32>, vector<32x64xf32> -> vector<32x64xf32>
    %c0_134 = arith.constant 0 : index
    %c0_135 = arith.constant 0 : index
    %c0_136 = arith.constant 0 : index
    %431 = vector.load %arg16[%c0_134, %c0_135, %c0_136] : memref<2x1x64xf32, #tpu.memory_space<vmem>>, vector<1x1x64xf32>
    %432 = vector.shape_cast %431 : vector<1x1x64xf32> to vector<1x64xf32>
    %433 = vector.broadcast %432 : vector<1x64xf32> to vector<32x64xf32>
    %434 = arith.addf %430, %433 : vector<32x64xf32>
    %cst_137 = arith.constant 0.000000e+00 : f32
    %435 = vector.broadcast %cst_137 : f32 to vector<32x64xf32>
    %436 = arith.maximumf %434, %435 : vector<32x64xf32>
    %c0_138 = arith.constant 0 : index
    %c0_139 = arith.constant 0 : index
    %c0_140 = arith.constant 0 : index
    %437 = vector.load %arg17[%c0_138, %c0_139, %c0_140] : memref<2x64x32xf32, #tpu.memory_space<vmem>>, vector<1x64x32xf32>
    %438 = vector.shape_cast %437 : vector<1x64x32xf32> to vector<64x32xf32>
    %cst_141 = arith.constant dense<0.000000e+00> : vector<32x32xf32>
    %439 = tpu.matmul %436, %438, %cst_141 {dimension_numbers = #tpu.dot_dimension_numbers<[1], [0], [0], [1], [0, 0, 1, 1], [], []>} : vector<32x64xf32>, vector<64x32xf32>, vector<32x32xf32> -> vector<32x32xf32>
    %c0_142 = arith.constant 0 : index
    %c0_143 = arith.constant 0 : index
    %c0_144 = arith.constant 0 : index
    %440 = vector.load %arg18[%c0_142, %c0_143, %c0_144] : memref<2x1x32xf32, #tpu.memory_space<vmem>>, vector<1x1x32xf32>
    %441 = vector.shape_cast %440 : vector<1x1x32xf32> to vector<1x32xf32>
    %442 = vector.broadcast %441 : vector<1x32xf32> to vector<32x32xf32>
    %443 = arith.addf %439, %442 : vector<32x32xf32>
    %444 = arith.addf %427, %443 : vector<32x32xf32>
    %c0_145 = arith.constant 0 : index
    %c0_146 = arith.constant 0 : index
    %c0_147 = arith.constant 0 : index
    %445 = vector.load %arg19[%c0_145, %c0_146, %c0_147] : memref<2x1x32xf32, #tpu.memory_space<vmem>>, vector<1x1x32xf32>
    %446 = vector.shape_cast %445 : vector<1x1x32xf32> to vector<1x32xf32>
    %c0_148 = arith.constant 0 : index
    %c0_149 = arith.constant 0 : index
    %c0_150 = arith.constant 0 : index
    %447 = vector.load %arg20[%c0_148, %c0_149, %c0_150] : memref<2x1x32xf32, #tpu.memory_space<vmem>>, vector<1x1x32xf32>
    %448 = vector.shape_cast %447 : vector<1x1x32xf32> to vector<1x32xf32>
    %cst_151 = arith.constant dense<0.000000e+00> : vector<32xf32>
    %449 = vector.multi_reduction <add>, %444, %cst_151 [1] : vector<32x32xf32> to vector<32xf32>
    %450 = vector.shape_cast %449 : vector<32xf32> to vector<32x1xf32>
    %cst_152 = arith.constant 3.200000e+01 : f32
    %451 = vector.broadcast %cst_152 : f32 to vector<32x1xf32>
    %452 = arith.divf %450, %451 : vector<32x1xf32>
    %453 = vector.broadcast %452 : vector<32x1xf32> to vector<32x32xf32>
    %454 = arith.subf %444, %453 : vector<32x32xf32>
    %455 = arith.mulf %454, %454 : vector<32x32xf32>
    %cst_153 = arith.constant dense<0.000000e+00> : vector<32xf32>
    %456 = vector.multi_reduction <add>, %455, %cst_153 [1] : vector<32x32xf32> to vector<32xf32>
    %457 = vector.shape_cast %456 : vector<32xf32> to vector<32x1xf32>
    %cst_154 = arith.constant 3.200000e+01 : f32
    %458 = vector.broadcast %cst_154 : f32 to vector<32x1xf32>
    %459 = arith.divf %457, %458 : vector<32x1xf32>
    %460 = vector.broadcast %452 : vector<32x1xf32> to vector<32x32xf32>
    %461 = arith.subf %444, %460 : vector<32x32xf32>
    %cst_155 = arith.constant 9.99999974E-6 : f32
    %462 = vector.broadcast %cst_155 : f32 to vector<32x1xf32>
    %463 = arith.addf %459, %462 : vector<32x1xf32>
    %464 = math.rsqrt %463 : vector<32x1xf32>
    %465 = vector.broadcast %464 : vector<32x1xf32> to vector<32x32xf32>
    %466 = arith.mulf %461, %465 : vector<32x32xf32>
    %467 = vector.broadcast %446 : vector<1x32xf32> to vector<32x32xf32>
    %468 = arith.mulf %466, %467 : vector<32x32xf32>
    %469 = vector.broadcast %448 : vector<1x32xf32> to vector<32x32xf32>
    %470 = arith.addf %468, %469 : vector<32x32xf32>
    %c1 = arith.constant 1 : index
    %c0_156 = arith.constant 0 : index
    %c0_157 = arith.constant 0 : index
    %471 = vector.load %arg5[%c1, %c0_156, %c0_157] : memref<2x32x32xf32, #tpu.memory_space<vmem>>, vector<1x32x32xf32>
    %472 = vector.shape_cast %471 : vector<1x32x32xf32> to vector<32x32xf32>
    %cst_158 = arith.constant dense<0.000000e+00> : vector<32x32xf32>
    %473 = tpu.matmul %470, %472, %cst_158 {dimension_numbers = #tpu.dot_dimension_numbers<[1], [0], [0], [1], [0, 0, 1, 1], [], []>} : vector<32x32xf32>, vector<32x32xf32>, vector<32x32xf32> -> vector<32x32xf32>
    %c1_159 = arith.constant 1 : index
    %c0_160 = arith.constant 0 : index
    %c0_161 = arith.constant 0 : index
    %474 = vector.load %arg6[%c1_159, %c0_160, %c0_161] : memref<2x1x32xf32, #tpu.memory_space<vmem>>, vector<1x1x32xf32>
    %475 = vector.shape_cast %474 : vector<1x1x32xf32> to vector<1x32xf32>
    %476 = vector.broadcast %475 : vector<1x32xf32> to vector<32x32xf32>
    %477 = arith.addf %473, %476 : vector<32x32xf32>
    %c1_162 = arith.constant 1 : index
    %c0_163 = arith.constant 0 : index
    %c0_164 = arith.constant 0 : index
    %478 = vector.load %arg7[%c1_162, %c0_163, %c0_164] : memref<2x32x32xf32, #tpu.memory_space<vmem>>, vector<1x32x32xf32>
    %479 = vector.shape_cast %478 : vector<1x32x32xf32> to vector<32x32xf32>
    %cst_165 = arith.constant dense<0.000000e+00> : vector<32x32xf32>
    %480 = tpu.matmul %470, %479, %cst_165 {dimension_numbers = #tpu.dot_dimension_numbers<[1], [0], [0], [1], [0, 0, 1, 1], [], []>} : vector<32x32xf32>, vector<32x32xf32>, vector<32x32xf32> -> vector<32x32xf32>
    %c1_166 = arith.constant 1 : index
    %c0_167 = arith.constant 0 : index
    %c0_168 = arith.constant 0 : index
    %481 = vector.load %arg8[%c1_166, %c0_167, %c0_168] : memref<2x1x32xf32, #tpu.memory_space<vmem>>, vector<1x1x32xf32>
    %482 = vector.shape_cast %481 : vector<1x1x32xf32> to vector<1x32xf32>
    %483 = vector.broadcast %482 : vector<1x32xf32> to vector<32x32xf32>
    %484 = arith.addf %480, %483 : vector<32x32xf32>
    %c1_169 = arith.constant 1 : index
    %c0_170 = arith.constant 0 : index
    %c0_171 = arith.constant 0 : index
    %485 = vector.load %arg9[%c1_169, %c0_170, %c0_171] : memref<2x32x32xf32, #tpu.memory_space<vmem>>, vector<1x32x32xf32>
    %486 = vector.shape_cast %485 : vector<1x32x32xf32> to vector<32x32xf32>
    %cst_172 = arith.constant dense<0.000000e+00> : vector<32x32xf32>
    %487 = tpu.matmul %470, %486, %cst_172 {dimension_numbers = #tpu.dot_dimension_numbers<[1], [0], [0], [1], [0, 0, 1, 1], [], []>} : vector<32x32xf32>, vector<32x32xf32>, vector<32x32xf32> -> vector<32x32xf32>
    %c1_173 = arith.constant 1 : index
    %c0_174 = arith.constant 0 : index
    %c0_175 = arith.constant 0 : index
    %488 = vector.load %arg10[%c1_173, %c0_174, %c0_175] : memref<2x1x32xf32, #tpu.memory_space<vmem>>, vector<1x1x32xf32>
    %489 = vector.shape_cast %488 : vector<1x1x32xf32> to vector<1x32xf32>
    %490 = vector.broadcast %489 : vector<1x32xf32> to vector<32x32xf32>
    %491 = arith.addf %487, %490 : vector<32x32xf32>
    %492 = vector.extract_strided_slice %477 {offsets = [0, 0], sizes = [16, 8], strides = [1, 1]} : vector<32x32xf32> to vector<16x8xf32>
    %493 = vector.extract_strided_slice %484 {offsets = [0, 0], sizes = [9, 8], strides = [1, 1]} : vector<32x32xf32> to vector<9x8xf32>
    %494 = vector.extract_strided_slice %491 {offsets = [0, 0], sizes = [9, 8], strides = [1, 1]} : vector<32x32xf32> to vector<9x8xf32>
    %cst_176 = arith.constant dense<0.000000e+00> : vector<16x9xf32>
    %495 = tpu.matmul %492, %493, %cst_176 {dimension_numbers = #tpu.dot_dimension_numbers<[1], [1], [0], [0], [0, 0, 1, 0], [], []>} : vector<16x8xf32>, vector<9x8xf32>, vector<16x9xf32> -> vector<16x9xf32>
    %cst_177 = arith.constant 0.353553385 : f32
    %496 = vector.broadcast %cst_177 : f32 to vector<16x9xf32>
    %497 = arith.mulf %495, %496 : vector<16x9xf32>
    %cst_178 = arith.constant dense<0xFF800000> : vector<16xf32>
    %498 = vector.multi_reduction <maximumf>, %497, %cst_178 [1] : vector<16x9xf32> to vector<16xf32>
    %499 = vector.shape_cast %498 : vector<16xf32> to vector<16x1xf32>
    %500 = vector.broadcast %499 : vector<16x1xf32> to vector<16x9xf32>
    %501 = arith.subf %497, %500 : vector<16x9xf32>
    %502 = math.exp %501 : vector<16x9xf32>
    %cst_179 = arith.constant dense<0.000000e+00> : vector<16xf32>
    %503 = vector.multi_reduction <add>, %502, %cst_179 [1] : vector<16x9xf32> to vector<16xf32>
    %504 = vector.shape_cast %503 : vector<16xf32> to vector<16x1xf32>
    %505 = tpu.reciprocal %504 {approx = true} : vector<16x1xf32> -> vector<16x1xf32>
    %506 = vector.broadcast %505 : vector<16x1xf32> to vector<16x9xf32>
    %507 = arith.mulf %502, %506 : vector<16x9xf32>
    %cst_180 = arith.constant dense<0.000000e+00> : vector<16x8xf32>
    %508 = tpu.matmul %507, %494, %cst_180 {dimension_numbers = #tpu.dot_dimension_numbers<[1], [0], [0], [1], [0, 0, 1, 1], [], []>} : vector<16x9xf32>, vector<9x8xf32>, vector<16x8xf32> -> vector<16x8xf32>
    %509 = vector.extract_strided_slice %477 {offsets = [0, 8], sizes = [16, 8], strides = [1, 1]} : vector<32x32xf32> to vector<16x8xf32>
    %510 = vector.extract_strided_slice %484 {offsets = [0, 8], sizes = [9, 8], strides = [1, 1]} : vector<32x32xf32> to vector<9x8xf32>
    %511 = vector.extract_strided_slice %491 {offsets = [0, 8], sizes = [9, 8], strides = [1, 1]} : vector<32x32xf32> to vector<9x8xf32>
    %cst_181 = arith.constant dense<0.000000e+00> : vector<16x9xf32>
    %512 = tpu.matmul %509, %510, %cst_181 {dimension_numbers = #tpu.dot_dimension_numbers<[1], [1], [0], [0], [0, 0, 1, 0], [], []>} : vector<16x8xf32>, vector<9x8xf32>, vector<16x9xf32> -> vector<16x9xf32>
    %cst_182 = arith.constant 0.353553385 : f32
    %513 = vector.broadcast %cst_182 : f32 to vector<16x9xf32>
    %514 = arith.mulf %512, %513 : vector<16x9xf32>
    %cst_183 = arith.constant dense<0xFF800000> : vector<16xf32>
    %515 = vector.multi_reduction <maximumf>, %514, %cst_183 [1] : vector<16x9xf32> to vector<16xf32>
    %516 = vector.shape_cast %515 : vector<16xf32> to vector<16x1xf32>
    %517 = vector.broadcast %516 : vector<16x1xf32> to vector<16x9xf32>
    %518 = arith.subf %514, %517 : vector<16x9xf32>
    %519 = math.exp %518 : vector<16x9xf32>
    %cst_184 = arith.constant dense<0.000000e+00> : vector<16xf32>
    %520 = vector.multi_reduction <add>, %519, %cst_184 [1] : vector<16x9xf32> to vector<16xf32>
    %521 = vector.shape_cast %520 : vector<16xf32> to vector<16x1xf32>
    %522 = tpu.reciprocal %521 {approx = true} : vector<16x1xf32> -> vector<16x1xf32>
    %523 = vector.broadcast %522 : vector<16x1xf32> to vector<16x9xf32>
    %524 = arith.mulf %519, %523 : vector<16x9xf32>
    %cst_185 = arith.constant dense<0.000000e+00> : vector<16x8xf32>
    %525 = tpu.matmul %524, %511, %cst_185 {dimension_numbers = #tpu.dot_dimension_numbers<[1], [0], [0], [1], [0, 0, 1, 1], [], []>} : vector<16x9xf32>, vector<9x8xf32>, vector<16x8xf32> -> vector<16x8xf32>
    %526 = vector.extract_strided_slice %477 {offsets = [0, 16], sizes = [16, 8], strides = [1, 1]} : vector<32x32xf32> to vector<16x8xf32>
    %527 = vector.extract_strided_slice %484 {offsets = [0, 16], sizes = [9, 8], strides = [1, 1]} : vector<32x32xf32> to vector<9x8xf32>
    %528 = vector.extract_strided_slice %491 {offsets = [0, 16], sizes = [9, 8], strides = [1, 1]} : vector<32x32xf32> to vector<9x8xf32>
    %cst_186 = arith.constant dense<0.000000e+00> : vector<16x9xf32>
    %529 = tpu.matmul %526, %527, %cst_186 {dimension_numbers = #tpu.dot_dimension_numbers<[1], [1], [0], [0], [0, 0, 1, 0], [], []>} : vector<16x8xf32>, vector<9x8xf32>, vector<16x9xf32> -> vector<16x9xf32>
    %cst_187 = arith.constant 0.353553385 : f32
    %530 = vector.broadcast %cst_187 : f32 to vector<16x9xf32>
    %531 = arith.mulf %529, %530 : vector<16x9xf32>
    %cst_188 = arith.constant dense<0xFF800000> : vector<16xf32>
    %532 = vector.multi_reduction <maximumf>, %531, %cst_188 [1] : vector<16x9xf32> to vector<16xf32>
    %533 = vector.shape_cast %532 : vector<16xf32> to vector<16x1xf32>
    %534 = vector.broadcast %533 : vector<16x1xf32> to vector<16x9xf32>
    %535 = arith.subf %531, %534 : vector<16x9xf32>
    %536 = math.exp %535 : vector<16x9xf32>
    %cst_189 = arith.constant dense<0.000000e+00> : vector<16xf32>
    %537 = vector.multi_reduction <add>, %536, %cst_189 [1] : vector<16x9xf32> to vector<16xf32>
    %538 = vector.shape_cast %537 : vector<16xf32> to vector<16x1xf32>
    %539 = tpu.reciprocal %538 {approx = true} : vector<16x1xf32> -> vector<16x1xf32>
    %540 = vector.broadcast %539 : vector<16x1xf32> to vector<16x9xf32>
    %541 = arith.mulf %536, %540 : vector<16x9xf32>
    %cst_190 = arith.constant dense<0.000000e+00> : vector<16x8xf32>
    %542 = tpu.matmul %541, %528, %cst_190 {dimension_numbers = #tpu.dot_dimension_numbers<[1], [0], [0], [1], [0, 0, 1, 1], [], []>} : vector<16x9xf32>, vector<9x8xf32>, vector<16x8xf32> -> vector<16x8xf32>
    %543 = vector.extract_strided_slice %477 {offsets = [0, 24], sizes = [16, 8], strides = [1, 1]} : vector<32x32xf32> to vector<16x8xf32>
    %544 = vector.extract_strided_slice %484 {offsets = [0, 24], sizes = [9, 8], strides = [1, 1]} : vector<32x32xf32> to vector<9x8xf32>
    %545 = vector.extract_strided_slice %491 {offsets = [0, 24], sizes = [9, 8], strides = [1, 1]} : vector<32x32xf32> to vector<9x8xf32>
    %cst_191 = arith.constant dense<0.000000e+00> : vector<16x9xf32>
    %546 = tpu.matmul %543, %544, %cst_191 {dimension_numbers = #tpu.dot_dimension_numbers<[1], [1], [0], [0], [0, 0, 1, 0], [], []>} : vector<16x8xf32>, vector<9x8xf32>, vector<16x9xf32> -> vector<16x9xf32>
    %cst_192 = arith.constant 0.353553385 : f32
    %547 = vector.broadcast %cst_192 : f32 to vector<16x9xf32>
    %548 = arith.mulf %546, %547 : vector<16x9xf32>
    %cst_193 = arith.constant dense<0xFF800000> : vector<16xf32>
    %549 = vector.multi_reduction <maximumf>, %548, %cst_193 [1] : vector<16x9xf32> to vector<16xf32>
    %550 = vector.shape_cast %549 : vector<16xf32> to vector<16x1xf32>
    %551 = vector.broadcast %550 : vector<16x1xf32> to vector<16x9xf32>
    %552 = arith.subf %548, %551 : vector<16x9xf32>
    %553 = math.exp %552 : vector<16x9xf32>
    %cst_194 = arith.constant dense<0.000000e+00> : vector<16xf32>
    %554 = vector.multi_reduction <add>, %553, %cst_194 [1] : vector<16x9xf32> to vector<16xf32>
    %555 = vector.shape_cast %554 : vector<16xf32> to vector<16x1xf32>
    %556 = tpu.reciprocal %555 {approx = true} : vector<16x1xf32> -> vector<16x1xf32>
    %557 = vector.broadcast %556 : vector<16x1xf32> to vector<16x9xf32>
    %558 = arith.mulf %553, %557 : vector<16x9xf32>
    %cst_195 = arith.constant dense<0.000000e+00> : vector<16x8xf32>
    %559 = tpu.matmul %558, %545, %cst_195 {dimension_numbers = #tpu.dot_dimension_numbers<[1], [0], [0], [1], [0, 0, 1, 1], [], []>} : vector<16x9xf32>, vector<9x8xf32>, vector<16x8xf32> -> vector<16x8xf32>
    %560 = tpu.concatenate %508, %525, %542, %559 in 1 : vector<16x8xf32>, vector<16x8xf32>, vector<16x8xf32>, vector<16x8xf32> -> vector<16x32xf32>
    %561 = vector.extract_strided_slice %477 {offsets = [16, 0], sizes = [16, 8], strides = [1, 1]} : vector<32x32xf32> to vector<16x8xf32>
    %562 = vector.extract_strided_slice %484 {offsets = [16, 0], sizes = [9, 8], strides = [1, 1]} : vector<32x32xf32> to vector<9x8xf32>
    %563 = vector.extract_strided_slice %491 {offsets = [16, 0], sizes = [9, 8], strides = [1, 1]} : vector<32x32xf32> to vector<9x8xf32>
    %cst_196 = arith.constant dense<0.000000e+00> : vector<16x9xf32>
    %564 = tpu.matmul %561, %562, %cst_196 {dimension_numbers = #tpu.dot_dimension_numbers<[1], [1], [0], [0], [0, 0, 1, 0], [], []>} : vector<16x8xf32>, vector<9x8xf32>, vector<16x9xf32> -> vector<16x9xf32>
    %cst_197 = arith.constant 0.353553385 : f32
    %565 = vector.broadcast %cst_197 : f32 to vector<16x9xf32>
    %566 = arith.mulf %564, %565 : vector<16x9xf32>
    %cst_198 = arith.constant dense<0xFF800000> : vector<16xf32>
    %567 = vector.multi_reduction <maximumf>, %566, %cst_198 [1] : vector<16x9xf32> to vector<16xf32>
    %568 = vector.shape_cast %567 : vector<16xf32> to vector<16x1xf32>
    %569 = vector.broadcast %568 : vector<16x1xf32> to vector<16x9xf32>
    %570 = arith.subf %566, %569 : vector<16x9xf32>
    %571 = math.exp %570 : vector<16x9xf32>
    %cst_199 = arith.constant dense<0.000000e+00> : vector<16xf32>
    %572 = vector.multi_reduction <add>, %571, %cst_199 [1] : vector<16x9xf32> to vector<16xf32>
    %573 = vector.shape_cast %572 : vector<16xf32> to vector<16x1xf32>
    %574 = tpu.reciprocal %573 {approx = true} : vector<16x1xf32> -> vector<16x1xf32>
    %575 = vector.broadcast %574 : vector<16x1xf32> to vector<16x9xf32>
    %576 = arith.mulf %571, %575 : vector<16x9xf32>
    %cst_200 = arith.constant dense<0.000000e+00> : vector<16x8xf32>
    %577 = tpu.matmul %576, %563, %cst_200 {dimension_numbers = #tpu.dot_dimension_numbers<[1], [0], [0], [1], [0, 0, 1, 1], [], []>} : vector<16x9xf32>, vector<9x8xf32>, vector<16x8xf32> -> vector<16x8xf32>
    %578 = vector.extract_strided_slice %477 {offsets = [16, 8], sizes = [16, 8], strides = [1, 1]} : vector<32x32xf32> to vector<16x8xf32>
    %579 = vector.extract_strided_slice %484 {offsets = [16, 8], sizes = [9, 8], strides = [1, 1]} : vector<32x32xf32> to vector<9x8xf32>
    %580 = vector.extract_strided_slice %491 {offsets = [16, 8], sizes = [9, 8], strides = [1, 1]} : vector<32x32xf32> to vector<9x8xf32>
    %cst_201 = arith.constant dense<0.000000e+00> : vector<16x9xf32>
    %581 = tpu.matmul %578, %579, %cst_201 {dimension_numbers = #tpu.dot_dimension_numbers<[1], [1], [0], [0], [0, 0, 1, 0], [], []>} : vector<16x8xf32>, vector<9x8xf32>, vector<16x9xf32> -> vector<16x9xf32>
    %cst_202 = arith.constant 0.353553385 : f32
    %582 = vector.broadcast %cst_202 : f32 to vector<16x9xf32>
    %583 = arith.mulf %581, %582 : vector<16x9xf32>
    %cst_203 = arith.constant dense<0xFF800000> : vector<16xf32>
    %584 = vector.multi_reduction <maximumf>, %583, %cst_203 [1] : vector<16x9xf32> to vector<16xf32>
    %585 = vector.shape_cast %584 : vector<16xf32> to vector<16x1xf32>
    %586 = vector.broadcast %585 : vector<16x1xf32> to vector<16x9xf32>
    %587 = arith.subf %583, %586 : vector<16x9xf32>
    %588 = math.exp %587 : vector<16x9xf32>
    %cst_204 = arith.constant dense<0.000000e+00> : vector<16xf32>
    %589 = vector.multi_reduction <add>, %588, %cst_204 [1] : vector<16x9xf32> to vector<16xf32>
    %590 = vector.shape_cast %589 : vector<16xf32> to vector<16x1xf32>
    %591 = tpu.reciprocal %590 {approx = true} : vector<16x1xf32> -> vector<16x1xf32>
    %592 = vector.broadcast %591 : vector<16x1xf32> to vector<16x9xf32>
    %593 = arith.mulf %588, %592 : vector<16x9xf32>
    %cst_205 = arith.constant dense<0.000000e+00> : vector<16x8xf32>
    %594 = tpu.matmul %593, %580, %cst_205 {dimension_numbers = #tpu.dot_dimension_numbers<[1], [0], [0], [1], [0, 0, 1, 1], [], []>} : vector<16x9xf32>, vector<9x8xf32>, vector<16x8xf32> -> vector<16x8xf32>
    %595 = vector.extract_strided_slice %477 {offsets = [16, 16], sizes = [16, 8], strides = [1, 1]} : vector<32x32xf32> to vector<16x8xf32>
    %596 = vector.extract_strided_slice %484 {offsets = [16, 16], sizes = [9, 8], strides = [1, 1]} : vector<32x32xf32> to vector<9x8xf32>
    %597 = vector.extract_strided_slice %491 {offsets = [16, 16], sizes = [9, 8], strides = [1, 1]} : vector<32x32xf32> to vector<9x8xf32>
    %cst_206 = arith.constant dense<0.000000e+00> : vector<16x9xf32>
    %598 = tpu.matmul %595, %596, %cst_206 {dimension_numbers = #tpu.dot_dimension_numbers<[1], [1], [0], [0], [0, 0, 1, 0], [], []>} : vector<16x8xf32>, vector<9x8xf32>, vector<16x9xf32> -> vector<16x9xf32>
    %cst_207 = arith.constant 0.353553385 : f32
    %599 = vector.broadcast %cst_207 : f32 to vector<16x9xf32>
    %600 = arith.mulf %598, %599 : vector<16x9xf32>
    %cst_208 = arith.constant dense<0xFF800000> : vector<16xf32>
    %601 = vector.multi_reduction <maximumf>, %600, %cst_208 [1] : vector<16x9xf32> to vector<16xf32>
    %602 = vector.shape_cast %601 : vector<16xf32> to vector<16x1xf32>
    %603 = vector.broadcast %602 : vector<16x1xf32> to vector<16x9xf32>
    %604 = arith.subf %600, %603 : vector<16x9xf32>
    %605 = math.exp %604 : vector<16x9xf32>
    %cst_209 = arith.constant dense<0.000000e+00> : vector<16xf32>
    %606 = vector.multi_reduction <add>, %605, %cst_209 [1] : vector<16x9xf32> to vector<16xf32>
    %607 = vector.shape_cast %606 : vector<16xf32> to vector<16x1xf32>
    %608 = tpu.reciprocal %607 {approx = true} : vector<16x1xf32> -> vector<16x1xf32>
    %609 = vector.broadcast %608 : vector<16x1xf32> to vector<16x9xf32>
    %610 = arith.mulf %605, %609 : vector<16x9xf32>
    %cst_210 = arith.constant dense<0.000000e+00> : vector<16x8xf32>
    %611 = tpu.matmul %610, %597, %cst_210 {dimension_numbers = #tpu.dot_dimension_numbers<[1], [0], [0], [1], [0, 0, 1, 1], [], []>} : vector<16x9xf32>, vector<9x8xf32>, vector<16x8xf32> -> vector<16x8xf32>
    %612 = vector.extract_strided_slice %477 {offsets = [16, 24], sizes = [16, 8], strides = [1, 1]} : vector<32x32xf32> to vector<16x8xf32>
    %613 = vector.extract_strided_slice %484 {offsets = [16, 24], sizes = [9, 8], strides = [1, 1]} : vector<32x32xf32> to vector<9x8xf32>
    %614 = vector.extract_strided_slice %491 {offsets = [16, 24], sizes = [9, 8], strides = [1, 1]} : vector<32x32xf32> to vector<9x8xf32>
    %cst_211 = arith.constant dense<0.000000e+00> : vector<16x9xf32>
    %615 = tpu.matmul %612, %613, %cst_211 {dimension_numbers = #tpu.dot_dimension_numbers<[1], [1], [0], [0], [0, 0, 1, 0], [], []>} : vector<16x8xf32>, vector<9x8xf32>, vector<16x9xf32> -> vector<16x9xf32>
    %cst_212 = arith.constant 0.353553385 : f32
    %616 = vector.broadcast %cst_212 : f32 to vector<16x9xf32>
    %617 = arith.mulf %615, %616 : vector<16x9xf32>
    %cst_213 = arith.constant dense<0xFF800000> : vector<16xf32>
    %618 = vector.multi_reduction <maximumf>, %617, %cst_213 [1] : vector<16x9xf32> to vector<16xf32>
    %619 = vector.shape_cast %618 : vector<16xf32> to vector<16x1xf32>
    %620 = vector.broadcast %619 : vector<16x1xf32> to vector<16x9xf32>
    %621 = arith.subf %617, %620 : vector<16x9xf32>
    %622 = math.exp %621 : vector<16x9xf32>
    %cst_214 = arith.constant dense<0.000000e+00> : vector<16xf32>
    %623 = vector.multi_reduction <add>, %622, %cst_214 [1] : vector<16x9xf32> to vector<16xf32>
    %624 = vector.shape_cast %623 : vector<16xf32> to vector<16x1xf32>
    %625 = tpu.reciprocal %624 {approx = true} : vector<16x1xf32> -> vector<16x1xf32>
    %626 = vector.broadcast %625 : vector<16x1xf32> to vector<16x9xf32>
    %627 = arith.mulf %622, %626 : vector<16x9xf32>
    %cst_215 = arith.constant dense<0.000000e+00> : vector<16x8xf32>
    %628 = tpu.matmul %627, %614, %cst_215 {dimension_numbers = #tpu.dot_dimension_numbers<[1], [0], [0], [1], [0, 0, 1, 1], [], []>} : vector<16x9xf32>, vector<9x8xf32>, vector<16x8xf32> -> vector<16x8xf32>
    %629 = tpu.concatenate %577, %594, %611, %628 in 1 : vector<16x8xf32>, vector<16x8xf32>, vector<16x8xf32>, vector<16x8xf32> -> vector<16x32xf32>
    %630 = tpu.concatenate %560, %629 in 0 : vector<16x32xf32>, vector<16x32xf32> -> vector<32x32xf32>
    %c1_216 = arith.constant 1 : index
    %c0_217 = arith.constant 0 : index
    %c0_218 = arith.constant 0 : index
    %631 = vector.load %arg11[%c1_216, %c0_217, %c0_218] : memref<2x32x32xf32, #tpu.memory_space<vmem>>, vector<1x32x32xf32>
    %632 = vector.shape_cast %631 : vector<1x32x32xf32> to vector<32x32xf32>
    %cst_219 = arith.constant dense<0.000000e+00> : vector<32x32xf32>
    %633 = tpu.matmul %630, %632, %cst_219 {dimension_numbers = #tpu.dot_dimension_numbers<[1], [0], [0], [1], [0, 0, 1, 1], [], []>} : vector<32x32xf32>, vector<32x32xf32>, vector<32x32xf32> -> vector<32x32xf32>
    %c1_220 = arith.constant 1 : index
    %c0_221 = arith.constant 0 : index
    %c0_222 = arith.constant 0 : index
    %634 = vector.load %arg12[%c1_220, %c0_221, %c0_222] : memref<2x1x32xf32, #tpu.memory_space<vmem>>, vector<1x1x32xf32>
    %635 = vector.shape_cast %634 : vector<1x1x32xf32> to vector<1x32xf32>
    %636 = vector.broadcast %635 : vector<1x32xf32> to vector<32x32xf32>
    %637 = arith.addf %633, %636 : vector<32x32xf32>
    %638 = arith.addf %470, %637 : vector<32x32xf32>
    %c1_223 = arith.constant 1 : index
    %c0_224 = arith.constant 0 : index
    %c0_225 = arith.constant 0 : index
    %639 = vector.load %arg13[%c1_223, %c0_224, %c0_225] : memref<2x1x32xf32, #tpu.memory_space<vmem>>, vector<1x1x32xf32>
    %640 = vector.shape_cast %639 : vector<1x1x32xf32> to vector<1x32xf32>
    %c1_226 = arith.constant 1 : index
    %c0_227 = arith.constant 0 : index
    %c0_228 = arith.constant 0 : index
    %641 = vector.load %arg14[%c1_226, %c0_227, %c0_228] : memref<2x1x32xf32, #tpu.memory_space<vmem>>, vector<1x1x32xf32>
    %642 = vector.shape_cast %641 : vector<1x1x32xf32> to vector<1x32xf32>
    %cst_229 = arith.constant dense<0.000000e+00> : vector<32xf32>
    %643 = vector.multi_reduction <add>, %638, %cst_229 [1] : vector<32x32xf32> to vector<32xf32>
    %644 = vector.shape_cast %643 : vector<32xf32> to vector<32x1xf32>
    %cst_230 = arith.constant 3.200000e+01 : f32
    %645 = vector.broadcast %cst_230 : f32 to vector<32x1xf32>
    %646 = arith.divf %644, %645 : vector<32x1xf32>
    %647 = vector.broadcast %646 : vector<32x1xf32> to vector<32x32xf32>
    %648 = arith.subf %638, %647 : vector<32x32xf32>
    %649 = arith.mulf %648, %648 : vector<32x32xf32>
    %cst_231 = arith.constant dense<0.000000e+00> : vector<32xf32>
    %650 = vector.multi_reduction <add>, %649, %cst_231 [1] : vector<32x32xf32> to vector<32xf32>
    %651 = vector.shape_cast %650 : vector<32xf32> to vector<32x1xf32>
    %cst_232 = arith.constant 3.200000e+01 : f32
    %652 = vector.broadcast %cst_232 : f32 to vector<32x1xf32>
    %653 = arith.divf %651, %652 : vector<32x1xf32>
    %654 = vector.broadcast %646 : vector<32x1xf32> to vector<32x32xf32>
    %655 = arith.subf %638, %654 : vector<32x32xf32>
    %cst_233 = arith.constant 9.99999974E-6 : f32
    %656 = vector.broadcast %cst_233 : f32 to vector<32x1xf32>
    %657 = arith.addf %653, %656 : vector<32x1xf32>
    %658 = math.rsqrt %657 : vector<32x1xf32>
    %659 = vector.broadcast %658 : vector<32x1xf32> to vector<32x32xf32>
    %660 = arith.mulf %655, %659 : vector<32x32xf32>
    %661 = vector.broadcast %640 : vector<1x32xf32> to vector<32x32xf32>
    %662 = arith.mulf %660, %661 : vector<32x32xf32>
    %663 = vector.broadcast %642 : vector<1x32xf32> to vector<32x32xf32>
    %664 = arith.addf %662, %663 : vector<32x32xf32>
    %c1_234 = arith.constant 1 : index
    %c0_235 = arith.constant 0 : index
    %c0_236 = arith.constant 0 : index
    %665 = vector.load %arg15[%c1_234, %c0_235, %c0_236] : memref<2x32x64xf32, #tpu.memory_space<vmem>>, vector<1x32x64xf32>
    %666 = vector.shape_cast %665 : vector<1x32x64xf32> to vector<32x64xf32>
    %cst_237 = arith.constant dense<0.000000e+00> : vector<32x64xf32>
    %667 = tpu.matmul %664, %666, %cst_237 {dimension_numbers = #tpu.dot_dimension_numbers<[1], [0], [0], [1], [0, 0, 1, 1], [], []>} : vector<32x32xf32>, vector<32x64xf32>, vector<32x64xf32> -> vector<32x64xf32>
    %c1_238 = arith.constant 1 : index
    %c0_239 = arith.constant 0 : index
    %c0_240 = arith.constant 0 : index
    %668 = vector.load %arg16[%c1_238, %c0_239, %c0_240] : memref<2x1x64xf32, #tpu.memory_space<vmem>>, vector<1x1x64xf32>
    %669 = vector.shape_cast %668 : vector<1x1x64xf32> to vector<1x64xf32>
    %670 = vector.broadcast %669 : vector<1x64xf32> to vector<32x64xf32>
    %671 = arith.addf %667, %670 : vector<32x64xf32>
    %cst_241 = arith.constant 0.000000e+00 : f32
    %672 = vector.broadcast %cst_241 : f32 to vector<32x64xf32>
    %673 = arith.maximumf %671, %672 : vector<32x64xf32>
    %c1_242 = arith.constant 1 : index
    %c0_243 = arith.constant 0 : index
    %c0_244 = arith.constant 0 : index
    %674 = vector.load %arg17[%c1_242, %c0_243, %c0_244] : memref<2x64x32xf32, #tpu.memory_space<vmem>>, vector<1x64x32xf32>
    %675 = vector.shape_cast %674 : vector<1x64x32xf32> to vector<64x32xf32>
    %cst_245 = arith.constant dense<0.000000e+00> : vector<32x32xf32>
    %676 = tpu.matmul %673, %675, %cst_245 {dimension_numbers = #tpu.dot_dimension_numbers<[1], [0], [0], [1], [0, 0, 1, 1], [], []>} : vector<32x64xf32>, vector<64x32xf32>, vector<32x32xf32> -> vector<32x32xf32>
    %c1_246 = arith.constant 1 : index
    %c0_247 = arith.constant 0 : index
    %c0_248 = arith.constant 0 : index
    %677 = vector.load %arg18[%c1_246, %c0_247, %c0_248] : memref<2x1x32xf32, #tpu.memory_space<vmem>>, vector<1x1x32xf32>
    %678 = vector.shape_cast %677 : vector<1x1x32xf32> to vector<1x32xf32>
    %679 = vector.broadcast %678 : vector<1x32xf32> to vector<32x32xf32>
    %680 = arith.addf %676, %679 : vector<32x32xf32>
    %681 = arith.addf %664, %680 : vector<32x32xf32>
    %c1_249 = arith.constant 1 : index
    %c0_250 = arith.constant 0 : index
    %c0_251 = arith.constant 0 : index
    %682 = vector.load %arg19[%c1_249, %c0_250, %c0_251] : memref<2x1x32xf32, #tpu.memory_space<vmem>>, vector<1x1x32xf32>
    %683 = vector.shape_cast %682 : vector<1x1x32xf32> to vector<1x32xf32>
    %c1_252 = arith.constant 1 : index
    %c0_253 = arith.constant 0 : index
    %c0_254 = arith.constant 0 : index
    %684 = vector.load %arg20[%c1_252, %c0_253, %c0_254] : memref<2x1x32xf32, #tpu.memory_space<vmem>>, vector<1x1x32xf32>
    %685 = vector.shape_cast %684 : vector<1x1x32xf32> to vector<1x32xf32>
    %cst_255 = arith.constant dense<0.000000e+00> : vector<32xf32>
    %686 = vector.multi_reduction <add>, %681, %cst_255 [1] : vector<32x32xf32> to vector<32xf32>
    %687 = vector.shape_cast %686 : vector<32xf32> to vector<32x1xf32>
    %cst_256 = arith.constant 3.200000e+01 : f32
    %688 = vector.broadcast %cst_256 : f32 to vector<32x1xf32>
    %689 = arith.divf %687, %688 : vector<32x1xf32>
    %690 = vector.broadcast %689 : vector<32x1xf32> to vector<32x32xf32>
    %691 = arith.subf %681, %690 : vector<32x32xf32>
    %692 = arith.mulf %691, %691 : vector<32x32xf32>
    %cst_257 = arith.constant dense<0.000000e+00> : vector<32xf32>
    %693 = vector.multi_reduction <add>, %692, %cst_257 [1] : vector<32x32xf32> to vector<32xf32>
    %694 = vector.shape_cast %693 : vector<32xf32> to vector<32x1xf32>
    %cst_258 = arith.constant 3.200000e+01 : f32
    %695 = vector.broadcast %cst_258 : f32 to vector<32x1xf32>
    %696 = arith.divf %694, %695 : vector<32x1xf32>
    %697 = vector.broadcast %689 : vector<32x1xf32> to vector<32x32xf32>
    %698 = arith.subf %681, %697 : vector<32x32xf32>
    %cst_259 = arith.constant 9.99999974E-6 : f32
    %699 = vector.broadcast %cst_259 : f32 to vector<32x1xf32>
    %700 = arith.addf %696, %699 : vector<32x1xf32>
    %701 = math.rsqrt %700 : vector<32x1xf32>
    %702 = vector.broadcast %701 : vector<32x1xf32> to vector<32x32xf32>
    %703 = arith.mulf %698, %702 : vector<32x32xf32>
    %704 = vector.broadcast %683 : vector<1x32xf32> to vector<32x32xf32>
    %705 = arith.mulf %703, %704 : vector<32x32xf32>
    %706 = vector.broadcast %685 : vector<1x32xf32> to vector<32x32xf32>
    %707 = arith.addf %705, %706 : vector<32x32xf32>
    %708 = vector.extract_strided_slice %707 {offsets = [0, 0], sizes = [9, 32], strides = [1, 1]} : vector<32x32xf32> to vector<9x32xf32>
    %cst_260 = arith.constant dense<0xFF800000> : vector<32xf32>
    %709 = vector.multi_reduction <maximumf>, %708, %cst_260 [0] : vector<9x32xf32> to vector<32xf32>
    %710 = vector.shape_cast %709 : vector<32xf32> to vector<1x32xf32>
    %711 = vector.extract_strided_slice %707 {offsets = [16, 0], sizes = [9, 32], strides = [1, 1]} : vector<32x32xf32> to vector<9x32xf32>
    %cst_261 = arith.constant dense<0xFF800000> : vector<32xf32>
    %712 = vector.multi_reduction <maximumf>, %711, %cst_261 [0] : vector<9x32xf32> to vector<32xf32>
    %713 = vector.shape_cast %712 : vector<32xf32> to vector<1x32xf32>
    %714 = tpu.concatenate %710, %713 in 0 : vector<1x32xf32>, vector<1x32xf32> -> vector<2x32xf32>
    %c0_262 = arith.constant 0 : index
    %c0_263 = arith.constant 0 : index
    %715 = vector.load %arg21[%c0_262, %c0_263] : memref<32x64xf32, #tpu.memory_space<vmem>>, vector<32x64xf32>
    %cst_264 = arith.constant dense<0.000000e+00> : vector<2x64xf32>
    %716 = tpu.matmul %714, %715, %cst_264 {dimension_numbers = #tpu.dot_dimension_numbers<[1], [0], [0], [1], [0, 0, 1, 1], [], []>} : vector<2x32xf32>, vector<32x64xf32>, vector<2x64xf32> -> vector<2x64xf32>
    %c0_265 = arith.constant 0 : index
    %c0_266 = arith.constant 0 : index
    %717 = vector.load %arg22[%c0_265, %c0_266] : memref<1x64xf32, #tpu.memory_space<vmem>>, vector<1x64xf32>
    %718 = vector.broadcast %717 : vector<1x64xf32> to vector<2x64xf32>
    %719 = arith.addf %716, %718 : vector<2x64xf32>
    %cst_267 = arith.constant 0.000000e+00 : f32
    %720 = vector.broadcast %cst_267 : f32 to vector<2x64xf32>
    %721 = arith.maximumf %719, %720 : vector<2x64xf32>
    %c0_268 = arith.constant 0 : index
    %c0_269 = arith.constant 0 : index
    %722 = vector.load %arg23[%c0_268, %c0_269] : memref<64x1xf32, #tpu.memory_space<vmem>>, vector<64x1xf32>
    %cst_270 = arith.constant dense<0.000000e+00> : vector<2x1xf32>
    %723 = tpu.matmul %721, %722, %cst_270 {dimension_numbers = #tpu.dot_dimension_numbers<[1], [0], [0], [1], [0, 0, 1, 1], [], []>} : vector<2x64xf32>, vector<64x1xf32>, vector<2x1xf32> -> vector<2x1xf32>
    %c0_271 = arith.constant 0 : index
    %c0_272 = arith.constant 0 : index
    %724 = vector.load %arg24[%c0_271, %c0_272] : memref<1x1xf32, #tpu.memory_space<vmem>>, vector<1x1xf32>
    %725 = vector.broadcast %724 : vector<1x1xf32> to vector<2x1xf32>
    %726 = arith.addf %723, %725 : vector<2x1xf32>
    %cst_273 = arith.constant 0.000000e+00 : f32
    %727 = vector.broadcast %cst_273 : f32 to vector<2x1xf32>
    %728 = arith.subf %727, %726 : vector<2x1xf32>
    %729 = math.exp %728 : vector<2x1xf32>
    %cst_274 = arith.constant 1.000000e+00 : f32
    %730 = vector.broadcast %cst_274 : f32 to vector<2x1xf32>
    %731 = arith.addf %730, %729 : vector<2x1xf32>
    %732 = tpu.reciprocal %731 {approx = true} : vector<2x1xf32> -> vector<2x1xf32>
    %c0_275 = arith.constant 0 : index
    %c0_276 = arith.constant 0 : index
    %733 = vector.load %arg25[%c0_275, %c0_276] : memref<2x1xf32, #tpu.memory_space<vmem>>, vector<2x1xf32>
    tpu.vector_store %arg25[%c0_275, %c0_276], %732 {strides = array<i32>} : memref<2x1xf32, #tpu.memory_space<vmem>>, vector<2x1xf32>,
    return
  }
}

</mosaic_0001>

<llo_original>
// kernel: forward.1
$region0: #{forward.1}
  #allocation0 [shape = 'u32[]', space=smem, size = 0x4, offset = 0x4, fixed_abs, tag = 'smem constant byte address 0x4 - core index']
  #allocation1 [shape = 'u32[72,128]{1,0:T(1,128)}', space=vmem, size = 0x9000, scoped, tag = 'internal scratch']
  #allocation2 [shape = 'f32[1,1]{1,0:T(1,128)S(1)}', space=vmem, size = 0x200, scoped, tag = 'scoped memory for forward.1']
  %s0 = inlined_call_operand.vmem [shape: f32[2,8,32], index: 0, kind: input, shape index: {}]
  %s1 = inlined_call_operand.vmem [shape: f32[256,32], index: 1, kind: input, shape index: {}]
  %s2 = inlined_call_operand.vmem [shape: f32[1,32], index: 2, kind: input, shape index: {}]
  %s3 = inlined_call_operand.vmem [shape: f32[16,32], index: 3, kind: input, shape index: {}]
  %s4 = inlined_call_operand.vmem [shape: f32[1,32], index: 4, kind: input, shape index: {}]
  %s5 = inlined_call_operand.vmem [shape: f32[2,32,32], index: 5, kind: input, shape index: {}]
  %s6 = inlined_call_operand.vmem [shape: f32[2,1,32], index: 6, kind: input, shape index: {}]
  %s7 = inlined_call_operand.vmem [shape: f32[2,32,32], index: 7, kind: input, shape index: {}]
  %s8 = inlined_call_operand.vmem [shape: f32[2,1,32], index: 8, kind: input, shape index: {}]
  %s9 = inlined_call_operand.vmem [shape: f32[2,32,32], index: 9, kind: input, shape index: {}]
  %s10 = inlined_call_operand.vmem [shape: f32[2,1,32], index: 10, kind: input, shape index: {}]
  %s11 = inlined_call_operand.vmem [shape: f32[2,32,32], index: 11, kind: input, shape index: {}]
  %s12 = inlined_call_operand.vmem [shape: f32[2,1,32], index: 12, kind: input, shape index: {}]
  %s13 = inlined_call_operand.vmem [shape: f32[2,1,32], index: 13, kind: input, shape index: {}]
  %s14 = inlined_call_operand.vmem [shape: f32[2,1,32], index: 14, kind: input, shape index: {}]
  %s15 = inlined_call_operand.vmem [shape: f32[2,32,64], index: 15, kind: input, shape index: {}]
  %s16 = inlined_call_operand.vmem [shape: f32[2,1,64], index: 16, kind: input, shape index: {}]
  %s17 = inlined_call_operand.vmem [shape: f32[2,64,32], index: 17, kind: input, shape index: {}]
  %s18 = inlined_call_operand.vmem [shape: f32[2,1,32], index: 18, kind: input, shape index: {}]
  %s19 = inlined_call_operand.vmem [shape: f32[2,1,32], index: 19, kind: input, shape index: {}]
  %s20 = inlined_call_operand.vmem [shape: f32[2,1,32], index: 20, kind: input, shape index: {}]
  %s21 = inlined_call_operand.vmem [shape: f32[32,64], index: 21, kind: input, shape index: {}]
  %s22 = inlined_call_operand.vmem [shape: f32[1,64], index: 22, kind: input, shape index: {}]
  %s23 = inlined_call_operand.vmem [shape: f32[64,1], index: 23, kind: input, shape index: {}]
  %s24 = inlined_call_operand.<no memory space> [shape: f32[1,1], index: 24, kind: input, shape index: {}]
  %s25 = inlined_call_operand.vmem [shape: f32[2,1], index: 25, kind: output, shape index: {}]
  %s26 = sld [smem:[#allocation0]]
  $region110: #{forward.1} parent=0
    _
  %s28 = ssub.s32 1, %s26
  %s29 = scalar_select 0, %s28, %s26
  %v30 = vstv %s24
  %31 = vst [vmem:[#allocation2] sm:$0x1] %v30
  // Predicated region
  $region2: #{forward.1} parent=0 // pred_check
    _
  $region3: #{forward.1} parent=0 // pred_check_branch
    %33 = sbr.rel (0) target = $region5
  $region4: #{forward.1} parent=0 // pred_region
    _
  $region5: #{forward.1} parent=0 // pred_fallthru
    _
  // Predicated region
  $region6: #{forward.1} parent=0 // pred_check
    _
  $region7: #{forward.1} parent=0 // pred_check_branch
    %35 = sbr.rel (0) target = $region9
  $region8: #{forward.1} parent=0 // pred_region
    _
  $region9: #{forward.1} parent=0 // pred_fallthru
    _
  // Predicated region
  $region10: #{forward.1} parent=0 // pred_check
    _
  $region11: #{forward.1} parent=0 // pred_check_branch
    %37 = sbr.rel (0) target = $region13
  $region12: #{forward.1} parent=0 // pred_region
    _
  $region13: #{forward.1} parent=0 // pred_fallthru
    _
  // Predicated region
  $region14: #{forward.1} parent=0 // pred_check
    _
  $region15: #{forward.1} parent=0 // pred_check_branch
    %39 = sbr.rel (0) target = $region17
  $region16: #{forward.1} parent=0 // pred_region
    _
  $region17: #{forward.1} parent=0 // pred_fallthru
    _
  // Predicated region
  $region18: #{forward.1} parent=0 // pred_check
    _
  $region19: #{forward.1} parent=0 // pred_check_branch
    %41 = sbr.rel (0) target = $region21
  $region20: #{forward.1} parent=0 // pred_region
    _
  $region21: #{forward.1} parent=0 // pred_fallthru
    _
  // Predicated region
  $region22: #{forward.1} parent=0 // pred_check
    _
  $region23: #{forward.1} parent=0 // pred_check_branch
    %43 = sbr.rel (0) target = $region25
  $region24: #{forward.1} parent=0 // pred_region
    _
  $region25: #{forward.1} parent=0 // pred_fallthru
    _
  // Predicated region
  $region26: #{forward.1} parent=0 // pred_check
    _
  $region27: #{forward.1} parent=0 // pred_check_branch
    %45 = sbr.rel (0) target = $region29
  $region28: #{forward.1} parent=0 // pred_region
    _
  $region29: #{forward.1} parent=0 // pred_fallthru
    _
  // Predicated region
  $region30: #{forward.1} parent=0 // pred_check
    _
  $region31: #{forward.1} parent=0 // pred_check_branch
    %47 = sbr.rel (0) target = $region33
  $region32: #{forward.1} parent=0 // pred_region
    _
  $region33: #{forward.1} parent=0 // pred_fallthru
    _
  // Predicated region
  $region34: #{forward.1} parent=0 // pred_check
    _
  $region35: #{forward.1} parent=0 // pred_check_branch
    %49 = sbr.rel (0) target = $region37
  $region36: #{forward.1} parent=0 // pred_region
    _
  $region37: #{forward.1} parent=0 // pred_fallthru
    _
  // Predicated region
  $region38: #{forward.1} parent=0 // pred_check
    _
  $region39: #{forward.1} parent=0 // pred_check_branch
    %51 = sbr.rel (0) target = $region41
  $region40: #{forward.1} parent=0 // pred_region
    _
  $region41: #{forward.1} parent=0 // pred_fallthru
    _
  // Predicated region
  $region42: #{forward.1} parent=0 // pred_check
    _
  $region43: #{forward.1} parent=0 // pred_check_branch
    %53 = sbr.rel (0) target = $region45
  $region44: #{forward.1} parent=0 // pred_region
    _
  $region45: #{forward.1} parent=0 // pred_fallthru
    _
  // Predicated region
  $region46: #{forward.1} parent=0 // pred_check
    _
  $region47: #{forward.1} parent=0 // pred_check_branch
    %55 = sbr.rel (0) target = $region49
  $region48: #{forward.1} parent=0 // pred_region
    _
  $region49: #{forward.1} parent=0 // pred_fallthru
    _
  // Predicated region
  $region50: #{forward.1} parent=0 // pred_check
    _
  $region51: #{forward.1} parent=0 // pred_check_branch
    %57 = sbr.rel (0) target = $region53
  $region52: #{forward.1} parent=0 // pred_region
    _
  $region53: #{forward.1} parent=0 // pred_fallthru
    _
  // Predicated region
  $region54: #{forward.1} parent=0 // pred_check
    _
  $region55: #{forward.1} parent=0 // pred_check_branch
    %59 = sbr.rel (0) target = $region57
  $region56: #{forward.1} parent=0 // pred_region
    _
  $region57: #{forward.1} parent=0 // pred_fallthru
    _
  // Predicated region
  $region58: #{forward.1} parent=0 // pred_check
    _
  $region59: #{forward.1} parent=0 // pred_check_branch
    %61 = sbr.rel (0) target = $region61
  $region60: #{forward.1} parent=0 // pred_region
    _
  $region61: #{forward.1} parent=0 // pred_fallthru
    _
  // Predicated region
  $region62: #{forward.1} parent=0 // pred_check
    _
  $region63: #{forward.1} parent=0 // pred_check_branch
    %63 = sbr.rel (0) target = $region65
  $region64: #{forward.1} parent=0 // pred_region
    _
  $region65: #{forward.1} parent=0 // pred_fallthru
    _
  // Predicated region
  $region66: #{forward.1} parent=0 // pred_check
    _
  $region67: #{forward.1} parent=0 // pred_check_branch
    %65 = sbr.rel (0) target = $region69
  $region68: #{forward.1} parent=0 // pred_region
    _
  $region69: #{forward.1} parent=0 // pred_fallthru
    _
  // Predicated region
  $region70: #{forward.1} parent=0 // pred_check
    _
  $region71: #{forward.1} parent=0 // pred_check_branch
    %67 = sbr.rel (0) target = $region73
  $region72: #{forward.1} parent=0 // pred_region
    _
  $region73: #{forward.1} parent=0 // pred_fallthru
    _
  // Predicated region
  $region74: #{forward.1} parent=0 // pred_check
    _
  $region75: #{forward.1} parent=0 // pred_check_branch
    %69 = sbr.rel (0) target = $region77
  $region76: #{forward.1} parent=0 // pred_region
    _
  $region77: #{forward.1} parent=0 // pred_fallthru
    _
  // Predicated region
  $region78: #{forward.1} parent=0 // pred_check
    _
  $region79: #{forward.1} parent=0 // pred_check_branch
    %71 = sbr.rel (0) target = $region81
  $region80: #{forward.1} parent=0 // pred_region
    _
  $region81: #{forward.1} parent=0 // pred_fallthru
    _
  // Predicated region
  $region82: #{forward.1} parent=0 // pred_check
    _
  $region83: #{forward.1} parent=0 // pred_check_branch
    %73 = sbr.rel (0) target = $region85
  $region84: #{forward.1} parent=0 // pred_region
    _
  $region85: #{forward.1} parent=0 // pred_fallthru
    _
  // Predicated region
  $region86: #{forward.1} parent=0 // pred_check
    _
  $region87: #{forward.1} parent=0 // pred_check_branch
    %75 = sbr.rel (0) target = $region89
  $region88: #{forward.1} parent=0 // pred_region
    _
  $region89: #{forward.1} parent=0 // pred_fallthru
    _
  // Predicated region
  $region90: #{forward.1} parent=0 // pred_check
    _
  $region91: #{forward.1} parent=0 // pred_check_branch
    %77 = sbr.rel (0) target = $region93
  $region92: #{forward.1} parent=0 // pred_region
    _
  $region93: #{forward.1} parent=0 // pred_fallthru
    _
  // Predicated region
  $region94: #{forward.1} parent=0 // pred_check
    _
  $region95: #{forward.1} parent=0 // pred_check_branch
    %79 = sbr.rel (0) target = $region97
  $region96: #{forward.1} parent=0 // pred_region
    _
  $region97: #{forward.1} parent=0 // pred_fallthru
    _
  // Predicated region
  $region98: #{forward.1} parent=0 // pred_check
    _
  $region99: #{forward.1} parent=0 // pred_check_branch
    %81 = sbr.rel (0) target = $region101
  $region100: #{forward.1} parent=0 // pred_region
    _
  $region101: #{forward.1} parent=0 // pred_fallthru
    _
  %v82 = vld [vmem:[%s0] sm:$0xff]
  %v83 = vld [vmem:[%s0 + $0x8] sm:$0xff]
  %v84 = vld [vmem:[%s1] sm:$0xff]
  %v85 = vld [vmem:[%s1 + $0x8] sm:$0xff]
  %v86 = vld [vmem:[%s1 + $0x10] sm:$0xff]
  %v87 = vld [vmem:[%s1 + $0x18] sm:$0xff]
  %v88 = vld [vmem:[%s1 + $0x20] sm:$0xff]
  %v89 = vld [vmem:[%s1 + $0x28] sm:$0xff]
  %v90 = vld [vmem:[%s1 + $0x30] sm:$0xff]
  %v91 = vld [vmem:[%s1 + $0x38] sm:$0xff]
  %v92 = vld [vmem:[%s1 + $0x40] sm:$0xff]
  %v93 = vld [vmem:[%s1 + $0x48] sm:$0xff]
  %v94 = vld [vmem:[%s1 + $0x50] sm:$0xff]
  %v95 = vld [vmem:[%s1 + $0x58] sm:$0xff]
  %v96 = vld [vmem:[%s1 + $0x60] sm:$0xff]
  %v97 = vld [vmem:[%s1 + $0x68] sm:$0xff]
  %v98 = vld [vmem:[%s1 + $0x70] sm:$0xff]
  %v99 = vld [vmem:[%s1 + $0x78] sm:$0xff]
  %v100 = vld [vmem:[%s1 + $0x80] sm:$0xff]
  %v101 = vld [vmem:[%s1 + $0x88] sm:$0xff]
  %v102 = vld [vmem:[%s1 + $0x90] sm:$0xff]
  %v103 = vld [vmem:[%s1 + $0x98] sm:$0xff]
  %v104 = vld [vmem:[%s1 + $0xa0] sm:$0xff]
  %v105 = vld [vmem:[%s1 + $0xa8] sm:$0xff]
  %v106 = vld [vmem:[%s1 + $0xb0] sm:$0xff]
  %v107 = vld [vmem:[%s1 + $0xb8] sm:$0xff]
  %v108 = vld [vmem:[%s1 + $0xc0] sm:$0xff]
  %v109 = vld [vmem:[%s1 + $0xc8] sm:$0xff]
  %v110 = vld [vmem:[%s1 + $0xd0] sm:$0xff]
  %v111 = vld [vmem:[%s1 + $0xd8] sm:$0xff]
  %v112 = vld [vmem:[%s1 + $0xe0] sm:$0xff]
  %v113 = vld [vmem:[%s1 + $0xe8] sm:$0xff]
  %v114 = vld [vmem:[%s1 + $0xf0] sm:$0xff]
  %v115 = vld [vmem:[%s1 + $0xf8] sm:$0xff]
  %v116 = vld [vmem:[%s2] sm:$0x1]
  %v118 = vrot.slane %v82, 4
  %vm120 = vcmask 1043456
  %v121 = vsel %vm120, 0.0, %v118
  %v122 = vsel %vm120, %v118, 0.0
  %vm126 = vcmask 1046528
  %v127 = vrot.slane %v121, 1
  %v128 = vrot.slane %v122, 1
  %v129 = vsel %vm126, %v127, %v128
  %v130 = vrot.slane 0.0, 1
  %v131 = vsel %vm126, %v128, %v130
  %132 = vrot.lane.b32.xlu0 %v129, 32
  %v133 = vpop.permute.xlu0 %132
  %134 = vrot.lane.b32.xlu0 %v131, 32
  %v135 = vpop.permute.xlu0 %134
  %vm138 = vcmask 1045504
  %v139 = vrot.slane %v121, 2
  %v140 = vrot.slane %v122, 2
  %v141 = vsel %vm138, %v139, %v140
  %v142 = vrot.slane 0.0, 2
  %v143 = vsel %vm138, %v140, %v142
  %144 = vrot.lane.b32.xlu0 %v141, 64
  %v145 = vpop.permute.xlu0 %144
  %146 = vrot.lane.b32.xlu0 %v143, 64
  %v147 = vpop.permute.xlu0 %146
  %vm150 = vcmask 1044480
  %v151 = vrot.slane %v121, 3
  %v152 = vrot.slane %v122, 3
  %v153 = vsel %vm150, %v151, %v152
  %v154 = vrot.slane 0.0, 3
  %v155 = vsel %vm150, %v152, %v154
  %156 = vrot.lane.b32.xlu0 %v153, 96
  %v157 = vpop.permute.xlu0 %156
  %158 = vrot.lane.b32.xlu0 %v155, 96
  %v159 = vpop.permute.xlu0 %158
  %v162 = vrot.slane %v121, 4
  %v163 = vrot.slane %v122, 4
  %v164 = vsel %vm120, %v162, %v163
  %v165 = vrot.slane 0.0, 4
  %v166 = vsel %vm120, %v163, %v165
  %vm169 = vcmask 1042432
  %v170 = vrot.slane %v121, 5
  %v171 = vrot.slane %v122, 5
  %v172 = vsel %vm169, %v170, %v171
  %v173 = vrot.slane 0.0, 5
  %v174 = vsel %vm169, %v171, %v173
  %175 = vrot.lane.b32.xlu0 %v172, 32
  %v176 = vpop.permute.xlu0 %175
  %177 = vrot.lane.b32.xlu0 %v174, 32
  %v178 = vpop.permute.xlu0 %177
  %vm181 = vcmask 1041408
  %v182 = vrot.slane %v121, 6
  %v183 = vrot.slane %v122, 6
  %v184 = vsel %vm181, %v182, %v183
  %v185 = vrot.slane 0.0, 6
  %v186 = vsel %vm181, %v183, %v185
  %187 = vrot.lane.b32.xlu0 %v184, 64
  %v188 = vpop.permute.xlu0 %187
  %189 = vrot.lane.b32.xlu0 %v186, 64
  %v190 = vpop.permute.xlu0 %189
  %vm193 = vcmask 1040384
  %v194 = vrot.slane %v121, 7
  %v195 = vrot.slane %v122, 7
  %v196 = vsel %vm193, %v194, %v195
  %v197 = vrot.slane 0.0, 7
  %v198 = vsel %vm193, %v195, %v197
  %199 = vrot.lane.b32.xlu0 %v196, 96
  %v200 = vpop.permute.xlu0 %199
  %201 = vrot.lane.b32.xlu0 %v198, 96
  %v202 = vpop.permute.xlu0 %201
  %vm205 = vcmask 261120
  %v206 = vsel %vm205, %v121, %v133
  %v207 = vsel %vm205, %v122, %v135
  %vm208 = vcmask 523264
  %v209 = vsel %vm208, %v206, %v145
  %v210 = vsel %vm208, %v207, %v147
  %vm211 = vcmask 785408
  %v212 = vsel %vm211, %v209, %v157
  %v213 = vsel %vm211, %v210, %v159
  %v214 = vsel %vm205, %v164, %v176
  %v215 = vsel %vm205, %v166, %v178
  %v216 = vsel %vm208, %v214, %v188
  %v217 = vsel %vm208, %v215, %v190
  %v218 = vsel %vm211, %v216, %v200
  %v219 = vsel %vm211, %v217, %v202
  %v221 = vperm.slane %v116, 0
  %223 = vmatpush.msra.mxu0 %v99
  %224 = vmatpush.msra.mxu0 %v98
  %225 = vmatpush.msra.mxu0 %v97
  %226 = vmatpush.msra.mxu0 %v96
  %227 = vmatpush.msra.mxu0 %v95
  %228 = vmatpush.msra.mxu0 %v94
  %229 = vmatpush.msra.mxu0 %v93
  %230 = vmatpush.msra.mxu0 %v92
  %231 = vmatpush.msra.mxu0 %v91
  %232 = vmatpush.msra.mxu0 %v90
  %233 = vmatpush.msra.mxu0 %v89
  %234 = vmatpush.msra.mxu0 %v88
  %235 = vmatpush.msra.mxu0 %v87
  %236 = vmatpush.msra.mxu0 %v86
  %237 = vmatpush.msra.mxu0 %v85
  %238 = vmatpush.msra.mxu0 %v84
  %239 = vmatmul.f32.gmra.mxu0 %v212
  %v240 = vpop.f32.mrf.mxu0
  %v241 = vadd.f32 %v221, %v240
  %242 = vmatmul.f32.gmra.mxu0 %v213
  %v243 = vpop.f32.mrf.mxu0
  %v244 = vadd.f32 %v221, %v243
  %245 = vdwg.mxu0
  %246 = vmatpush.msra.mxu0 %v115
  %247 = vmatpush.msra.mxu0 %v114
  %248 = vmatpush.msra.mxu0 %v113
  %249 = vmatpush.msra.mxu0 %v112
  %250 = vmatpush.msra.mxu0 %v111
  %251 = vmatpush.msra.mxu0 %v110
  %252 = vmatpush.msra.mxu0 %v109
  %253 = vmatpush.msra.mxu0 %v108
  %254 = vmatpush.msra.mxu0 %v107
  %255 = vmatpush.msra.mxu0 %v106
  %256 = vmatpush.msra.mxu0 %v105
  %257 = vmatpush.msra.mxu0 %v104
  %258 = vmatpush.msra.mxu0 %v103
  %259 = vmatpush.msra.mxu0 %v102
  %260 = vmatpush.msra.mxu0 %v101
  %261 = vmatpush.msra.mxu0 %v100
  %262 = vmatmul.f32.gmra.mxu0 %v218
  %v263 = vpop.f32.mrf.mxu0
  %v264 = vadd.f32 %v241, %v263
  %265 = vmatmul.f32.gmra.mxu0 %v219
  %v266 = vpop.f32.mrf.mxu0
  %v267 = vadd.f32 %v244, %v266
  %268 = vdwg.mxu0
  %v269 = vmax.f32 %v264, 0.0
  %v270 = vmax.f32 %v267, 0.0
  %v272 = vrot.slane %v83, 4
  %v274 = vsel %vm120, 0.0, %v272
  %v275 = vsel %vm120, %v272, 0.0
  %v278 = vrot.slane %v274, 1
  %v279 = vrot.slane %v275, 1
  %v280 = vsel %vm126, %v278, %v279
  %v281 = vsel %vm126, %v279, %v130
  %282 = vrot.lane.b32.xlu0 %v280, 32
  %v283 = vpop.permute.xlu0 %282
  %284 = vrot.lane.b32.xlu0 %v281, 32
  %v285 = vpop.permute.xlu0 %284
  %v288 = vrot.slane %v274, 2
  %v289 = vrot.slane %v275, 2
  %v290 = vsel %vm138, %v288, %v289
  %v291 = vsel %vm138, %v289, %v142
  %292 = vrot.lane.b32.xlu0 %v290, 64
  %v293 = vpop.permute.xlu0 %292
  %294 = vrot.lane.b32.xlu0 %v291, 64
  %v295 = vpop.permute.xlu0 %294
  %v298 = vrot.slane %v274, 3
  %v299 = vrot.slane %v275, 3
  %v300 = vsel %vm150, %v298, %v299
  %v301 = vsel %vm150, %v299, %v154
  %302 = vrot.lane.b32.xlu0 %v300, 96
  %v303 = vpop.permute.xlu0 %302
  %304 = vrot.lane.b32.xlu0 %v301, 96
  %v305 = vpop.permute.xlu0 %304
  %v308 = vrot.slane %v274, 4
  %v309 = vrot.slane %v275, 4
  %v310 = vsel %vm120, %v308, %v309
  %v311 = vsel %vm120, %v309, %v165
  %v314 = vrot.slane %v274, 5
  %v315 = vrot.slane %v275, 5
  %v316 = vsel %vm169, %v314, %v315
  %v317 = vsel %vm169, %v315, %v173
  %318 = vrot.lane.b32.xlu0 %v316, 32
  %v319 = vpop.permute.xlu0 %318
  %320 = vrot.lane.b32.xlu0 %v317, 32
  %v321 = vpop.permute.xlu0 %320
  %v324 = vrot.slane %v274, 6
  %v325 = vrot.slane %v275, 6
  %v326 = vsel %vm181, %v324, %v325
  %v327 = vsel %vm181, %v325, %v185
  %328 = vrot.lane.b32.xlu0 %v326, 64
  %v329 = vpop.permute.xlu0 %328
  %330 = vrot.lane.b32.xlu0 %v327, 64
  %v331 = vpop.permute.xlu0 %330
  %v334 = vrot.slane %v274, 7
  %v335 = vrot.slane %v275, 7
  %v336 = vsel %vm193, %v334, %v335
  %v337 = vsel %vm193, %v335, %v197
  %338 = vrot.lane.b32.xlu0 %v336, 96
  %v339 = vpop.permute.xlu0 %338
  %340 = vrot.lane.b32.xlu0 %v337, 96
  %v341 = vpop.permute.xlu0 %340
  %v344 = vsel %vm205, %v274, %v283
  %v345 = vsel %vm205, %v275, %v285
  %v346 = vsel %vm208, %v344, %v293
  %v347 = vsel %vm208, %v345, %v295
  %v348 = vsel %vm211, %v346, %v303
  %v349 = vsel %vm211, %v347, %v305
  %v350 = vsel %vm205, %v310, %v319
  %v351 = vsel %vm205, %v311, %v321
  %v352 = vsel %vm208, %v350, %v329
  %v353 = vsel %vm208, %v351, %v331
  %v354 = vsel %vm211, %v352, %v339
  %v355 = vsel %vm211, %v353, %v341
  %356 = vmatpush.msra.mxu0 %v99
  %357 = vmatpush.msra.mxu0 %v98
  %358 = vmatpush.msra.mxu0 %v97
  %359 = vmatpush.msra.mxu0 %v96
  %360 = vmatpush.msra.mxu0 %v95
  %361 = vmatpush.msra.mxu0 %v94
  %362 = vmatpush.msra.mxu0 %v93
  %363 = vmatpush.msra.mxu0 %v92
  %364 = vmatpush.msra.mxu0 %v91
  %365 = vmatpush.msra.mxu0 %v90
  %366 = vmatpush.msra.mxu0 %v89
  %367 = vmatpush.msra.mxu0 %v88
  %368 = vmatpush.msra.mxu0 %v87
  %369 = vmatpush.msra.mxu0 %v86
  %370 = vmatpush.msra.mxu0 %v85
  %371 = vmatpush.msra.mxu0 %v84
  %372 = vmatmul.f32.gmra.mxu0 %v348
  %v373 = vpop.f32.mrf.mxu0
  %v374 = vadd.f32 %v221, %v373
  %375 = vmatmul.f32.gmra.mxu0 %v349
  %v376 = vpop.f32.mrf.mxu0
  %v377 = vadd.f32 %v221, %v376
  %378 = vdwg.mxu0
  %379 = vmatpush.msra.mxu0 %v115
  %380 = vmatpush.msra.mxu0 %v114
  %381 = vmatpush.msra.mxu0 %v113
  %382 = vmatpush.msra.mxu0 %v112
  %383 = vmatpush.msra.mxu0 %v111
  %384 = vmatpush.msra.mxu0 %v110
  %385 = vmatpush.msra.mxu0 %v109
  %386 = vmatpush.msra.mxu0 %v108
  %387 = vmatpush.msra.mxu0 %v107
  %388 = vmatpush.msra.mxu0 %v106
  %389 = vmatpush.msra.mxu0 %v105
  %390 = vmatpush.msra.mxu0 %v104
  %391 = vmatpush.msra.mxu0 %v103
  %392 = vmatpush.msra.mxu0 %v102
  %393 = vmatpush.msra.mxu0 %v101
  %394 = vmatpush.msra.mxu0 %v100
  %395 = vmatmul.f32.gmra.mxu0 %v354
  %v396 = vpop.f32.mrf.mxu0
  %v397 = vadd.f32 %v374, %v396
  %398 = vmatmul.f32.gmra.mxu0 %v355
  %v399 = vpop.f32.mrf.mxu0
  %v400 = vadd.f32 %v377, %v399
  %401 = vdwg.mxu0
  %v402 = vmax.f32 %v397, 0.0
  %v403 = vmax.f32 %v400, 0.0
  %v404 = vlaneseq
  %v405 = vshrl.u32 %v404, 7
  %v406 = vadd.s32 %v405, 8
  %v407 = vadd.s32 %v405, 16
  %v408 = vadd.s32 %v405, 24
  %vm409 = vcmp.lt.s32.totalorder %v405, 0
  %v410 = vsub.s32 0, %v405
  %v411 = vsel %vm409, %v410, %v405
  %v412 = vshrl.u32 %v411, 4
  %v413 = vand.u32 %v411, 15
  %v414 = vsub.s32 0, %v413
  %v415 = vsel %vm409, %v414, %v413
  %vm416 = vcmp.lt.s32.totalorder %v406, 0
  %v417 = vsub.s32 0, %v406
  %v418 = vsel %vm416, %v417, %v406
  %v419 = vshrl.u32 %v418, 4
  %v420 = vand.u32 %v418, 15
  %v421 = vsub.s32 0, %v420
  %v422 = vsel %vm416, %v421, %v420
  %vm423 = vcmp.lt.s32.totalorder %v407, 0
  %v424 = vsub.s32 0, %v407
  %v425 = vsel %vm423, %v424, %v407
  %v426 = vshrl.u32 %v425, 4
  %v427 = vand.u32 %v425, 15
  %v428 = vsub.s32 0, %v427
  %v429 = vsel %vm423, %v428, %v427
  %vm430 = vcmp.lt.s32.totalorder %v408, 0
  %v431 = vsub.s32 0, %v408
  %v432 = vsel %vm430, %v431, %v408
  %v433 = vshrl.u32 %v432, 4
  %v434 = vand.u32 %v432, 15
  %v435 = vsub.s32 0, %v434
  %v436 = vsel %vm430, %v435, %v434
  %vm437 = vcmp.ne.s32.totalorder %v415, 0
  %vm438 = vcmp.ne.s32.totalorder %v422, 0
  %vm439 = vcmp.ne.s32.totalorder %v429, 0
  %vm440 = vcmp.ne.s32.totalorder %v436, 0
  %vm441 = vcmp.lt.s32.totalorder %v415, 0
  %vm442 = vcmp.lt.s32.totalorder %v422, 0
  %vm443 = vcmp.lt.s32.totalorder %v429, 0
  %vm444 = vcmp.lt.s32.totalorder %v436, 0
  %vm445 = vmand %vm441, %vm437
  %vm446 = vmand %vm442, %vm438
  %vm447 = vmand %vm443, %vm439
  %vm448 = vmand %vm444, %vm440
  %v449 = vadd.s32 %v415, 16
  %v450 = vadd.s32 %v422, 16
  %v451 = vadd.s32 %v429, 16
  %v452 = vadd.s32 %v436, 16
  %v453 = vsel %vm445, %v449, %v415
  %v454 = vsel %vm446, %v450, %v422
  %v455 = vsel %vm447, %v451, %v429
  %v456 = vsel %vm448, %v452, %v436
  %vm457 = vcmp.lt.s32.totalorder %v453, 9
  %vm458 = vcmp.lt.s32.totalorder %v454, 9
  %vm459 = vcmp.lt.s32.totalorder %v455, 9
  %vm460 = vcmp.lt.s32.totalorder %v456, 9
  %v461 = vsel %vm457, %v269, 0.0
  %v462 = vsel %vm458, %v270, 0.0
  %v463 = vsel %vm459, %v402, 0.0
  %v464 = vsel %vm460, %v403, 0.0
  %v465 = vld [vmem:[%s3] sm:$0xff]
  %v466 = vld [vmem:[%s3 + $0x8] sm:$0xff]
  %v467 = vld [vmem:[%s4] sm:$0x1]
  %v469 = vperm.slane %v467, 0
  %v471 = vmul.f32 %v461, %v469
  %v472 = vmul.f32 %v462, %v469
  %v473 = vmul.f32 %v463, %v469
  %v474 = vmul.f32 %v464, %v469
  %v475 = vperm.slane %v465, 0
  %v476 = vmul.f32 %v461, %v475
  %v477 = vmul.f32 %v462, %v475
  %v478 = vmul.f32 %v463, %v475
  %v479 = vmul.f32 %v464, %v475
  %v480 = vadd.f32 %v471, %v476
  %v481 = vadd.f32 %v472, %v477
  %v482 = vadd.f32 %v473, %v478
  %v483 = vadd.f32 %v474, %v479
  %v488 = vrot.slane %v461, 7
  %v489 = vrot.slane %v462, 7
  %v490 = vsel %vm193, %v488, %v489
  %v491 = vrot.slane %v463, 7
  %v492 = vsel %vm193, %v489, %v491
  %v493 = vrot.slane %v464, 7
  %v494 = vsel %vm193, %v491, %v493
  %v499 = vsel %vm193, 0.0, %v488
  %vm500 = vcmp.ge.s32.totalorder %v453, 1
  %vm501 = vcmp.ge.s32.totalorder %v454, 1
  %vm502 = vcmp.ge.s32.totalorder %v455, 1
  %vm503 = vcmp.ge.s32.totalorder %v456, 1
  %v504 = vsel %vm500, %v499, 0.0
  %v505 = vsel %vm501, %v490, 0.0
  %v506 = vsel %vm502, %v492, 0.0
  %v507 = vsel %vm503, %v494, 0.0
  %v508 = vperm.slane %v465, 1
  %v509 = vmul.f32 %v504, %v508
  %v510 = vmul.f32 %v505, %v508
  %v511 = vmul.f32 %v506, %v508
  %v512 = vmul.f32 %v507, %v508
  %v513 = vadd.f32 %v480, %v509
  %v514 = vadd.f32 %v481, %v510
  %v515 = vadd.f32 %v482, %v511
  %v516 = vadd.f32 %v483, %v512
  %v517 = vrot.slane %v461, 6
  %v518 = vrot.slane %v462, 6
  %v519 = vsel %vm181, %v517, %v518
  %v520 = vrot.slane %v463, 6
  %v521 = vsel %vm181, %v518, %v520
  %v522 = vrot.slane %v464, 6
  %v523 = vsel %vm181, %v520, %v522
  %v528 = vsel %vm181, 0.0, %v517
  %vm529 = vcmp.ge.s32.totalorder %v453, 2
  %vm530 = vcmp.ge.s32.totalorder %v454, 2
  %vm531 = vcmp.ge.s32.totalorder %v455, 2
  %vm532 = vcmp.ge.s32.totalorder %v456, 2
  %v533 = vsel %vm529, %v528, 0.0
  %v534 = vsel %vm530, %v519, 0.0
  %v535 = vsel %vm531, %v521, 0.0
  %v536 = vsel %vm532, %v523, 0.0
  %v537 = vperm.slane %v465, 2
  %v538 = vmul.f32 %v533, %v537
  %v539 = vmul.f32 %v534, %v537
  %v540 = vmul.f32 %v535, %v537
  %v541 = vmul.f32 %v536, %v537
  %v542 = vadd.f32 %v513, %v538
  %v543 = vadd.f32 %v514, %v539
  %v544 = vadd.f32 %v515, %v540
  %v545 = vadd.f32 %v516, %v541
  %v546 = vrot.slane %v461, 5
  %v547 = vrot.slane %v462, 5
  %v548 = vsel %vm169, %v546, %v547
  %v549 = vrot.slane %v463, 5
  %v550 = vsel %vm169, %v547, %v549
  %v551 = vrot.slane %v464, 5
  %v552 = vsel %vm169, %v549, %v551
  %v557 = vsel %vm169, 0.0, %v546
  %vm558 = vcmp.ge.s32.totalorder %v453, 3
  %vm559 = vcmp.ge.s32.totalorder %v454, 3
  %vm560 = vcmp.ge.s32.totalorder %v455, 3
  %vm561 = vcmp.ge.s32.totalorder %v456, 3
  %v562 = vsel %vm558, %v557, 0.0
  %v563 = vsel %vm559, %v548, 0.0
  %v564 = vsel %vm560, %v550, 0.0
  %v565 = vsel %vm561, %v552, 0.0
  %v566 = vperm.slane %v465, 3
  %v567 = vmul.f32 %v562, %v566
  %v568 = vmul.f32 %v563, %v566
  %v569 = vmul.f32 %v564, %v566
  %v570 = vmul.f32 %v565, %v566
  %v571 = vadd.f32 %v542, %v567
  %v572 = vadd.f32 %v543, %v568
  %v573 = vadd.f32 %v544, %v569
  %v574 = vadd.f32 %v545, %v570
  %v575 = vrot.slane %v461, 4
  %v576 = vrot.slane %v462, 4
  %v577 = vsel %vm120, %v575, %v576
  %v578 = vrot.slane %v463, 4
  %v579 = vsel %vm120, %v576, %v578
  %v580 = vrot.slane %v464, 4
  %v581 = vsel %vm120, %v578, %v580
  %v586 = vsel %vm120, 0.0, %v575
  %vm587 = vcmp.ge.s32.totalorder %v453, 4
  %vm588 = vcmp.ge.s32.totalorder %v454, 4
  %vm589 = vcmp.ge.s32.totalorder %v455, 4
  %vm590 = vcmp.ge.s32.totalorder %v456, 4
  %v591 = vsel %vm587, %v586, 0.0
  %v592 = vsel %vm588, %v577, 0.0
  %v593 = vsel %vm589, %v579, 0.0
  %v594 = vsel %vm590, %v581, 0.0
  %v595 = vperm.slane %v465, 4
  %v596 = vmul.f32 %v591, %v595
  %v597 = vmul.f32 %v592, %v595
  %v598 = vmul.f32 %v593, %v595
  %v599 = vmul.f32 %v594, %v595
  %v600 = vadd.f32 %v571, %v596
  %v601 = vadd.f32 %v572, %v597
  %v602 = vadd.f32 %v573, %v598
  %v603 = vadd.f32 %v574, %v599
  %v604 = vrot.slane %v461, 3
  %v605 = vrot.slane %v462, 3
  %v606 = vsel %vm150, %v604, %v605
  %v607 = vrot.slane %v463, 3
  %v608 = vsel %vm150, %v605, %v607
  %v609 = vrot.slane %v464, 3
  %v610 = vsel %vm150, %v607, %v609
  %v615 = vsel %vm150, 0.0, %v604
  %vm616 = vcmp.ge.s32.totalorder %v453, 5
  %vm617 = vcmp.ge.s32.totalorder %v454, 5
  %vm618 = vcmp.ge.s32.totalorder %v455, 5
  %vm619 = vcmp.ge.s32.totalorder %v456, 5
  %v620 = vsel %vm616, %v615, 0.0
  %v621 = vsel %vm617, %v606, 0.0
  %v622 = vsel %vm618, %v608, 0.0
  %v623 = vsel %vm619, %v610, 0.0
  %v624 = vperm.slane %v465, 5
  %v625 = vmul.f32 %v620, %v624
  %v626 = vmul.f32 %v621, %v624
  %v627 = vmul.f32 %v622, %v624
  %v628 = vmul.f32 %v623, %v624
  %v629 = vadd.f32 %v600, %v625
  %v630 = vadd.f32 %v601, %v626
  %v631 = vadd.f32 %v602, %v627
  %v632 = vadd.f32 %v603, %v628
  %v633 = vrot.slane %v461, 2
  %v634 = vrot.slane %v462, 2
  %v635 = vsel %vm138, %v633, %v634
  %v636 = vrot.slane %v463, 2
  %v637 = vsel %vm138, %v634, %v636
  %v638 = vrot.slane %v464, 2
  %v639 = vsel %vm138, %v636, %v638
  %v644 = vsel %vm138, 0.0, %v633
  %vm645 = vcmp.ge.s32.totalorder %v453, 6
  %vm646 = vcmp.ge.s32.totalorder %v454, 6
  %vm647 = vcmp.ge.s32.totalorder %v455, 6
  %vm648 = vcmp.ge.s32.totalorder %v456, 6
  %v649 = vsel %vm645, %v644, 0.0
  %v650 = vsel %vm646, %v635, 0.0
  %v651 = vsel %vm647, %v637, 0.0
  %v652 = vsel %vm648, %v639, 0.0
  %v653 = vperm.slane %v465, 6
  %v654 = vmul.f32 %v649, %v653
  %v655 = vmul.f32 %v650, %v653
  %v656 = vmul.f32 %v651, %v653
  %v657 = vmul.f32 %v652, %v653
  %v658 = vadd.f32 %v629, %v654
  %v659 = vadd.f32 %v630, %v655
  %v660 = vadd.f32 %v631, %v656
  %v661 = vadd.f32 %v632, %v657
  %v662 = vrot.slane %v461, 1
  %v663 = vrot.slane %v462, 1
  %v664 = vsel %vm126, %v662, %v663
  %v665 = vrot.slane %v463, 1
  %v666 = vsel %vm126, %v663, %v665
  %v667 = vrot.slane %v464, 1
  %v668 = vsel %vm126, %v665, %v667
  %v673 = vsel %vm126, 0.0, %v662
  %vm674 = vcmp.ge.s32.totalorder %v453, 7
  %vm675 = vcmp.ge.s32.totalorder %v454, 7
  %vm676 = vcmp.ge.s32.totalorder %v455, 7
  %vm677 = vcmp.ge.s32.totalorder %v456, 7
  %v678 = vsel %vm674, %v673, 0.0
  %v679 = vsel %vm675, %v664, 0.0
  %v680 = vsel %vm676, %v666, 0.0
  %v681 = vsel %vm677, %v668, 0.0
  %v682 = vperm.slane %v465, 7
  %v683 = vmul.f32 %v678, %v682
  %v684 = vmul.f32 %v679, %v682
  %v685 = vmul.f32 %v680, %v682
  %v686 = vmul.f32 %v681, %v682
  %v687 = vadd.f32 %v658, %v683
  %v688 = vadd.f32 %v659, %v684
  %v689 = vadd.f32 %v660, %v685
  %v690 = vadd.f32 %v661, %v686
  %vm691 = vcmp.ge.s32.totalorder %v454, 8
  %vm692 = vcmp.ge.s32.totalorder %v455, 8
  %vm693 = vcmp.ge.s32.totalorder %v456, 8
  %v694 = vsel %vm691, %v461, 0.0
  %v695 = vsel %vm692, %v462, 0.0
  %v696 = vsel %vm693, %v463, 0.0
  %v697 = vperm.slane %v466, 0
  %v698 = vmul.f32 %v697, 0.0
  %v699 = vmul.f32 %v694, %v697
  %v700 = vmul.f32 %v695, %v697
  %v701 = vmul.f32 %v696, %v697
  %v702 = vadd.f32 %v687, %v698
  %v703 = vadd.f32 %v688, %v699
  %v704 = vadd.f32 %v689, %v700
  %v705 = vadd.f32 %v690, %v701
  %vm706 = vcmp.ge.s32.totalorder %v454, 9
  %vm707 = vcmp.ge.s32.totalorder %v455, 9
  %vm708 = vcmp.ge.s32.totalorder %v456, 9
  %v709 = vsel %vm706, %v499, 0.0
  %v710 = vsel %vm707, %v490, 0.0
  %v711 = vsel %vm708, %v492, 0.0
  %v712 = vperm.slane %v466, 1
  %v713 = vmul.f32 %v712, 0.0
  %v714 = vmul.f32 %v709, %v712
  %v715 = vmul.f32 %v710, %v712
  %v716 = vmul.f32 %v711, %v712
  %v717 = vadd.f32 %v702, %v713
  %v718 = vadd.f32 %v703, %v714
  %v719 = vadd.f32 %v704, %v715
  %v720 = vadd.f32 %v705, %v716
  %vm721 = vcmp.ge.s32.totalorder %v454, 10
  %vm722 = vcmp.ge.s32.totalorder %v455, 10
  %vm723 = vcmp.ge.s32.totalorder %v456, 10
  %v724 = vsel %vm721, %v528, 0.0
  %v725 = vsel %vm722, %v519, 0.0
  %v726 = vsel %vm723, %v521, 0.0
  %v727 = vperm.slane %v466, 2
  %v728 = vmul.f32 %v727, 0.0
  %v729 = vmul.f32 %v724, %v727
  %v730 = vmul.f32 %v725, %v727
  %v731 = vmul.f32 %v726, %v727
  %v732 = vadd.f32 %v717, %v728
  %v733 = vadd.f32 %v718, %v729
  %v734 = vadd.f32 %v719, %v730
  %v735 = vadd.f32 %v720, %v731
  %vm736 = vcmp.ge.s32.totalorder %v454, 11
  %vm737 = vcmp.ge.s32.totalorder %v455, 11
  %vm738 = vcmp.ge.s32.totalorder %v456, 11
  %v739 = vsel %vm736, %v557, 0.0
  %v740 = vsel %vm737, %v548, 0.0
  %v741 = vsel %vm738, %v550, 0.0
  %v742 = vperm.slane %v466, 3
  %v743 = vmul.f32 %v742, 0.0
  %v744 = vmul.f32 %v739, %v742
  %v745 = vmul.f32 %v740, %v742
  %v746 = vmul.f32 %v741, %v742
  %v747 = vadd.f32 %v732, %v743
  %v748 = vadd.f32 %v733, %v744
  %v749 = vadd.f32 %v734, %v745
  %v750 = vadd.f32 %v735, %v746
  %vm751 = vcmp.ge.s32.totalorder %v454, 12
  %vm752 = vcmp.ge.s32.totalorder %v455, 12
  %vm753 = vcmp.ge.s32.totalorder %v456, 12
  %v754 = vsel %vm751, %v586, 0.0
  %v755 = vsel %vm752, %v577, 0.0
  %v756 = vsel %vm753, %v579, 0.0
  %v757 = vperm.slane %v466, 4
  %v758 = vmul.f32 %v757, 0.0
  %v759 = vmul.f32 %v754, %v757
  %v760 = vmul.f32 %v755, %v757
  %v761 = vmul.f32 %v756, %v757
  %v762 = vadd.f32 %v747, %v758
  %v763 = vadd.f32 %v748, %v759
  %v764 = vadd.f32 %v749, %v760
  %v765 = vadd.f32 %v750, %v761
  %vm766 = vcmp.ge.s32.totalorder %v454, 13
  %vm767 = vcmp.ge.s32.totalorder %v455, 13
  %vm768 = vcmp.ge.s32.totalorder %v456, 13
  %v769 = vsel %vm766, %v615, 0.0
  %v770 = vsel %vm767, %v606, 0.0
  %v771 = vsel %vm768, %v608, 0.0
  %v772 = vperm.slane %v466, 5
  %v773 = vmul.f32 %v772, 0.0
  %v774 = vmul.f32 %v769, %v772
  %v775 = vmul.f32 %v770, %v772
  %v776 = vmul.f32 %v771, %v772
  %v777 = vadd.f32 %v762, %v773
  %v778 = vadd.f32 %v763, %v774
  %v779 = vadd.f32 %v764, %v775
  %v780 = vadd.f32 %v765, %v776
  %vm781 = vcmp.ge.s32.totalorder %v454, 14
  %vm782 = vcmp.ge.s32.totalorder %v455, 14
  %vm783 = vcmp.ge.s32.totalorder %v456, 14
  %v784 = vsel %vm781, %v644, 0.0
  %v785 = vsel %vm782, %v635, 0.0
  %v786 = vsel %vm783, %v637, 0.0
  %v787 = vperm.slane %v466, 6
  %v788 = vmul.f32 %v787, 0.0
  %v789 = vmul.f32 %v784, %v787
  %v790 = vmul.f32 %v785, %v787
  %v791 = vmul.f32 %v786, %v787
  %v792 = vadd.f32 %v777, %v788
  %v793 = vadd.f32 %v778, %v789
  %v794 = vadd.f32 %v779, %v790
  %v795 = vadd.f32 %v780, %v791
  %vm796 = vcmp.ge.s32.totalorder %v454, 15
  %vm797 = vcmp.ge.s32.totalorder %v455, 15
  %vm798 = vcmp.ge.s32.totalorder %v456, 15
  %v799 = vsel %vm796, %v673, 0.0
  %v800 = vsel %vm797, %v664, 0.0
  %v801 = vsel %vm798, %v666, 0.0
  %v802 = vperm.slane %v466, 7
  %v803 = vmul.f32 %v802, 0.0
  %v804 = vmul.f32 %v799, %v802
  %v805 = vmul.f32 %v800, %v802
  %v806 = vmul.f32 %v801, %v802
  %v807 = vadd.f32 %v792, %v803
  %v808 = vadd.f32 %v793, %v804
  %v809 = vadd.f32 %v794, %v805
  %v810 = vadd.f32 %v795, %v806
  %v811 = vld [vmem:[%s5] sm:$0xff]
  %v812 = vld [vmem:[%s5 + $0x8] sm:$0xff]
  %v813 = vld [vmem:[%s5 + $0x10] sm:$0xff]
  %v814 = vld [vmem:[%s5 + $0x18] sm:$0xff]
  %v815 = vld [vmem:[%s6] sm:$0x1]
  %v817 = vperm.slane %v815, 0
  %v820 = vsel %vm205, %v807, 0
  %v823 = vsel %vm205, %v808, 0
  %v826 = vsel %vm205, %v809, 0
  %v829 = vsel %vm205, %v810, 0
  %831 = vmatpush.msra.mxu0 0.0
  %832 = vmatpush.msra.mxu0 0.0
  %833 = vmatpush.msra.mxu0 0.0
  %834 = vmatpush.msra.mxu0 0.0
  %835 = vmatpush.msra.mxu0 0.0
  %836 = vmatpush.msra.mxu0 0.0
  %837 = vmatpush.msra.mxu0 0.0
  %838 = vmatpush.msra.mxu0 0.0
  %839 = vmatpush.msra.mxu0 0.0
  %840 = vmatpush.msra.mxu0 0.0
  %841 = vmatpush.msra.mxu0 0.0
  %842 = vmatpush.msra.mxu0 0.0
  %843 = vmatpush.msra.mxu0 %v814
  %844 = vmatpush.msra.mxu0 %v813
  %845 = vmatpush.msra.mxu0 %v812
  %846 = vmatpush.msra.mxu0 %v811
  %847 = vmatmul.f32.gmra.mxu0 %v820
  %v848 = vpop.f32.mrf.mxu0
  %v849 = vadd.f32 %v817, %v848
  %850 = vmatmul.f32.gmra.mxu0 %v823
  %v851 = vpop.f32.mrf.mxu0
  %v852 = vadd.f32 %v817, %v851
  %853 = vmatmul.f32.gmra.mxu0 %v826
  %v854 = vpop.f32.mrf.mxu0
  %v855 = vadd.f32 %v817, %v854
  %856 = vmatmul.f32.gmra.mxu0 %v829
  %v857 = vpop.f32.mrf.mxu0
  %v858 = vadd.f32 %v817, %v857
  %859 = vdwg.mxu0
  %v860 = vld [vmem:[%s7] sm:$0xff]
  %v861 = vld [vmem:[%s7 + $0x8] sm:$0xff]
  %v862 = vld [vmem:[%s7 + $0x10] sm:$0xff]
  %v863 = vld [vmem:[%s7 + $0x18] sm:$0xff]
  %v864 = vld [vmem:[%s8] sm:$0x1]
  %v866 = vperm.slane %v864, 0
  %868 = vmatpush.msra.mxu0 0.0
  %869 = vmatpush.msra.mxu0 0.0
  %870 = vmatpush.msra.mxu0 0.0
  %871 = vmatpush.msra.mxu0 0.0
  %872 = vmatpush.msra.mxu0 0.0
  %873 = vmatpush.msra.mxu0 0.0
  %874 = vmatpush.msra.mxu0 0.0
  %875 = vmatpush.msra.mxu0 0.0
  %876 = vmatpush.msra.mxu0 0.0
  %877 = vmatpush.msra.mxu0 0.0
  %878 = vmatpush.msra.mxu0 0.0
  %879 = vmatpush.msra.mxu0 0.0
  %880 = vmatpush.msra.mxu0 %v863
  %881 = vmatpush.msra.mxu0 %v862
  %882 = vmatpush.msra.mxu0 %v861
  %883 = vmatpush.msra.mxu0 %v860
  %884 = vmatmul.f32.gmra.mxu0 %v820
  %v885 = vpop.f32.mrf.mxu0
  %v886 = vadd.f32 %v866, %v885
  %887 = vmatmul.f32.gmra.mxu0 %v823
  %v888 = vpop.f32.mrf.mxu0
  %v889 = vadd.f32 %v866, %v888
  %890 = vmatmul.f32.gmra.mxu0 %v826
  %v891 = vpop.f32.mrf.mxu0
  %v892 = vadd.f32 %v866, %v891
  %893 = vmatmul.f32.gmra.mxu0 %v829
  %v894 = vpop.f32.mrf.mxu0
  %v895 = vadd.f32 %v866, %v894
  %896 = vdwg.mxu0
  %v897 = vld [vmem:[%s9] sm:$0xff]
  %v898 = vld [vmem:[%s9 + $0x8] sm:$0xff]
  %v899 = vld [vmem:[%s9 + $0x10] sm:$0xff]
  %v900 = vld [vmem:[%s9 + $0x18] sm:$0xff]
  %v901 = vld [vmem:[%s10] sm:$0x1]
  %v903 = vperm.slane %v901, 0
  %905 = vmatpush.msra.mxu0 0.0
  %906 = vmatpush.msra.mxu0 0.0
  %907 = vmatpush.msra.mxu0 0.0
  %908 = vmatpush.msra.mxu0 0.0
  %909 = vmatpush.msra.mxu0 0.0
  %910 = vmatpush.msra.mxu0 0.0
  %911 = vmatpush.msra.mxu0 0.0
  %912 = vmatpush.msra.mxu0 0.0
  %913 = vmatpush.msra.mxu0 0.0
  %914 = vmatpush.msra.mxu0 0.0
  %915 = vmatpush.msra.mxu0 0.0
  %916 = vmatpush.msra.mxu0 0.0
  %917 = vmatpush.msra.mxu0 %v900
  %918 = vmatpush.msra.mxu0 %v899
  %919 = vmatpush.msra.mxu0 %v898
  %920 = vmatpush.msra.mxu0 %v897
  %921 = vmatmul.f32.gmra.mxu0 %v820
  %v922 = vpop.f32.mrf.mxu0
  %v923 = vadd.f32 %v903, %v922
  %924 = vmatmul.f32.gmra.mxu0 %v823
  %v925 = vpop.f32.mrf.mxu0
  %v926 = vadd.f32 %v903, %v925
  %927 = vmatmul.f32.gmra.mxu0 %v826
  %v928 = vpop.f32.mrf.mxu0
  %v929 = vadd.f32 %v903, %v928
  %930 = vmatmul.f32.gmra.mxu0 %v829
  %v931 = vpop.f32.mrf.mxu0
  %v932 = vadd.f32 %v903, %v931
  %933 = vdwg.mxu0
  %vm934 = vcmask 64512
  %v936 = vsel %vm934, %v849, 0
  %v939 = vsel %vm934, %v852, 0
  %v942 = vsel %vm934, %v886, 0
  %v945 = vsel %vm934, %v889, 0
  %947 = vmatpush.xpose.msra.mxu0 0.0
  %948 = vmatpush.xpose.msra.mxu0 0.0
  %949 = vmatpush.xpose.msra.mxu0 0.0
  %950 = vmatpush.xpose.msra.mxu0 0.0
  %951 = vmatpush.xpose.msra.mxu0 0.0
  %952 = vmatpush.xpose.msra.mxu0 0.0
  %953 = vmatpush.xpose.msra.mxu0 0.0
  %954 = vmatpush.xpose.msra.mxu0 0.0
  %955 = vmatpush.xpose.msra.mxu0 0.0
  %956 = vmatpush.xpose.msra.mxu0 0.0
  %957 = vmatpush.xpose.msra.mxu0 0.0
  %958 = vmatpush.xpose.msra.mxu0 0.0
  %959 = vmatpush.xpose.msra.mxu0 0.0
  %960 = vmatpush.xpose.msra.mxu0 0.0
  %961 = vmatpush.xpose.msra.mxu0 %v945
  %962 = vmatpush.xpose.msra.mxu0 %v942
  %963 = vmatmul.f32.gmra.mxu0 %v936
  %v964 = vpop.f32.mrf.mxu0
  %v965 = vadd.f32 0.0, %v964
  %966 = vmatmul.f32.gmra.mxu0 %v939
  %v967 = vpop.f32.mrf.mxu0
  %v968 = vadd.f32 0.0, %v967
  %969 = vdwg.mxu0
  %v970 = vmul.f32 %v965, 0.35355338
  %v971 = vmul.f32 %v968, 0.35355338
  %vm972 = vcmask 72704
  %v973 = vsel %vm972, %v970, -inf
  %974 = vmax.xlane.f32.xlu0 %v973
  %v975 = vpop.xlane.xlu0 %974
  %v976 = vsel %vm972, %v971, -inf
  %977 = vmax.xlane.f32.xlu0 %v976
  %v978 = vpop.xlane.xlu0 %977
  %v979 = vsub.f32 %v970, %v975
  %v980 = vsub.f32 %v971, %v978
  %v981 = vmul.f32 %v979, 1.442695
  %v982 = vpow.pop %v981
  %v983 = vmul.f32 %v980, 1.442695
  %v984 = vpow.pop %v983
  %v985 = vsel %vm972, %v982, 0.0
  %986 = vadd.xlane.f32.xlu0 %v985
  %v987 = vpop.xlane.xlu0 %986
  %v988 = vsel %vm972, %v984, 0.0
  %989 = vadd.xlane.f32.xlu0 %v988
  %v990 = vpop.xlane.xlu0 %989
  %v991 = vrcp.pop %v987
  %v992 = vrcp.pop %v990
  %v993 = vmul.f32 %v982, %v991
  %v994 = vmul.f32 %v984, %v992
  %v996 = vsel %vm972, %v993, 0
  %v999 = vsel %vm972, %v994, 0
  %v1002 = vsel %vm193, %v926, 0
  %1004 = vmatpush.msra.mxu0 0.0
  %1005 = vmatpush.msra.mxu0 0.0
  %1006 = vmatpush.msra.mxu0 0.0
  %1007 = vmatpush.msra.mxu0 0.0
  %1008 = vmatpush.msra.mxu0 0.0
  %1009 = vmatpush.msra.mxu0 0.0
  %1010 = vmatpush.msra.mxu0 0.0
  %1011 = vmatpush.msra.mxu0 0.0
  %1012 = vmatpush.msra.mxu0 0.0
  %1013 = vmatpush.msra.mxu0 0.0
  %1014 = vmatpush.msra.mxu0 0.0
  %1015 = vmatpush.msra.mxu0 0.0
  %1016 = vmatpush.msra.mxu0 0.0
  %1017 = vmatpush.msra.mxu0 0.0
  %1018 = vmatpush.msra.mxu0 %v1002
  %1019 = vmatpush.msra.mxu0 %v923
  %1020 = vmatmul.f32.gmra.mxu0 %v996
  %v1021 = vpop.f32.mrf.mxu0
  %v1022 = vadd.f32 0.0, %v1021
  %1023 = vmatmul.f32.gmra.mxu0 %v999
  %v1024 = vpop.f32.mrf.mxu0
  %v1025 = vadd.f32 0.0, %v1024
  %1026 = vdwg.mxu0
  %1027 = vrot.lane.b32.xlu0 %v849, 120
  %v1028 = vpop.permute.xlu0 %1027
  %1029 = vrot.lane.b32.xlu0 %v852, 120
  %v1030 = vpop.permute.xlu0 %1029
  %1031 = vrot.lane.b32.xlu0 %v886, 120
  %v1032 = vpop.permute.xlu0 %1031
  %1033 = vrot.lane.b32.xlu0 %v889, 120
  %v1034 = vpop.permute.xlu0 %1033
  %v1035 = vsel %vm934, %v1028, 0
  %v1037 = vsel %vm934, %v1030, 0
  %v1039 = vsel %vm934, %v1032, 0
  %v1041 = vsel %vm934, %v1034, 0
  %1043 = vmatpush.xpose.msra.mxu0 0.0
  %1044 = vmatpush.xpose.msra.mxu0 0.0
  %1045 = vmatpush.xpose.msra.mxu0 0.0
  %1046 = vmatpush.xpose.msra.mxu0 0.0
  %1047 = vmatpush.xpose.msra.mxu0 0.0
  %1048 = vmatpush.xpose.msra.mxu0 0.0
  %1049 = vmatpush.xpose.msra.mxu0 0.0
  %1050 = vmatpush.xpose.msra.mxu0 0.0
  %1051 = vmatpush.xpose.msra.mxu0 0.0
  %1052 = vmatpush.xpose.msra.mxu0 0.0
  %1053 = vmatpush.xpose.msra.mxu0 0.0
  %1054 = vmatpush.xpose.msra.mxu0 0.0
  %1055 = vmatpush.xpose.msra.mxu0 0.0
  %1056 = vmatpush.xpose.msra.mxu0 0.0
  %1057 = vmatpush.xpose.msra.mxu0 %v1041
  %1058 = vmatpush.xpose.msra.mxu0 %v1039
  %1059 = vmatmul.f32.gmra.mxu0 %v1035
  %v1060 = vpop.f32.mrf.mxu0
  %v1061 = vadd.f32 0.0, %v1060
  %1062 = vmatmul.f32.gmra.mxu0 %v1037
  %v1063 = vpop.f32.mrf.mxu0
  %v1064 = vadd.f32 0.0, %v1063
  %1065 = vdwg.mxu0
  %v1066 = vmul.f32 %v1061, 0.35355338
  %v1067 = vmul.f32 %v1064, 0.35355338
  %v1068 = vsel %vm972, %v1066, -inf
  %1069 = vmax.xlane.f32.xlu0 %v1068
  %v1070 = vpop.xlane.xlu0 %1069
  %v1071 = vsel %vm972, %v1067, -inf
  %1072 = vmax.xlane.f32.xlu0 %v1071
  %v1073 = vpop.xlane.xlu0 %1072
  %v1074 = vsub.f32 %v1066, %v1070
  %v1075 = vsub.f32 %v1067, %v1073
  %v1076 = vmul.f32 %v1074, 1.442695
  %v1077 = vpow.pop %v1076
  %v1078 = vmul.f32 %v1075, 1.442695
  %v1079 = vpow.pop %v1078
  %v1080 = vsel %vm972, %v1077, 0.0
  %1081 = vadd.xlane.f32.xlu0 %v1080
  %v1082 = vpop.xlane.xlu0 %1081
  %v1083 = vsel %vm972, %v1079, 0.0
  %1084 = vadd.xlane.f32.xlu0 %v1083
  %v1085 = vpop.xlane.xlu0 %1084
  %v1086 = vrcp.pop %v1082
  %v1087 = vrcp.pop %v1085
  %v1088 = vmul.f32 %v1077, %v1086
  %v1089 = vmul.f32 %v1079, %v1087
  %1091 = vrot.lane.b32.xlu0 %v923, 120
  %v1092 = vpop.permute.xlu0 %1091
  %1093 = vrot.lane.b32.xlu0 %v926, 120
  %v1094 = vpop.permute.xlu0 %1093
  %v1097 = vsel %vm972, %v1088, 0
  %v1100 = vsel %vm972, %v1089, 0
  %v1102 = vsel %vm193, %v1094, 0
  %1104 = vmatpush.msra.mxu0 0.0
  %1105 = vmatpush.msra.mxu0 0.0
  %1106 = vmatpush.msra.mxu0 0.0
  %1107 = vmatpush.msra.mxu0 0.0
  %1108 = vmatpush.msra.mxu0 0.0
  %1109 = vmatpush.msra.mxu0 0.0
  %1110 = vmatpush.msra.mxu0 0.0
  %1111 = vmatpush.msra.mxu0 0.0
  %1112 = vmatpush.msra.mxu0 0.0
  %1113 = vmatpush.msra.mxu0 0.0
  %1114 = vmatpush.msra.mxu0 0.0
  %1115 = vmatpush.msra.mxu0 0.0
  %1116 = vmatpush.msra.mxu0 0.0
  %1117 = vmatpush.msra.mxu0 0.0
  %1118 = vmatpush.msra.mxu0 %v1102
  %1119 = vmatpush.msra.mxu0 %v1092
  %1120 = vmatmul.f32.gmra.mxu0 %v1097
  %v1121 = vpop.f32.mrf.mxu0
  %v1122 = vadd.f32 0.0, %v1121
  %1123 = vmatmul.f32.gmra.mxu0 %v1100
  %v1124 = vpop.f32.mrf.mxu0
  %v1125 = vadd.f32 0.0, %v1124
  %1126 = vdwg.mxu0
  %1127 = vrot.lane.b32.xlu0 %v849, 112
  %v1128 = vpop.permute.xlu0 %1127
  %1129 = vrot.lane.b32.xlu0 %v852, 112
  %v1130 = vpop.permute.xlu0 %1129
  %1131 = vrot.lane.b32.xlu0 %v886, 112
  %v1132 = vpop.permute.xlu0 %1131
  %1133 = vrot.lane.b32.xlu0 %v889, 112
  %v1134 = vpop.permute.xlu0 %1133
  %v1135 = vsel %vm934, %v1128, 0
  %v1137 = vsel %vm934, %v1130, 0
  %v1139 = vsel %vm934, %v1132, 0
  %v1141 = vsel %vm934, %v1134, 0
  %1143 = vmatpush.xpose.msra.mxu0 0.0
  %1144 = vmatpush.xpose.msra.mxu0 0.0
  %1145 = vmatpush.xpose.msra.mxu0 0.0
  %1146 = vmatpush.xpose.msra.mxu0 0.0
  %1147 = vmatpush.xpose.msra.mxu0 0.0
  %1148 = vmatpush.xpose.msra.mxu0 0.0
  %1149 = vmatpush.xpose.msra.mxu0 0.0
  %1150 = vmatpush.xpose.msra.mxu0 0.0
  %1151 = vmatpush.xpose.msra.mxu0 0.0
  %1152 = vmatpush.xpose.msra.mxu0 0.0
  %1153 = vmatpush.xpose.msra.mxu0 0.0
  %1154 = vmatpush.xpose.msra.mxu0 0.0
  %1155 = vmatpush.xpose.msra.mxu0 0.0
  %1156 = vmatpush.xpose.msra.mxu0 0.0
  %1157 = vmatpush.xpose.msra.mxu0 %v1141
  %1158 = vmatpush.xpose.msra.mxu0 %v1139
  %1159 = vmatmul.f32.gmra.mxu0 %v1135
  %v1160 = vpop.f32.mrf.mxu0
  %v1161 = vadd.f32 0.0, %v1160
  %1162 = vmatmul.f32.gmra.mxu0 %v1137
  %v1163 = vpop.f32.mrf.mxu0
  %v1164 = vadd.f32 0.0, %v1163
  %1165 = vdwg.mxu0
  %v1166 = vmul.f32 %v1161, 0.35355338
  %v1167 = vmul.f32 %v1164, 0.35355338
  %v1168 = vsel %vm972, %v1166, -inf
  %1169 = vmax.xlane.f32.xlu0 %v1168
  %v1170 = vpop.xlane.xlu0 %1169
  %v1171 = vsel %vm972, %v1167, -inf
  %1172 = vmax.xlane.f32.xlu0 %v1171
  %v1173 = vpop.xlane.xlu0 %1172
  %v1174 = vsub.f32 %v1166, %v1170
  %v1175 = vsub.f32 %v1167, %v1173
  %v1176 = vmul.f32 %v1174, 1.442695
  %v1177 = vpow.pop %v1176
  %v1178 = vmul.f32 %v1175, 1.442695
  %v1179 = vpow.pop %v1178
  %v1180 = vsel %vm972, %v1177, 0.0
  %1181 = vadd.xlane.f32.xlu0 %v1180
  %v1182 = vpop.xlane.xlu0 %1181
  %v1183 = vsel %vm972, %v1179, 0.0
  %1184 = vadd.xlane.f32.xlu0 %v1183
  %v1185 = vpop.xlane.xlu0 %1184
  %v1186 = vrcp.pop %v1182
  %v1187 = vrcp.pop %v1185
  %v1188 = vmul.f32 %v1177, %v1186
  %v1189 = vmul.f32 %v1179, %v1187
  %1190 = vrot.lane.b32.xlu0 %v923, 112
  %v1191 = vpop.permute.xlu0 %1190
  %1192 = vrot.lane.b32.xlu0 %v926, 112
  %v1193 = vpop.permute.xlu0 %1192
  %v1196 = vsel %vm972, %v1188, 0
  %v1199 = vsel %vm972, %v1189, 0
  %v1201 = vsel %vm193, %v1193, 0
  %1203 = vmatpush.msra.mxu0 0.0
  %1204 = vmatpush.msra.mxu0 0.0
  %1205 = vmatpush.msra.mxu0 0.0
  %1206 = vmatpush.msra.mxu0 0.0
  %1207 = vmatpush.msra.mxu0 0.0
  %1208 = vmatpush.msra.mxu0 0.0
  %1209 = vmatpush.msra.mxu0 0.0
  %1210 = vmatpush.msra.mxu0 0.0
  %1211 = vmatpush.msra.mxu0 0.0
  %1212 = vmatpush.msra.mxu0 0.0
  %1213 = vmatpush.msra.mxu0 0.0
  %1214 = vmatpush.msra.mxu0 0.0
  %1215 = vmatpush.msra.mxu0 0.0
  %1216 = vmatpush.msra.mxu0 0.0
  %1217 = vmatpush.msra.mxu0 %v1201
  %1218 = vmatpush.msra.mxu0 %v1191
  %1219 = vmatmul.f32.gmra.mxu0 %v1196
  %v1220 = vpop.f32.mrf.mxu0
  %v1221 = vadd.f32 0.0, %v1220
  %1222 = vmatmul.f32.gmra.mxu0 %v1199
  %v1223 = vpop.f32.mrf.mxu0
  %v1224 = vadd.f32 0.0, %v1223
  %1225 = vdwg.mxu0
  %1226 = vrot.lane.b32.xlu0 %v849, 104
  %v1227 = vpop.permute.xlu0 %1226
  %1228 = vrot.lane.b32.xlu0 %v852, 104
  %v1229 = vpop.permute.xlu0 %1228
  %1230 = vrot.lane.b32.xlu0 %v886, 104
  %v1231 = vpop.permute.xlu0 %1230
  %1232 = vrot.lane.b32.xlu0 %v889, 104
  %v1233 = vpop.permute.xlu0 %1232
  %v1234 = vsel %vm934, %v1227, 0
  %v1236 = vsel %vm934, %v1229, 0
  %v1238 = vsel %vm934, %v1231, 0
  %v1240 = vsel %vm934, %v1233, 0
  %1242 = vmatpush.xpose.msra.mxu0 0.0
  %1243 = vmatpush.xpose.msra.mxu0 0.0
  %1244 = vmatpush.xpose.msra.mxu0 0.0
  %1245 = vmatpush.xpose.msra.mxu0 0.0
  %1246 = vmatpush.xpose.msra.mxu0 0.0
  %1247 = vmatpush.xpose.msra.mxu0 0.0
  %1248 = vmatpush.xpose.msra.mxu0 0.0
  %1249 = vmatpush.xpose.msra.mxu0 0.0
  %1250 = vmatpush.xpose.msra.mxu0 0.0
  %1251 = vmatpush.xpose.msra.mxu0 0.0
  %1252 = vmatpush.xpose.msra.mxu0 0.0
  %1253 = vmatpush.xpose.msra.mxu0 0.0
  %1254 = vmatpush.xpose.msra.mxu0 0.0
  %1255 = vmatpush.xpose.msra.mxu0 0.0
  %1256 = vmatpush.xpose.msra.mxu0 %v1240
  %1257 = vmatpush.xpose.msra.mxu0 %v1238
  %1258 = vmatmul.f32.gmra.mxu0 %v1234
  %v1259 = vpop.f32.mrf.mxu0
  %v1260 = vadd.f32 0.0, %v1259
  %1261 = vmatmul.f32.gmra.mxu0 %v1236
  %v1262 = vpop.f32.mrf.mxu0
  %v1263 = vadd.f32 0.0, %v1262
  %1264 = vdwg.mxu0
  %v1265 = vmul.f32 %v1260, 0.35355338
  %v1266 = vmul.f32 %v1263, 0.35355338
  %v1267 = vsel %vm972, %v1265, -inf
  %1268 = vmax.xlane.f32.xlu0 %v1267
  %v1269 = vpop.xlane.xlu0 %1268
  %v1270 = vsel %vm972, %v1266, -inf
  %1271 = vmax.xlane.f32.xlu0 %v1270
  %v1272 = vpop.xlane.xlu0 %1271
  %v1273 = vsub.f32 %v1265, %v1269
  %v1274 = vsub.f32 %v1266, %v1272
  %v1275 = vmul.f32 %v1273, 1.442695
  %v1276 = vpow.pop %v1275
  %v1277 = vmul.f32 %v1274, 1.442695
  %v1278 = vpow.pop %v1277
  %v1279 = vsel %vm972, %v1276, 0.0
  %1280 = vadd.xlane.f32.xlu0 %v1279
  %v1281 = vpop.xlane.xlu0 %1280
  %v1282 = vsel %vm972, %v1278, 0.0
  %1283 = vadd.xlane.f32.xlu0 %v1282
  %v1284 = vpop.xlane.xlu0 %1283
  %v1285 = vrcp.pop %v1281
  %v1286 = vrcp.pop %v1284
  %v1287 = vmul.f32 %v1276, %v1285
  %v1288 = vmul.f32 %v1278, %v1286
  %1289 = vrot.lane.b32.xlu0 %v923, 104
  %v1290 = vpop.permute.xlu0 %1289
  %1291 = vrot.lane.b32.xlu0 %v926, 104
  %v1292 = vpop.permute.xlu0 %1291
  %v1295 = vsel %vm972, %v1287, 0
  %v1298 = vsel %vm972, %v1288, 0
  %v1300 = vsel %vm193, %v1292, 0
  %1302 = vmatpush.msra.mxu0 0.0
  %1303 = vmatpush.msra.mxu0 0.0
  %1304 = vmatpush.msra.mxu0 0.0
  %1305 = vmatpush.msra.mxu0 0.0
  %1306 = vmatpush.msra.mxu0 0.0
  %1307 = vmatpush.msra.mxu0 0.0
  %1308 = vmatpush.msra.mxu0 0.0
  %1309 = vmatpush.msra.mxu0 0.0
  %1310 = vmatpush.msra.mxu0 0.0
  %1311 = vmatpush.msra.mxu0 0.0
  %1312 = vmatpush.msra.mxu0 0.0
  %1313 = vmatpush.msra.mxu0 0.0
  %1314 = vmatpush.msra.mxu0 0.0
  %1315 = vmatpush.msra.mxu0 0.0
  %1316 = vmatpush.msra.mxu0 %v1300
  %1317 = vmatpush.msra.mxu0 %v1290
  %1318 = vmatmul.f32.gmra.mxu0 %v1295
  %v1319 = vpop.f32.mrf.mxu0
  %v1320 = vadd.f32 0.0, %v1319
  %1321 = vmatmul.f32.gmra.mxu0 %v1298
  %v1322 = vpop.f32.mrf.mxu0
  %v1323 = vadd.f32 0.0, %v1322
  %1324 = vdwg.mxu0
  %1327 = vrot.lane.b32.xlu0 %v1122, 8
  %v1328 = vpop.permute.xlu0 %1327
  %1329 = vrot.lane.b32.xlu0 %v1125, 8
  %v1330 = vpop.permute.xlu0 %1329
  %1335 = vrot.lane.b32.xlu0 %v1221, 16
  %v1336 = vpop.permute.xlu0 %1335
  %1337 = vrot.lane.b32.xlu0 %v1224, 16
  %v1338 = vpop.permute.xlu0 %1337
  %1343 = vrot.lane.b32.xlu0 %v1320, 24
  %v1344 = vpop.permute.xlu0 %1343
  %1345 = vrot.lane.b32.xlu0 %v1323, 24
  %v1346 = vpop.permute.xlu0 %1345
  %v1349 = vsel %vm934, %v1022, %v1328
  %v1350 = vsel %vm934, %v1025, %v1330
  %vm1351 = vcmask 130048
  %v1352 = vsel %vm1351, %v1349, %v1336
  %v1353 = vsel %vm1351, %v1350, %v1338
  %vm1354 = vcmask 195584
  %v1355 = vsel %vm1354, %v1352, %v1344
  %v1356 = vsel %vm1354, %v1353, %v1346
  %v1358 = vsel %vm934, %v855, 0
  %v1361 = vsel %vm934, %v858, 0
  %v1364 = vsel %vm934, %v892, 0
  %v1367 = vsel %vm934, %v895, 0
  %1369 = vmatpush.xpose.msra.mxu0 0.0
  %1370 = vmatpush.xpose.msra.mxu0 0.0
  %1371 = vmatpush.xpose.msra.mxu0 0.0
  %1372 = vmatpush.xpose.msra.mxu0 0.0
  %1373 = vmatpush.xpose.msra.mxu0 0.0
  %1374 = vmatpush.xpose.msra.mxu0 0.0
  %1375 = vmatpush.xpose.msra.mxu0 0.0
  %1376 = vmatpush.xpose.msra.mxu0 0.0
  %1377 = vmatpush.xpose.msra.mxu0 0.0
  %1378 = vmatpush.xpose.msra.mxu0 0.0
  %1379 = vmatpush.xpose.msra.mxu0 0.0
  %1380 = vmatpush.xpose.msra.mxu0 0.0
  %1381 = vmatpush.xpose.msra.mxu0 0.0
  %1382 = vmatpush.xpose.msra.mxu0 0.0
  %1383 = vmatpush.xpose.msra.mxu0 %v1367
  %1384 = vmatpush.xpose.msra.mxu0 %v1364
  %1385 = vmatmul.f32.gmra.mxu0 %v1358
  %v1386 = vpop.f32.mrf.mxu0
  %v1387 = vadd.f32 0.0, %v1386
  %1388 = vmatmul.f32.gmra.mxu0 %v1361
  %v1389 = vpop.f32.mrf.mxu0
  %v1390 = vadd.f32 0.0, %v1389
  %1391 = vdwg.mxu0
  %v1392 = vmul.f32 %v1387, 0.35355338
  %v1393 = vmul.f32 %v1390, 0.35355338
  %v1394 = vsel %vm972, %v1392, -inf
  %1395 = vmax.xlane.f32.xlu0 %v1394
  %v1396 = vpop.xlane.xlu0 %1395
  %v1397 = vsel %vm972, %v1393, -inf
  %1398 = vmax.xlane.f32.xlu0 %v1397
  %v1399 = vpop.xlane.xlu0 %1398
  %v1400 = vsub.f32 %v1392, %v1396
  %v1401 = vsub.f32 %v1393, %v1399
  %v1402 = vmul.f32 %v1400, 1.442695
  %v1403 = vpow.pop %v1402
  %v1404 = vmul.f32 %v1401, 1.442695
  %v1405 = vpow.pop %v1404
  %v1406 = vsel %vm972, %v1403, 0.0
  %1407 = vadd.xlane.f32.xlu0 %v1406
  %v1408 = vpop.xlane.xlu0 %1407
  %v1409 = vsel %vm972, %v1405, 0.0
  %1410 = vadd.xlane.f32.xlu0 %v1409
  %v1411 = vpop.xlane.xlu0 %1410
  %v1412 = vrcp.pop %v1408
  %v1413 = vrcp.pop %v1411
  %v1414 = vmul.f32 %v1403, %v1412
  %v1415 = vmul.f32 %v1405, %v1413
  %v1417 = vsel %vm972, %v1414, 0
  %v1420 = vsel %vm972, %v1415, 0
  %v1423 = vsel %vm193, %v932, 0
  %1425 = vmatpush.msra.mxu0 0.0
  %1426 = vmatpush.msra.mxu0 0.0
  %1427 = vmatpush.msra.mxu0 0.0
  %1428 = vmatpush.msra.mxu0 0.0
  %1429 = vmatpush.msra.mxu0 0.0
  %1430 = vmatpush.msra.mxu0 0.0
  %1431 = vmatpush.msra.mxu0 0.0
  %1432 = vmatpush.msra.mxu0 0.0
  %1433 = vmatpush.msra.mxu0 0.0
  %1434 = vmatpush.msra.mxu0 0.0
  %1435 = vmatpush.msra.mxu0 0.0
  %1436 = vmatpush.msra.mxu0 0.0
  %1437 = vmatpush.msra.mxu0 0.0
  %1438 = vmatpush.msra.mxu0 0.0
  %1439 = vmatpush.msra.mxu0 %v1423
  %1440 = vmatpush.msra.mxu0 %v929
  %1441 = vmatmul.f32.gmra.mxu0 %v1417
  %v1442 = vpop.f32.mrf.mxu0
  %v1443 = vadd.f32 0.0, %v1442
  %1444 = vmatmul.f32.gmra.mxu0 %v1420
  %v1445 = vpop.f32.mrf.mxu0
  %v1446 = vadd.f32 0.0, %v1445
  %1447 = vdwg.mxu0
  %1448 = vrot.lane.b32.xlu0 %v855, 120
  %v1449 = vpop.permute.xlu0 %1448
  %1450 = vrot.lane.b32.xlu0 %v858, 120
  %v1451 = vpop.permute.xlu0 %1450
  %1452 = vrot.lane.b32.xlu0 %v892, 120
  %v1453 = vpop.permute.xlu0 %1452
  %1454 = vrot.lane.b32.xlu0 %v895, 120
  %v1455 = vpop.permute.xlu0 %1454
  %v1456 = vsel %vm934, %v1449, 0
  %v1458 = vsel %vm934, %v1451, 0
  %v1460 = vsel %vm934, %v1453, 0
  %v1462 = vsel %vm934, %v1455, 0
  %1464 = vmatpush.xpose.msra.mxu0 0.0
  %1465 = vmatpush.xpose.msra.mxu0 0.0
  %1466 = vmatpush.xpose.msra.mxu0 0.0
  %1467 = vmatpush.xpose.msra.mxu0 0.0
  %1468 = vmatpush.xpose.msra.mxu0 0.0
  %1469 = vmatpush.xpose.msra.mxu0 0.0
  %1470 = vmatpush.xpose.msra.mxu0 0.0
  %1471 = vmatpush.xpose.msra.mxu0 0.0
  %1472 = vmatpush.xpose.msra.mxu0 0.0
  %1473 = vmatpush.xpose.msra.mxu0 0.0
  %1474 = vmatpush.xpose.msra.mxu0 0.0
  %1475 = vmatpush.xpose.msra.mxu0 0.0
  %1476 = vmatpush.xpose.msra.mxu0 0.0
  %1477 = vmatpush.xpose.msra.mxu0 0.0
  %1478 = vmatpush.xpose.msra.mxu0 %v1462
  %1479 = vmatpush.xpose.msra.mxu0 %v1460
  %1480 = vmatmul.f32.gmra.mxu0 %v1456
  %v1481 = vpop.f32.mrf.mxu0
  %v1482 = vadd.f32 0.0, %v1481
  %1483 = vmatmul.f32.gmra.mxu0 %v1458
  %v1484 = vpop.f32.mrf.mxu0
  %v1485 = vadd.f32 0.0, %v1484
  %1486 = vdwg.mxu0
  %v1487 = vmul.f32 %v1482, 0.35355338
  %v1488 = vmul.f32 %v1485, 0.35355338
  %v1489 = vsel %vm972, %v1487, -inf
  %1490 = vmax.xlane.f32.xlu0 %v1489
  %v1491 = vpop.xlane.xlu0 %1490
  %v1492 = vsel %vm972, %v1488, -inf
  %1493 = vmax.xlane.f32.xlu0 %v1492
  %v1494 = vpop.xlane.xlu0 %1493
  %v1495 = vsub.f32 %v1487, %v1491
  %v1496 = vsub.f32 %v1488, %v1494
  %v1497 = vmul.f32 %v1495, 1.442695
  %v1498 = vpow.pop %v1497
  %v1499 = vmul.f32 %v1496, 1.442695
  %v1500 = vpow.pop %v1499
  %v1501 = vsel %vm972, %v1498, 0.0
  %1502 = vadd.xlane.f32.xlu0 %v1501
  %v1503 = vpop.xlane.xlu0 %1502
  %v1504 = vsel %vm972, %v1500, 0.0
  %1505 = vadd.xlane.f32.xlu0 %v1504
  %v1506 = vpop.xlane.xlu0 %1505
  %v1507 = vrcp.pop %v1503
  %v1508 = vrcp.pop %v1506
  %v1509 = vmul.f32 %v1498, %v1507
  %v1510 = vmul.f32 %v1500, %v1508
  %1512 = vrot.lane.b32.xlu0 %v929, 120
  %v1513 = vpop.permute.xlu0 %1512
  %1514 = vrot.lane.b32.xlu0 %v932, 120
  %v1515 = vpop.permute.xlu0 %1514
  %v1518 = vsel %vm972, %v1509, 0
  %v1521 = vsel %vm972, %v1510, 0
  %v1523 = vsel %vm193, %v1515, 0
  %1525 = vmatpush.msra.mxu0 0.0
  %1526 = vmatpush.msra.mxu0 0.0
  %1527 = vmatpush.msra.mxu0 0.0
  %1528 = vmatpush.msra.mxu0 0.0
  %1529 = vmatpush.msra.mxu0 0.0
  %1530 = vmatpush.msra.mxu0 0.0
  %1531 = vmatpush.msra.mxu0 0.0
  %1532 = vmatpush.msra.mxu0 0.0
  %1533 = vmatpush.msra.mxu0 0.0
  %1534 = vmatpush.msra.mxu0 0.0
  %1535 = vmatpush.msra.mxu0 0.0
  %1536 = vmatpush.msra.mxu0 0.0
  %1537 = vmatpush.msra.mxu0 0.0
  %1538 = vmatpush.msra.mxu0 0.0
  %1539 = vmatpush.msra.mxu0 %v1523
  %1540 = vmatpush.msra.mxu0 %v1513
  %1541 = vmatmul.f32.gmra.mxu0 %v1518
  %v1542 = vpop.f32.mrf.mxu0
  %v1543 = vadd.f32 0.0, %v1542
  %1544 = vmatmul.f32.gmra.mxu0 %v1521
  %v1545 = vpop.f32.mrf.mxu0
  %v1546 = vadd.f32 0.0, %v1545
  %1547 = vdwg.mxu0
  %1548 = vrot.lane.b32.xlu0 %v855, 112
  %v1549 = vpop.permute.xlu0 %1548
  %1550 = vrot.lane.b32.xlu0 %v858, 112
  %v1551 = vpop.permute.xlu0 %1550
  %1552 = vrot.lane.b32.xlu0 %v892, 112
  %v1553 = vpop.permute.xlu0 %1552
  %1554 = vrot.lane.b32.xlu0 %v895, 112
  %v1555 = vpop.permute.xlu0 %1554
  %v1556 = vsel %vm934, %v1549, 0
  %v1558 = vsel %vm934, %v1551, 0
  %v1560 = vsel %vm934, %v1553, 0
  %v1562 = vsel %vm934, %v1555, 0
  %1564 = vmatpush.xpose.msra.mxu0 0.0
  %1565 = vmatpush.xpose.msra.mxu0 0.0
  %1566 = vmatpush.xpose.msra.mxu0 0.0
  %1567 = vmatpush.xpose.msra.mxu0 0.0
  %1568 = vmatpush.xpose.msra.mxu0 0.0
  %1569 = vmatpush.xpose.msra.mxu0 0.0
  %1570 = vmatpush.xpose.msra.mxu0 0.0
  %1571 = vmatpush.xpose.msra.mxu0 0.0
  %1572 = vmatpush.xpose.msra.mxu0 0.0
  %1573 = vmatpush.xpose.msra.mxu0 0.0
  %1574 = vmatpush.xpose.msra.mxu0 0.0
  %1575 = vmatpush.xpose.msra.mxu0 0.0
  %1576 = vmatpush.xpose.msra.mxu0 0.0
  %1577 = vmatpush.xpose.msra.mxu0 0.0
  %1578 = vmatpush.xpose.msra.mxu0 %v1562
  %1579 = vmatpush.xpose.msra.mxu0 %v1560
  %1580 = vmatmul.f32.gmra.mxu0 %v1556
  %v1581 = vpop.f32.mrf.mxu0
  %v1582 = vadd.f32 0.0, %v1581
  %1583 = vmatmul.f32.gmra.mxu0 %v1558
  %v1584 = vpop.f32.mrf.mxu0
  %v1585 = vadd.f32 0.0, %v1584
  %1586 = vdwg.mxu0
  %v1587 = vmul.f32 %v1582, 0.35355338
  %v1588 = vmul.f32 %v1585, 0.35355338
  %v1589 = vsel %vm972, %v1587, -inf
  %1590 = vmax.xlane.f32.xlu0 %v1589
  %v1591 = vpop.xlane.xlu0 %1590
  %v1592 = vsel %vm972, %v1588, -inf
  %1593 = vmax.xlane.f32.xlu0 %v1592
  %v1594 = vpop.xlane.xlu0 %1593
  %v1595 = vsub.f32 %v1587, %v1591
  %v1596 = vsub.f32 %v1588, %v1594
  %v1597 = vmul.f32 %v1595, 1.442695
  %v1598 = vpow.pop %v1597
  %v1599 = vmul.f32 %v1596, 1.442695
  %v1600 = vpow.pop %v1599
  %v1601 = vsel %vm972, %v1598, 0.0
  %1602 = vadd.xlane.f32.xlu0 %v1601
  %v1603 = vpop.xlane.xlu0 %1602
  %v1604 = vsel %vm972, %v1600, 0.0
  %1605 = vadd.xlane.f32.xlu0 %v1604
  %v1606 = vpop.xlane.xlu0 %1605
  %v1607 = vrcp.pop %v1603
  %v1608 = vrcp.pop %v1606
  %v1609 = vmul.f32 %v1598, %v1607
  %v1610 = vmul.f32 %v1600, %v1608
  %1611 = vrot.lane.b32.xlu0 %v929, 112
  %v1612 = vpop.permute.xlu0 %1611
  %1613 = vrot.lane.b32.xlu0 %v932, 112
  %v1614 = vpop.permute.xlu0 %1613
  %v1617 = vsel %vm972, %v1609, 0
  %v1620 = vsel %vm972, %v1610, 0
  %v1622 = vsel %vm193, %v1614, 0
  %1624 = vmatpush.msra.mxu0 0.0
  %1625 = vmatpush.msra.mxu0 0.0
  %1626 = vmatpush.msra.mxu0 0.0
  %1627 = vmatpush.msra.mxu0 0.0
  %1628 = vmatpush.msra.mxu0 0.0
  %1629 = vmatpush.msra.mxu0 0.0
  %1630 = vmatpush.msra.mxu0 0.0
  %1631 = vmatpush.msra.mxu0 0.0
  %1632 = vmatpush.msra.mxu0 0.0
  %1633 = vmatpush.msra.mxu0 0.0
  %1634 = vmatpush.msra.mxu0 0.0
  %1635 = vmatpush.msra.mxu0 0.0
  %1636 = vmatpush.msra.mxu0 0.0
  %1637 = vmatpush.msra.mxu0 0.0
  %1638 = vmatpush.msra.mxu0 %v1622
  %1639 = vmatpush.msra.mxu0 %v1612
  %1640 = vmatmul.f32.gmra.mxu0 %v1617
  %v1641 = vpop.f32.mrf.mxu0
  %v1642 = vadd.f32 0.0, %v1641
  %1643 = vmatmul.f32.gmra.mxu0 %v1620
  %v1644 = vpop.f32.mrf.mxu0
  %v1645 = vadd.f32 0.0, %v1644
  %1646 = vdwg.mxu0
  %1647 = vrot.lane.b32.xlu0 %v855, 104
  %v1648 = vpop.permute.xlu0 %1647
  %1649 = vrot.lane.b32.xlu0 %v858, 104
  %v1650 = vpop.permute.xlu0 %1649
  %1651 = vrot.lane.b32.xlu0 %v892, 104
  %v1652 = vpop.permute.xlu0 %1651
  %1653 = vrot.lane.b32.xlu0 %v895, 104
  %v1654 = vpop.permute.xlu0 %1653
  %v1655 = vsel %vm934, %v1648, 0
  %v1657 = vsel %vm934, %v1650, 0
  %v1659 = vsel %vm934, %v1652, 0
  %v1661 = vsel %vm934, %v1654, 0
  %1663 = vmatpush.xpose.msra.mxu0 0.0
  %1664 = vmatpush.xpose.msra.mxu0 0.0
  %1665 = vmatpush.xpose.msra.mxu0 0.0
  %1666 = vmatpush.xpose.msra.mxu0 0.0
  %1667 = vmatpush.xpose.msra.mxu0 0.0
  %1668 = vmatpush.xpose.msra.mxu0 0.0
  %1669 = vmatpush.xpose.msra.mxu0 0.0
  %1670 = vmatpush.xpose.msra.mxu0 0.0
  %1671 = vmatpush.xpose.msra.mxu0 0.0
  %1672 = vmatpush.xpose.msra.mxu0 0.0
  %1673 = vmatpush.xpose.msra.mxu0 0.0
  %1674 = vmatpush.xpose.msra.mxu0 0.0
  %1675 = vmatpush.xpose.msra.mxu0 0.0
  %1676 = vmatpush.xpose.msra.mxu0 0.0
  %1677 = vmatpush.xpose.msra.mxu0 %v1661
  %1678 = vmatpush.xpose.msra.mxu0 %v1659
  %1679 = vmatmul.f32.gmra.mxu0 %v1655
  %v1680 = vpop.f32.mrf.mxu0
  %v1681 = vadd.f32 0.0, %v1680
  %1682 = vmatmul.f32.gmra.mxu0 %v1657
  %v1683 = vpop.f32.mrf.mxu0
  %v1684 = vadd.f32 0.0, %v1683
  %1685 = vdwg.mxu0
  %v1686 = vmul.f32 %v1681, 0.35355338
  %v1687 = vmul.f32 %v1684, 0.35355338
  %v1688 = vsel %vm972, %v1686, -inf
  %1689 = vmax.xlane.f32.xlu0 %v1688
  %v1690 = vpop.xlane.xlu0 %1689
  %v1691 = vsel %vm972, %v1687, -inf
  %1692 = vmax.xlane.f32.xlu0 %v1691
  %v1693 = vpop.xlane.xlu0 %1692
  %v1694 = vsub.f32 %v1686, %v1690
  %v1695 = vsub.f32 %v1687, %v1693
  %v1696 = vmul.f32 %v1694, 1.442695
  %v1697 = vpow.pop %v1696
  %v1698 = vmul.f32 %v1695, 1.442695
  %v1699 = vpow.pop %v1698
  %v1700 = vsel %vm972, %v1697, 0.0
  %1701 = vadd.xlane.f32.xlu0 %v1700
  %v1702 = vpop.xlane.xlu0 %1701
  %v1703 = vsel %vm972, %v1699, 0.0
  %1704 = vadd.xlane.f32.xlu0 %v1703
  %v1705 = vpop.xlane.xlu0 %1704
  %v1706 = vrcp.pop %v1702
  %v1707 = vrcp.pop %v1705
  %v1708 = vmul.f32 %v1697, %v1706
  %v1709 = vmul.f32 %v1699, %v1707
  %1710 = vrot.lane.b32.xlu0 %v929, 104
  %v1711 = vpop.permute.xlu0 %1710
  %1712 = vrot.lane.b32.xlu0 %v932, 104
  %v1713 = vpop.permute.xlu0 %1712
  %v1716 = vsel %vm972, %v1708, 0
  %v1719 = vsel %vm972, %v1709, 0
  %v1721 = vsel %vm193, %v1713, 0
  %1723 = vmatpush.msra.mxu0 0.0
  %1724 = vmatpush.msra.mxu0 0.0
  %1725 = vmatpush.msra.mxu0 0.0
  %1726 = vmatpush.msra.mxu0 0.0
  %1727 = vmatpush.msra.mxu0 0.0
  %1728 = vmatpush.msra.mxu0 0.0
  %1729 = vmatpush.msra.mxu0 0.0
  %1730 = vmatpush.msra.mxu0 0.0
  %1731 = vmatpush.msra.mxu0 0.0
  %1732 = vmatpush.msra.mxu0 0.0
  %1733 = vmatpush.msra.mxu0 0.0
  %1734 = vmatpush.msra.mxu0 0.0
  %1735 = vmatpush.msra.mxu0 0.0
  %1736 = vmatpush.msra.mxu0 0.0
  %1737 = vmatpush.msra.mxu0 %v1721
  %1738 = vmatpush.msra.mxu0 %v1711
  %1739 = vmatmul.f32.gmra.mxu0 %v1716
  %v1740 = vpop.f32.mrf.mxu0
  %v1741 = vadd.f32 0.0, %v1740
  %1742 = vmatmul.f32.gmra.mxu0 %v1719
  %v1743 = vpop.f32.mrf.mxu0
  %v1744 = vadd.f32 0.0, %v1743
  %1745 = vdwg.mxu0
  %1748 = vrot.lane.b32.xlu0 %v1543, 8
  %v1749 = vpop.permute.xlu0 %1748
  %1750 = vrot.lane.b32.xlu0 %v1546, 8
  %v1751 = vpop.permute.xlu0 %1750
  %1756 = vrot.lane.b32.xlu0 %v1642, 16
  %v1757 = vpop.permute.xlu0 %1756
  %1758 = vrot.lane.b32.xlu0 %v1645, 16
  %v1759 = vpop.permute.xlu0 %1758
  %1764 = vrot.lane.b32.xlu0 %v1741, 24
  %v1765 = vpop.permute.xlu0 %1764
  %1766 = vrot.lane.b32.xlu0 %v1744, 24
  %v1767 = vpop.permute.xlu0 %1766
  %v1770 = vsel %vm934, %v1443, %v1749
  %v1771 = vsel %vm934, %v1446, %v1751
  %v1772 = vsel %vm1351, %v1770, %v1757
  %v1773 = vsel %vm1351, %v1771, %v1759
  %v1774 = vsel %vm1354, %v1772, %v1765
  %v1775 = vsel %vm1354, %v1773, %v1767
  %v1776 = vld [vmem:[%s11] sm:$0xff]
  %v1777 = vld [vmem:[%s11 + $0x8] sm:$0xff]
  %v1778 = vld [vmem:[%s11 + $0x10] sm:$0xff]
  %v1779 = vld [vmem:[%s11 + $0x18] sm:$0xff]
  %v1780 = vld [vmem:[%s12] sm:$0x1]
  %v1782 = vperm.slane %v1780, 0
  %v1785 = vsel %vm205, %v1355, 0
  %v1788 = vsel %vm205, %v1356, 0
  %v1791 = vsel %vm205, %v1774, 0
  %v1794 = vsel %vm205, %v1775, 0
  %1796 = vmatpush.msra.mxu0 0.0
  %1797 = vmatpush.msra.mxu0 0.0
  %1798 = vmatpush.msra.mxu0 0.0
  %1799 = vmatpush.msra.mxu0 0.0
  %1800 = vmatpush.msra.mxu0 0.0
  %1801 = vmatpush.msra.mxu0 0.0
  %1802 = vmatpush.msra.mxu0 0.0
  %1803 = vmatpush.msra.mxu0 0.0
  %1804 = vmatpush.msra.mxu0 0.0
  %1805 = vmatpush.msra.mxu0 0.0
  %1806 = vmatpush.msra.mxu0 0.0
  %1807 = vmatpush.msra.mxu0 0.0
  %1808 = vmatpush.msra.mxu0 %v1779
  %1809 = vmatpush.msra.mxu0 %v1778
  %1810 = vmatpush.msra.mxu0 %v1777
  %1811 = vmatpush.msra.mxu0 %v1776
  %1812 = vmatmul.f32.gmra.mxu0 %v1785
  %v1813 = vpop.f32.mrf.mxu0
  %v1814 = vadd.f32 %v1782, %v1813
  %1815 = vmatmul.f32.gmra.mxu0 %v1788
  %v1816 = vpop.f32.mrf.mxu0
  %v1817 = vadd.f32 %v1782, %v1816
  %1818 = vmatmul.f32.gmra.mxu0 %v1791
  %v1819 = vpop.f32.mrf.mxu0
  %v1820 = vadd.f32 %v1782, %v1819
  %1821 = vmatmul.f32.gmra.mxu0 %v1794
  %v1822 = vpop.f32.mrf.mxu0
  %v1823 = vadd.f32 %v1782, %v1822
  %1824 = vdwg.mxu0
  %v1825 = vadd.f32 %v807, %v1814
  %v1826 = vadd.f32 %v808, %v1817
  %v1827 = vadd.f32 %v809, %v1820
  %v1828 = vadd.f32 %v810, %v1823
  %v1829 = vld [vmem:[%s13] sm:$0x1]
  %v1830 = vld [vmem:[%s14] sm:$0x1]
  %v1831 = vsel %vm205, %v1825, 0.0
  %1832 = vadd.xlane.f32.xlu0 %v1831
  %v1833 = vpop.xlane.xlu0 %1832
  %v1834 = vsel %vm205, %v1826, 0.0
  %1835 = vadd.xlane.f32.xlu0 %v1834
  %v1836 = vpop.xlane.xlu0 %1835
  %v1837 = vsel %vm205, %v1827, 0.0
  %1838 = vadd.xlane.f32.xlu0 %v1837
  %v1839 = vpop.xlane.xlu0 %1838
  %v1840 = vsel %vm205, %v1828, 0.0
  %1841 = vadd.xlane.f32.xlu0 %v1840
  %v1842 = vpop.xlane.xlu0 %1841
  %v1843 = vrcp.pop 32.0
  %v1844 = vmul.f32 32.0, %v1843
  %v1845 = vsub.f32 1.0, %v1844
  %v1846 = vmul.f32 %v1843, %v1845
  %v1847 = vadd.f32 %v1843, %v1846
  %vm1848 = vweird.f32 %v1843
  %v1849 = vsel %vm1848, %v1843, %v1847
  %v1850 = vmul.f32 %v1833, %v1849
  %v1851 = vmul.f32 %v1836, %v1849
  %v1852 = vmul.f32 %v1839, %v1849
  %v1853 = vmul.f32 %v1842, %v1849
  %v1854 = vsub.f32 %v1825, %v1850
  %v1855 = vsub.f32 %v1826, %v1851
  %v1856 = vsub.f32 %v1827, %v1852
  %v1857 = vsub.f32 %v1828, %v1853
  %v1858 = vmul.f32 %v1854, %v1854
  %v1859 = vmul.f32 %v1855, %v1855
  %v1860 = vmul.f32 %v1856, %v1856
  %v1861 = vmul.f32 %v1857, %v1857
  %v1862 = vsel %vm205, %v1858, 0.0
  %1863 = vadd.xlane.f32.xlu0 %v1862
  %v1864 = vpop.xlane.xlu0 %1863
  %v1865 = vsel %vm205, %v1859, 0.0
  %1866 = vadd.xlane.f32.xlu0 %v1865
  %v1867 = vpop.xlane.xlu0 %1866
  %v1868 = vsel %vm205, %v1860, 0.0
  %1869 = vadd.xlane.f32.xlu0 %v1868
  %v1870 = vpop.xlane.xlu0 %1869
  %v1871 = vsel %vm205, %v1861, 0.0
  %1872 = vadd.xlane.f32.xlu0 %v1871
  %v1873 = vpop.xlane.xlu0 %1872
  %v1874 = vmul.f32 %v1864, %v1849
  %v1875 = vmul.f32 %v1867, %v1849
  %v1876 = vmul.f32 %v1870, %v1849
  %v1877 = vmul.f32 %v1873, %v1849
  %v1878 = vadd.f32 %v1874, 1e-05
  %v1879 = vadd.f32 %v1875, 1e-05
  %v1880 = vadd.f32 %v1876, 1e-05
  %v1881 = vadd.f32 %v1877, 1e-05
  %v1882 = vrsqrt.pop %v1878
  %v1883 = vmul.f32 %v1882, %v1878
  %v1884 = vmul.f32 %v1883, %v1882
  %v1885 = vmul.f32 0.5, %v1884
  %v1886 = vsub.f32 1.5, %v1885
  %v1887 = vmul.f32 %v1882, %v1886
  %vm1888 = vweird.f32 %v1878
  %vm1889 = vweird.f32 %v1882
  %vm1890 = vmor %vm1888, %vm1889
  %v1891 = vsel %vm1890, %v1882, %v1887
  %v1892 = vrsqrt.pop %v1879
  %v1893 = vmul.f32 %v1892, %v1879
  %v1894 = vmul.f32 %v1893, %v1892
  %v1895 = vmul.f32 0.5, %v1894
  %v1896 = vsub.f32 1.5, %v1895
  %v1897 = vmul.f32 %v1892, %v1896
  %vm1898 = vweird.f32 %v1879
  %vm1899 = vweird.f32 %v1892
  %vm1900 = vmor %vm1898, %vm1899
  %v1901 = vsel %vm1900, %v1892, %v1897
  %v1902 = vrsqrt.pop %v1880
  %v1903 = vmul.f32 %v1902, %v1880
  %v1904 = vmul.f32 %v1903, %v1902
  %v1905 = vmul.f32 0.5, %v1904
  %v1906 = vsub.f32 1.5, %v1905
  %v1907 = vmul.f32 %v1902, %v1906
  %vm1908 = vweird.f32 %v1880
  %vm1909 = vweird.f32 %v1902
  %vm1910 = vmor %vm1908, %vm1909
  %v1911 = vsel %vm1910, %v1902, %v1907
  %v1912 = vrsqrt.pop %v1881
  %v1913 = vmul.f32 %v1912, %v1881
  %v1914 = vmul.f32 %v1913, %v1912
  %v1915 = vmul.f32 0.5, %v1914
  %v1916 = vsub.f32 1.5, %v1915
  %v1917 = vmul.f32 %v1912, %v1916
  %vm1918 = vweird.f32 %v1881
  %vm1919 = vweird.f32 %v1912
  %vm1920 = vmor %vm1918, %vm1919
  %v1921 = vsel %vm1920, %v1912, %v1917
  %v1922 = vmul.f32 %v1854, %v1891
  %v1923 = vmul.f32 %v1855, %v1901
  %v1924 = vmul.f32 %v1856, %v1911
  %v1925 = vmul.f32 %v1857, %v1921
  %v1927 = vperm.slane %v1829, 0
  %v1929 = vmul.f32 %v1922, %v1927
  %v1930 = vmul.f32 %v1923, %v1927
  %v1931 = vmul.f32 %v1924, %v1927
  %v1932 = vmul.f32 %v1925, %v1927
  %v1934 = vperm.slane %v1830, 0
  %v1936 = vadd.f32 %v1929, %v1934
  %v1937 = vadd.f32 %v1930, %v1934
  %v1938 = vadd.f32 %v1931, %v1934
  %v1939 = vadd.f32 %v1932, %v1934
  %v1940 = vld [vmem:[%s15] sm:$0xff]
  %v1941 = vld [vmem:[%s15 + $0x8] sm:$0xff]
  %v1942 = vld [vmem:[%s15 + $0x10] sm:$0xff]
  %v1943 = vld [vmem:[%s15 + $0x18] sm:$0xff]
  %v1944 = vld [vmem:[%s16] sm:$0x1]
  %v1946 = vperm.slane %v1944, 0
  %v1949 = vsel %vm205, %v1936, 0
  %v1952 = vsel %vm205, %v1937, 0
  %v1955 = vsel %vm205, %v1938, 0
  %v1958 = vsel %vm205, %v1939, 0
  %1960 = vmatpush.msra.mxu0 0.0
  %1961 = vmatpush.msra.mxu0 0.0
  %1962 = vmatpush.msra.mxu0 0.0
  %1963 = vmatpush.msra.mxu0 0.0
  %1964 = vmatpush.msra.mxu0 0.0
  %1965 = vmatpush.msra.mxu0 0.0
  %1966 = vmatpush.msra.mxu0 0.0
  %1967 = vmatpush.msra.mxu0 0.0
  %1968 = vmatpush.msra.mxu0 0.0
  %1969 = vmatpush.msra.mxu0 0.0
  %1970 = vmatpush.msra.mxu0 0.0
  %1971 = vmatpush.msra.mxu0 0.0
  %1972 = vmatpush.msra.mxu0 %v1943
  %1973 = vmatpush.msra.mxu0 %v1942
  %1974 = vmatpush.msra.mxu0 %v1941
  %1975 = vmatpush.msra.mxu0 %v1940
  %1976 = vmatmul.f32.gmra.mxu0 %v1949
  %v1977 = vpop.f32.mrf.mxu0
  %v1978 = vadd.f32 %v1946, %v1977
  %1979 = vmatmul.f32.gmra.mxu0 %v1952
  %v1980 = vpop.f32.mrf.mxu0
  %v1981 = vadd.f32 %v1946, %v1980
  %1982 = vmatmul.f32.gmra.mxu0 %v1955
  %v1983 = vpop.f32.mrf.mxu0
  %v1984 = vadd.f32 %v1946, %v1983
  %1985 = vmatmul.f32.gmra.mxu0 %v1958
  %v1986 = vpop.f32.mrf.mxu0
  %v1987 = vadd.f32 %v1946, %v1986
  %1988 = vdwg.mxu0
  %v1989 = vmax.f32 %v1978, 0.0
  %v1990 = vmax.f32 %v1981, 0.0
  %v1991 = vmax.f32 %v1984, 0.0
  %v1992 = vmax.f32 %v1987, 0.0
  %v1993 = vld [vmem:[%s17] sm:$0xff]
  %v1994 = vld [vmem:[%s17 + $0x8] sm:$0xff]
  %v1995 = vld [vmem:[%s17 + $0x10] sm:$0xff]
  %v1996 = vld [vmem:[%s17 + $0x18] sm:$0xff]
  %v1997 = vld [vmem:[%s17 + $0x20] sm:$0xff]
  %v1998 = vld [vmem:[%s17 + $0x28] sm:$0xff]
  %v1999 = vld [vmem:[%s17 + $0x30] sm:$0xff]
  %v2000 = vld [vmem:[%s17 + $0x38] sm:$0xff]
  %v2001 = vld [vmem:[%s18] sm:$0x1]
  %v2003 = vperm.slane %v2001, 0
  %v2006 = vsel %vm208, %v1989, 0
  %v2009 = vsel %vm208, %v1990, 0
  %v2012 = vsel %vm208, %v1991, 0
  %v2015 = vsel %vm208, %v1992, 0
  %2017 = vmatpush.msra.mxu0 0.0
  %2018 = vmatpush.msra.mxu0 0.0
  %2019 = vmatpush.msra.mxu0 0.0
  %2020 = vmatpush.msra.mxu0 0.0
  %2021 = vmatpush.msra.mxu0 0.0
  %2022 = vmatpush.msra.mxu0 0.0
  %2023 = vmatpush.msra.mxu0 0.0
  %2024 = vmatpush.msra.mxu0 0.0
  %2025 = vmatpush.msra.mxu0 %v2000
  %2026 = vmatpush.msra.mxu0 %v1999
  %2027 = vmatpush.msra.mxu0 %v1998
  %2028 = vmatpush.msra.mxu0 %v1997
  %2029 = vmatpush.msra.mxu0 %v1996
  %2030 = vmatpush.msra.mxu0 %v1995
  %2031 = vmatpush.msra.mxu0 %v1994
  %2032 = vmatpush.msra.mxu0 %v1993
  %2033 = vmatmul.f32.gmra.mxu0 %v2006
  %v2034 = vpop.f32.mrf.mxu0
  %v2035 = vadd.f32 %v2003, %v2034
  %2036 = vmatmul.f32.gmra.mxu0 %v2009
  %v2037 = vpop.f32.mrf.mxu0
  %v2038 = vadd.f32 %v2003, %v2037
  %2039 = vmatmul.f32.gmra.mxu0 %v2012
  %v2040 = vpop.f32.mrf.mxu0
  %v2041 = vadd.f32 %v2003, %v2040
  %2042 = vmatmul.f32.gmra.mxu0 %v2015
  %v2043 = vpop.f32.mrf.mxu0
  %v2044 = vadd.f32 %v2003, %v2043
  %2045 = vdwg.mxu0
  %v2046 = vadd.f32 %v1936, %v2035
  %v2047 = vadd.f32 %v1937, %v2038
  %v2048 = vadd.f32 %v1938, %v2041
  %v2049 = vadd.f32 %v1939, %v2044
  %v2050 = vld [vmem:[%s19] sm:$0x1]
  %v2051 = vld [vmem:[%s20] sm:$0x1]
  %v2052 = vsel %vm205, %v2046, 0.0
  %2053 = vadd.xlane.f32.xlu0 %v2052
  %v2054 = vpop.xlane.xlu0 %2053
  %v2055 = vsel %vm205, %v2047, 0.0
  %2056 = vadd.xlane.f32.xlu0 %v2055
  %v2057 = vpop.xlane.xlu0 %2056
  %v2058 = vsel %vm205, %v2048, 0.0
  %2059 = vadd.xlane.f32.xlu0 %v2058
  %v2060 = vpop.xlane.xlu0 %2059
  %v2061 = vsel %vm205, %v2049, 0.0
  %2062 = vadd.xlane.f32.xlu0 %v2061
  %v2063 = vpop.xlane.xlu0 %2062
  %v2064 = vmul.f32 %v2054, %v1849
  %v2065 = vmul.f32 %v2057, %v1849
  %v2066 = vmul.f32 %v2060, %v1849
  %v2067 = vmul.f32 %v2063, %v1849
  %v2068 = vsub.f32 %v2046, %v2064
  %v2069 = vsub.f32 %v2047, %v2065
  %v2070 = vsub.f32 %v2048, %v2066
  %v2071 = vsub.f32 %v2049, %v2067
  %v2072 = vmul.f32 %v2068, %v2068
  %v2073 = vmul.f32 %v2069, %v2069
  %v2074 = vmul.f32 %v2070, %v2070
  %v2075 = vmul.f32 %v2071, %v2071
  %v2076 = vsel %vm205, %v2072, 0.0
  %2077 = vadd.xlane.f32.xlu0 %v2076
  %v2078 = vpop.xlane.xlu0 %2077
  %v2079 = vsel %vm205, %v2073, 0.0
  %2080 = vadd.xlane.f32.xlu0 %v2079
  %v2081 = vpop.xlane.xlu0 %2080
  %v2082 = vsel %vm205, %v2074, 0.0
  %2083 = vadd.xlane.f32.xlu0 %v2082
  %v2084 = vpop.xlane.xlu0 %2083
  %v2085 = vsel %vm205, %v2075, 0.0
  %2086 = vadd.xlane.f32.xlu0 %v2085
  %v2087 = vpop.xlane.xlu0 %2086
  %v2088 = vmul.f32 %v2078, %v1849
  %v2089 = vmul.f32 %v2081, %v1849
  %v2090 = vmul.f32 %v2084, %v1849
  %v2091 = vmul.f32 %v2087, %v1849
  %v2092 = vadd.f32 %v2088, 1e-05
  %v2093 = vadd.f32 %v2089, 1e-05
  %v2094 = vadd.f32 %v2090, 1e-05
  %v2095 = vadd.f32 %v2091, 1e-05
  %v2096 = vrsqrt.pop %v2092
  %v2097 = vmul.f32 %v2096, %v2092
  %v2098 = vmul.f32 %v2097, %v2096
  %v2099 = vmul.f32 0.5, %v2098
  %v2100 = vsub.f32 1.5, %v2099
  %v2101 = vmul.f32 %v2096, %v2100
  %vm2102 = vweird.f32 %v2092
  %vm2103 = vweird.f32 %v2096
  %vm2104 = vmor %vm2102, %vm2103
  %v2105 = vsel %vm2104, %v2096, %v2101
  %v2106 = vrsqrt.pop %v2093
  %v2107 = vmul.f32 %v2106, %v2093
  %v2108 = vmul.f32 %v2107, %v2106
  %v2109 = vmul.f32 0.5, %v2108
  %v2110 = vsub.f32 1.5, %v2109
  %v2111 = vmul.f32 %v2106, %v2110
  %vm2112 = vweird.f32 %v2093
  %vm2113 = vweird.f32 %v2106
  %vm2114 = vmor %vm2112, %vm2113
  %v2115 = vsel %vm2114, %v2106, %v2111
  %v2116 = vrsqrt.pop %v2094
  %v2117 = vmul.f32 %v2116, %v2094
  %v2118 = vmul.f32 %v2117, %v2116
  %v2119 = vmul.f32 0.5, %v2118
  %v2120 = vsub.f32 1.5, %v2119
  %v2121 = vmul.f32 %v2116, %v2120
  %vm2122 = vweird.f32 %v2094
  %vm2123 = vweird.f32 %v2116
  %vm2124 = vmor %vm2122, %vm2123
  %v2125 = vsel %vm2124, %v2116, %v2121
  %v2126 = vrsqrt.pop %v2095
  %v2127 = vmul.f32 %v2126, %v2095
  %v2128 = vmul.f32 %v2127, %v2126
  %v2129 = vmul.f32 0.5, %v2128
  %v2130 = vsub.f32 1.5, %v2129
  %v2131 = vmul.f32 %v2126, %v2130
  %vm2132 = vweird.f32 %v2095
  %vm2133 = vweird.f32 %v2126
  %vm2134 = vmor %vm2132, %vm2133
  %v2135 = vsel %vm2134, %v2126, %v2131
  %v2136 = vmul.f32 %v2068, %v2105
  %v2137 = vmul.f32 %v2069, %v2115
  %v2138 = vmul.f32 %v2070, %v2125
  %v2139 = vmul.f32 %v2071, %v2135
  %v2141 = vperm.slane %v2050, 0
  %v2143 = vmul.f32 %v2136, %v2141
  %v2144 = vmul.f32 %v2137, %v2141
  %v2145 = vmul.f32 %v2138, %v2141
  %v2146 = vmul.f32 %v2139, %v2141
  %v2148 = vperm.slane %v2051, 0
  %v2150 = vadd.f32 %v2143, %v2148
  %v2151 = vadd.f32 %v2144, %v2148
  %v2152 = vadd.f32 %v2145, %v2148
  %v2153 = vadd.f32 %v2146, %v2148
  %s2154 = scalar_lea.vmem %s5, 32
  %v2155 = vld [vmem:[%s2154] sm:$0xff]
  %v2156 = vld [vmem:[%s2154 + $0x8] sm:$0xff]
  %v2157 = vld [vmem:[%s2154 + $0x10] sm:$0xff]
  %v2158 = vld [vmem:[%s2154 + $0x18] sm:$0xff]
  %s2159 = scalar_lea.vmem %s6, 1
  %v2160 = vld [vmem:[%s2159] sm:$0x1]
  %v2162 = vperm.slane %v2160, 0
  %v2165 = vsel %vm205, %v2150, 0
  %v2168 = vsel %vm205, %v2151, 0
  %v2171 = vsel %vm205, %v2152, 0
  %v2174 = vsel %vm205, %v2153, 0
  %2176 = vmatpush.msra.mxu0 0.0
  %2177 = vmatpush.msra.mxu0 0.0
  %2178 = vmatpush.msra.mxu0 0.0
  %2179 = vmatpush.msra.mxu0 0.0
  %2180 = vmatpush.msra.mxu0 0.0
  %2181 = vmatpush.msra.mxu0 0.0
  %2182 = vmatpush.msra.mxu0 0.0
  %2183 = vmatpush.msra.mxu0 0.0
  %2184 = vmatpush.msra.mxu0 0.0
  %2185 = vmatpush.msra.mxu0 0.0
  %2186 = vmatpush.msra.mxu0 0.0
  %2187 = vmatpush.msra.mxu0 0.0
  %2188 = vmatpush.msra.mxu0 %v2158
  %2189 = vmatpush.msra.mxu0 %v2157
  %2190 = vmatpush.msra.mxu0 %v2156
  %2191 = vmatpush.msra.mxu0 %v2155
  %2192 = vmatmul.f32.gmra.mxu0 %v2165
  %v2193 = vpop.f32.mrf.mxu0
  %v2194 = vadd.f32 %v2162, %v2193
  %2195 = vmatmul.f32.gmra.mxu0 %v2168
  %v2196 = vpop.f32.mrf.mxu0
  %v2197 = vadd.f32 %v2162, %v2196
  %2198 = vmatmul.f32.gmra.mxu0 %v2171
  %v2199 = vpop.f32.mrf.mxu0
  %v2200 = vadd.f32 %v2162, %v2199
  %2201 = vmatmul.f32.gmra.mxu0 %v2174
  %v2202 = vpop.f32.mrf.mxu0
  %v2203 = vadd.f32 %v2162, %v2202
  %2204 = vdwg.mxu0
  %s2205 = scalar_lea.vmem %s7, 32
  %v2206 = vld [vmem:[%s2205] sm:$0xff]
  %v2207 = vld [vmem:[%s2205 + $0x8] sm:$0xff]
  %v2208 = vld [vmem:[%s2205 + $0x10] sm:$0xff]
  %v2209 = vld [vmem:[%s2205 + $0x18] sm:$0xff]
  %s2210 = scalar_lea.vmem %s8, 1
  %v2211 = vld [vmem:[%s2210] sm:$0x1]
  %v2213 = vperm.slane %v2211, 0
  %2215 = vmatpush.msra.mxu0 0.0
  %2216 = vmatpush.msra.mxu0 0.0
  %2217 = vmatpush.msra.mxu0 0.0
  %2218 = vmatpush.msra.mxu0 0.0
  %2219 = vmatpush.msra.mxu0 0.0
  %2220 = vmatpush.msra.mxu0 0.0
  %2221 = vmatpush.msra.mxu0 0.0
  %2222 = vmatpush.msra.mxu0 0.0
  %2223 = vmatpush.msra.mxu0 0.0
  %2224 = vmatpush.msra.mxu0 0.0
  %2225 = vmatpush.msra.mxu0 0.0
  %2226 = vmatpush.msra.mxu0 0.0
  %2227 = vmatpush.msra.mxu0 %v2209
  %2228 = vmatpush.msra.mxu0 %v2208
  %2229 = vmatpush.msra.mxu0 %v2207
  %2230 = vmatpush.msra.mxu0 %v2206
  %2231 = vmatmul.f32.gmra.mxu0 %v2165
  %v2232 = vpop.f32.mrf.mxu0
  %v2233 = vadd.f32 %v2213, %v2232
  %2234 = vmatmul.f32.gmra.mxu0 %v2168
  %v2235 = vpop.f32.mrf.mxu0
  %v2236 = vadd.f32 %v2213, %v2235
  %2237 = vmatmul.f32.gmra.mxu0 %v2171
  %v2238 = vpop.f32.mrf.mxu0
  %v2239 = vadd.f32 %v2213, %v2238
  %2240 = vmatmul.f32.gmra.mxu0 %v2174
  %v2241 = vpop.f32.mrf.mxu0
  %v2242 = vadd.f32 %v2213, %v2241
  %2243 = vdwg.mxu0
  %s2244 = scalar_lea.vmem %s9, 32
  %v2245 = vld [vmem:[%s2244] sm:$0xff]
  %v2246 = vld [vmem:[%s2244 + $0x8] sm:$0xff]
  %v2247 = vld [vmem:[%s2244 + $0x10] sm:$0xff]
  %v2248 = vld [vmem:[%s2244 + $0x18] sm:$0xff]
  %s2249 = scalar_lea.vmem %s10, 1
  %v2250 = vld [vmem:[%s2249] sm:$0x1]
  %v2252 = vperm.slane %v2250, 0
  %2254 = vmatpush.msra.mxu0 0.0
  %2255 = vmatpush.msra.mxu0 0.0
  %2256 = vmatpush.msra.mxu0 0.0
  %2257 = vmatpush.msra.mxu0 0.0
  %2258 = vmatpush.msra.mxu0 0.0
  %2259 = vmatpush.msra.mxu0 0.0
  %2260 = vmatpush.msra.mxu0 0.0
  %2261 = vmatpush.msra.mxu0 0.0
  %2262 = vmatpush.msra.mxu0 0.0
  %2263 = vmatpush.msra.mxu0 0.0
  %2264 = vmatpush.msra.mxu0 0.0
  %2265 = vmatpush.msra.mxu0 0.0
  %2266 = vmatpush.msra.mxu0 %v2248
  %2267 = vmatpush.msra.mxu0 %v2247
  %2268 = vmatpush.msra.mxu0 %v2246
  %2269 = vmatpush.msra.mxu0 %v2245
  %2270 = vmatmul.f32.gmra.mxu0 %v2165
  %v2271 = vpop.f32.mrf.mxu0
  %v2272 = vadd.f32 %v2252, %v2271
  %2273 = vmatmul.f32.gmra.mxu0 %v2168
  %v2274 = vpop.f32.mrf.mxu0
  %v2275 = vadd.f32 %v2252, %v2274
  %2276 = vmatmul.f32.gmra.mxu0 %v2171
  %v2277 = vpop.f32.mrf.mxu0
  %v2278 = vadd.f32 %v2252, %v2277
  %2279 = vmatmul.f32.gmra.mxu0 %v2174
  %v2280 = vpop.f32.mrf.mxu0
  %v2281 = vadd.f32 %v2252, %v2280
  %2282 = vdwg.mxu0
  %v2284 = vsel %vm934, %v2194, 0
  %v2287 = vsel %vm934, %v2197, 0
  %v2290 = vsel %vm934, %v2233, 0
  %v2293 = vsel %vm934, %v2236, 0
  %2295 = vmatpush.xpose.msra.mxu0 0.0
  %2296 = vmatpush.xpose.msra.mxu0 0.0
  %2297 = vmatpush.xpose.msra.mxu0 0.0
  %2298 = vmatpush.xpose.msra.mxu0 0.0
  %2299 = vmatpush.xpose.msra.mxu0 0.0
  %2300 = vmatpush.xpose.msra.mxu0 0.0
  %2301 = vmatpush.xpose.msra.mxu0 0.0
  %2302 = vmatpush.xpose.msra.mxu0 0.0
  %2303 = vmatpush.xpose.msra.mxu0 0.0
  %2304 = vmatpush.xpose.msra.mxu0 0.0
  %2305 = vmatpush.xpose.msra.mxu0 0.0
  %2306 = vmatpush.xpose.msra.mxu0 0.0
  %2307 = vmatpush.xpose.msra.mxu0 0.0
  %2308 = vmatpush.xpose.msra.mxu0 0.0
  %2309 = vmatpush.xpose.msra.mxu0 %v2293
  %2310 = vmatpush.xpose.msra.mxu0 %v2290
  %2311 = vmatmul.f32.gmra.mxu0 %v2284
  %v2312 = vpop.f32.mrf.mxu0
  %v2313 = vadd.f32 0.0, %v2312
  %2314 = vmatmul.f32.gmra.mxu0 %v2287
  %v2315 = vpop.f32.mrf.mxu0
  %v2316 = vadd.f32 0.0, %v2315
  %2317 = vdwg.mxu0
  %v2318 = vmul.f32 %v2313, 0.35355338
  %v2319 = vmul.f32 %v2316, 0.35355338
  %v2320 = vsel %vm972, %v2318, -inf
  %2321 = vmax.xlane.f32.xlu0 %v2320
  %v2322 = vpop.xlane.xlu0 %2321
  %v2323 = vsel %vm972, %v2319, -inf
  %2324 = vmax.xlane.f32.xlu0 %v2323
  %v2325 = vpop.xlane.xlu0 %2324
  %v2326 = vsub.f32 %v2318, %v2322
  %v2327 = vsub.f32 %v2319, %v2325
  %v2328 = vmul.f32 %v2326, 1.442695
  %v2329 = vpow.pop %v2328
  %v2330 = vmul.f32 %v2327, 1.442695
  %v2331 = vpow.pop %v2330
  %v2332 = vsel %vm972, %v2329, 0.0
  %2333 = vadd.xlane.f32.xlu0 %v2332
  %v2334 = vpop.xlane.xlu0 %2333
  %v2335 = vsel %vm972, %v2331, 0.0
  %2336 = vadd.xlane.f32.xlu0 %v2335
  %v2337 = vpop.xlane.xlu0 %2336
  %v2338 = vrcp.pop %v2334
  %v2339 = vrcp.pop %v2337
  %v2340 = vmul.f32 %v2329, %v2338
  %v2341 = vmul.f32 %v2331, %v2339
  %v2343 = vsel %vm972, %v2340, 0
  %v2346 = vsel %vm972, %v2341, 0
  %v2349 = vsel %vm193, %v2275, 0
  %2351 = vmatpush.msra.mxu0 0.0
  %2352 = vmatpush.msra.mxu0 0.0
  %2353 = vmatpush.msra.mxu0 0.0
  %2354 = vmatpush.msra.mxu0 0.0
  %2355 = vmatpush.msra.mxu0 0.0
  %2356 = vmatpush.msra.mxu0 0.0
  %2357 = vmatpush.msra.mxu0 0.0
  %2358 = vmatpush.msra.mxu0 0.0
  %2359 = vmatpush.msra.mxu0 0.0
  %2360 = vmatpush.msra.mxu0 0.0
  %2361 = vmatpush.msra.mxu0 0.0
  %2362 = vmatpush.msra.mxu0 0.0
  %2363 = vmatpush.msra.mxu0 0.0
  %2364 = vmatpush.msra.mxu0 0.0
  %2365 = vmatpush.msra.mxu0 %v2349
  %2366 = vmatpush.msra.mxu0 %v2272
  %2367 = vmatmul.f32.gmra.mxu0 %v2343
  %v2368 = vpop.f32.mrf.mxu0
  %v2369 = vadd.f32 0.0, %v2368
  %2370 = vmatmul.f32.gmra.mxu0 %v2346
  %v2371 = vpop.f32.mrf.mxu0
  %v2372 = vadd.f32 0.0, %v2371
  %2373 = vdwg.mxu0
  %2374 = vrot.lane.b32.xlu0 %v2194, 120
  %v2375 = vpop.permute.xlu0 %2374
  %2376 = vrot.lane.b32.xlu0 %v2197, 120
  %v2377 = vpop.permute.xlu0 %2376
  %2378 = vrot.lane.b32.xlu0 %v2233, 120
  %v2379 = vpop.permute.xlu0 %2378
  %2380 = vrot.lane.b32.xlu0 %v2236, 120
  %v2381 = vpop.permute.xlu0 %2380
  %v2382 = vsel %vm934, %v2375, 0
  %v2384 = vsel %vm934, %v2377, 0
  %v2386 = vsel %vm934, %v2379, 0
  %v2388 = vsel %vm934, %v2381, 0
  %2390 = vmatpush.xpose.msra.mxu0 0.0
  %2391 = vmatpush.xpose.msra.mxu0 0.0
  %2392 = vmatpush.xpose.msra.mxu0 0.0
  %2393 = vmatpush.xpose.msra.mxu0 0.0
  %2394 = vmatpush.xpose.msra.mxu0 0.0
  %2395 = vmatpush.xpose.msra.mxu0 0.0
  %2396 = vmatpush.xpose.msra.mxu0 0.0
  %2397 = vmatpush.xpose.msra.mxu0 0.0
  %2398 = vmatpush.xpose.msra.mxu0 0.0
  %2399 = vmatpush.xpose.msra.mxu0 0.0
  %2400 = vmatpush.xpose.msra.mxu0 0.0
  %2401 = vmatpush.xpose.msra.mxu0 0.0
  %2402 = vmatpush.xpose.msra.mxu0 0.0
  %2403 = vmatpush.xpose.msra.mxu0 0.0
  %2404 = vmatpush.xpose.msra.mxu0 %v2388
  %2405 = vmatpush.xpose.msra.mxu0 %v2386
  %2406 = vmatmul.f32.gmra.mxu0 %v2382
  %v2407 = vpop.f32.mrf.mxu0
  %v2408 = vadd.f32 0.0, %v2407
  %2409 = vmatmul.f32.gmra.mxu0 %v2384
  %v2410 = vpop.f32.mrf.mxu0
  %v2411 = vadd.f32 0.0, %v2410
  %2412 = vdwg.mxu0
  %v2413 = vmul.f32 %v2408, 0.35355338
  %v2414 = vmul.f32 %v2411, 0.35355338
  %v2415 = vsel %vm972, %v2413, -inf
  %2416 = vmax.xlane.f32.xlu0 %v2415
  %v2417 = vpop.xlane.xlu0 %2416
  %v2418 = vsel %vm972, %v2414, -inf
  %2419 = vmax.xlane.f32.xlu0 %v2418
  %v2420 = vpop.xlane.xlu0 %2419
  %v2421 = vsub.f32 %v2413, %v2417
  %v2422 = vsub.f32 %v2414, %v2420
  %v2423 = vmul.f32 %v2421, 1.442695
  %v2424 = vpow.pop %v2423
  %v2425 = vmul.f32 %v2422, 1.442695
  %v2426 = vpow.pop %v2425
  %v2427 = vsel %vm972, %v2424, 0.0
  %2428 = vadd.xlane.f32.xlu0 %v2427
  %v2429 = vpop.xlane.xlu0 %2428
  %v2430 = vsel %vm972, %v2426, 0.0
  %2431 = vadd.xlane.f32.xlu0 %v2430
  %v2432 = vpop.xlane.xlu0 %2431
  %v2433 = vrcp.pop %v2429
  %v2434 = vrcp.pop %v2432
  %v2435 = vmul.f32 %v2424, %v2433
  %v2436 = vmul.f32 %v2426, %v2434
  %2438 = vrot.lane.b32.xlu0 %v2272, 120
  %v2439 = vpop.permute.xlu0 %2438
  %2440 = vrot.lane.b32.xlu0 %v2275, 120
  %v2441 = vpop.permute.xlu0 %2440
  %v2444 = vsel %vm972, %v2435, 0
  %v2447 = vsel %vm972, %v2436, 0
  %v2449 = vsel %vm193, %v2441, 0
  %2451 = vmatpush.msra.mxu0 0.0
  %2452 = vmatpush.msra.mxu0 0.0
  %2453 = vmatpush.msra.mxu0 0.0
  %2454 = vmatpush.msra.mxu0 0.0
  %2455 = vmatpush.msra.mxu0 0.0
  %2456 = vmatpush.msra.mxu0 0.0
  %2457 = vmatpush.msra.mxu0 0.0
  %2458 = vmatpush.msra.mxu0 0.0
  %2459 = vmatpush.msra.mxu0 0.0
  %2460 = vmatpush.msra.mxu0 0.0
  %2461 = vmatpush.msra.mxu0 0.0
  %2462 = vmatpush.msra.mxu0 0.0
  %2463 = vmatpush.msra.mxu0 0.0
  %2464 = vmatpush.msra.mxu0 0.0
  %2465 = vmatpush.msra.mxu0 %v2449
  %2466 = vmatpush.msra.mxu0 %v2439
  %2467 = vmatmul.f32.gmra.mxu0 %v2444
  %v2468 = vpop.f32.mrf.mxu0
  %v2469 = vadd.f32 0.0, %v2468
  %2470 = vmatmul.f32.gmra.mxu0 %v2447
  %v2471 = vpop.f32.mrf.mxu0
  %v2472 = vadd.f32 0.0, %v2471
  %2473 = vdwg.mxu0
  %2474 = vrot.lane.b32.xlu0 %v2194, 112
  %v2475 = vpop.permute.xlu0 %2474
  %2476 = vrot.lane.b32.xlu0 %v2197, 112
  %v2477 = vpop.permute.xlu0 %2476
  %2478 = vrot.lane.b32.xlu0 %v2233, 112
  %v2479 = vpop.permute.xlu0 %2478
  %2480 = vrot.lane.b32.xlu0 %v2236, 112
  %v2481 = vpop.permute.xlu0 %2480
  %v2482 = vsel %vm934, %v2475, 0
  %v2484 = vsel %vm934, %v2477, 0
  %v2486 = vsel %vm934, %v2479, 0
  %v2488 = vsel %vm934, %v2481, 0
  %2490 = vmatpush.xpose.msra.mxu0 0.0
  %2491 = vmatpush.xpose.msra.mxu0 0.0
  %2492 = vmatpush.xpose.msra.mxu0 0.0
  %2493 = vmatpush.xpose.msra.mxu0 0.0
  %2494 = vmatpush.xpose.msra.mxu0 0.0
  %2495 = vmatpush.xpose.msra.mxu0 0.0
  %2496 = vmatpush.xpose.msra.mxu0 0.0
  %2497 = vmatpush.xpose.msra.mxu0 0.0
  %2498 = vmatpush.xpose.msra.mxu0 0.0
  %2499 = vmatpush.xpose.msra.mxu0 0.0
  %2500 = vmatpush.xpose.msra.mxu0 0.0
  %2501 = vmatpush.xpose.msra.mxu0 0.0
  %2502 = vmatpush.xpose.msra.mxu0 0.0
  %2503 = vmatpush.xpose.msra.mxu0 0.0
  %2504 = vmatpush.xpose.msra.mxu0 %v2488
  %2505 = vmatpush.xpose.msra.mxu0 %v2486
  %2506 = vmatmul.f32.gmra.mxu0 %v2482
  %v2507 = vpop.f32.mrf.mxu0
  %v2508 = vadd.f32 0.0, %v2507
  %2509 = vmatmul.f32.gmra.mxu0 %v2484
  %v2510 = vpop.f32.mrf.mxu0
  %v2511 = vadd.f32 0.0, %v2510
  %2512 = vdwg.mxu0
  %v2513 = vmul.f32 %v2508, 0.35355338
  %v2514 = vmul.f32 %v2511, 0.35355338
  %v2515 = vsel %vm972, %v2513, -inf
  %2516 = vmax.xlane.f32.xlu0 %v2515
  %v2517 = vpop.xlane.xlu0 %2516
  %v2518 = vsel %vm972, %v2514, -inf
  %2519 = vmax.xlane.f32.xlu0 %v2518
  %v2520 = vpop.xlane.xlu0 %2519
  %v2521 = vsub.f32 %v2513, %v2517
  %v2522 = vsub.f32 %v2514, %v2520
  %v2523 = vmul.f32 %v2521, 1.442695
  %v2524 = vpow.pop %v2523
  %v2525 = vmul.f32 %v2522, 1.442695
  %v2526 = vpow.pop %v2525
  %v2527 = vsel %vm972, %v2524, 0.0
  %2528 = vadd.xlane.f32.xlu0 %v2527
  %v2529 = vpop.xlane.xlu0 %2528
  %v2530 = vsel %vm972, %v2526, 0.0
  %2531 = vadd.xlane.f32.xlu0 %v2530
  %v2532 = vpop.xlane.xlu0 %2531
  %v2533 = vrcp.pop %v2529
  %v2534 = vrcp.pop %v2532
  %v2535 = vmul.f32 %v2524, %v2533
  %v2536 = vmul.f32 %v2526, %v2534
  %2537 = vrot.lane.b32.xlu0 %v2272, 112
  %v2538 = vpop.permute.xlu0 %2537
  %2539 = vrot.lane.b32.xlu0 %v2275, 112
  %v2540 = vpop.permute.xlu0 %2539
  %v2543 = vsel %vm972, %v2535, 0
  %v2546 = vsel %vm972, %v2536, 0
  %v2548 = vsel %vm193, %v2540, 0
  %2550 = vmatpush.msra.mxu0 0.0
  %2551 = vmatpush.msra.mxu0 0.0
  %2552 = vmatpush.msra.mxu0 0.0
  %2553 = vmatpush.msra.mxu0 0.0
  %2554 = vmatpush.msra.mxu0 0.0
  %2555 = vmatpush.msra.mxu0 0.0
  %2556 = vmatpush.msra.mxu0 0.0
  %2557 = vmatpush.msra.mxu0 0.0
  %2558 = vmatpush.msra.mxu0 0.0
  %2559 = vmatpush.msra.mxu0 0.0
  %2560 = vmatpush.msra.mxu0 0.0
  %2561 = vmatpush.msra.mxu0 0.0
  %2562 = vmatpush.msra.mxu0 0.0
  %2563 = vmatpush.msra.mxu0 0.0
  %2564 = vmatpush.msra.mxu0 %v2548
  %2565 = vmatpush.msra.mxu0 %v2538
  %2566 = vmatmul.f32.gmra.mxu0 %v2543
  %v2567 = vpop.f32.mrf.mxu0
  %v2568 = vadd.f32 0.0, %v2567
  %2569 = vmatmul.f32.gmra.mxu0 %v2546
  %v2570 = vpop.f32.mrf.mxu0
  %v2571 = vadd.f32 0.0, %v2570
  %2572 = vdwg.mxu0
  %2573 = vrot.lane.b32.xlu0 %v2194, 104
  %v2574 = vpop.permute.xlu0 %2573
  %2575 = vrot.lane.b32.xlu0 %v2197, 104
  %v2576 = vpop.permute.xlu0 %2575
  %2577 = vrot.lane.b32.xlu0 %v2233, 104
  %v2578 = vpop.permute.xlu0 %2577
  %2579 = vrot.lane.b32.xlu0 %v2236, 104
  %v2580 = vpop.permute.xlu0 %2579
  %v2581 = vsel %vm934, %v2574, 0
  %v2583 = vsel %vm934, %v2576, 0
  %v2585 = vsel %vm934, %v2578, 0
  %v2587 = vsel %vm934, %v2580, 0
  %2589 = vmatpush.xpose.msra.mxu0 0.0
  %2590 = vmatpush.xpose.msra.mxu0 0.0
  %2591 = vmatpush.xpose.msra.mxu0 0.0
  %2592 = vmatpush.xpose.msra.mxu0 0.0
  %2593 = vmatpush.xpose.msra.mxu0 0.0
  %2594 = vmatpush.xpose.msra.mxu0 0.0
  %2595 = vmatpush.xpose.msra.mxu0 0.0
  %2596 = vmatpush.xpose.msra.mxu0 0.0
  %2597 = vmatpush.xpose.msra.mxu0 0.0
  %2598 = vmatpush.xpose.msra.mxu0 0.0
  %2599 = vmatpush.xpose.msra.mxu0 0.0
  %2600 = vmatpush.xpose.msra.mxu0 0.0
  %2601 = vmatpush.xpose.msra.mxu0 0.0
  %2602 = vmatpush.xpose.msra.mxu0 0.0
  %2603 = vmatpush.xpose.msra.mxu0 %v2587
  %2604 = vmatpush.xpose.msra.mxu0 %v2585
  %2605 = vmatmul.f32.gmra.mxu0 %v2581
  %v2606 = vpop.f32.mrf.mxu0
  %v2607 = vadd.f32 0.0, %v2606
  %2608 = vmatmul.f32.gmra.mxu0 %v2583
  %v2609 = vpop.f32.mrf.mxu0
  %v2610 = vadd.f32 0.0, %v2609
  %2611 = vdwg.mxu0
  %v2612 = vmul.f32 %v2607, 0.35355338
  %v2613 = vmul.f32 %v2610, 0.35355338
  %v2614 = vsel %vm972, %v2612, -inf
  %2615 = vmax.xlane.f32.xlu0 %v2614
  %v2616 = vpop.xlane.xlu0 %2615
  %v2617 = vsel %vm972, %v2613, -inf
  %2618 = vmax.xlane.f32.xlu0 %v2617
  %v2619 = vpop.xlane.xlu0 %2618
  %v2620 = vsub.f32 %v2612, %v2616
  %v2621 = vsub.f32 %v2613, %v2619
  %v2622 = vmul.f32 %v2620, 1.442695
  %v2623 = vpow.pop %v2622
  %v2624 = vmul.f32 %v2621, 1.442695
  %v2625 = vpow.pop %v2624
  %v2626 = vsel %vm972, %v2623, 0.0
  %2627 = vadd.xlane.f32.xlu0 %v2626
  %v2628 = vpop.xlane.xlu0 %2627
  %v2629 = vsel %vm972, %v2625, 0.0
  %2630 = vadd.xlane.f32.xlu0 %v2629
  %v2631 = vpop.xlane.xlu0 %2630
  %v2632 = vrcp.pop %v2628
  %v2633 = vrcp.pop %v2631
  %v2634 = vmul.f32 %v2623, %v2632
  %v2635 = vmul.f32 %v2625, %v2633
  %2636 = vrot.lane.b32.xlu0 %v2272, 104
  %v2637 = vpop.permute.xlu0 %2636
  %2638 = vrot.lane.b32.xlu0 %v2275, 104
  %v2639 = vpop.permute.xlu0 %2638
  %v2642 = vsel %vm972, %v2634, 0
  %v2645 = vsel %vm972, %v2635, 0
  %v2647 = vsel %vm193, %v2639, 0
  %2649 = vmatpush.msra.mxu0 0.0
  %2650 = vmatpush.msra.mxu0 0.0
  %2651 = vmatpush.msra.mxu0 0.0
  %2652 = vmatpush.msra.mxu0 0.0
  %2653 = vmatpush.msra.mxu0 0.0
  %2654 = vmatpush.msra.mxu0 0.0
  %2655 = vmatpush.msra.mxu0 0.0
  %2656 = vmatpush.msra.mxu0 0.0
  %2657 = vmatpush.msra.mxu0 0.0
  %2658 = vmatpush.msra.mxu0 0.0
  %2659 = vmatpush.msra.mxu0 0.0
  %2660 = vmatpush.msra.mxu0 0.0
  %2661 = vmatpush.msra.mxu0 0.0
  %2662 = vmatpush.msra.mxu0 0.0
  %2663 = vmatpush.msra.mxu0 %v2647
  %2664 = vmatpush.msra.mxu0 %v2637
  %2665 = vmatmul.f32.gmra.mxu0 %v2642
  %v2666 = vpop.f32.mrf.mxu0
  %v2667 = vadd.f32 0.0, %v2666
  %2668 = vmatmul.f32.gmra.mxu0 %v2645
  %v2669 = vpop.f32.mrf.mxu0
  %v2670 = vadd.f32 0.0, %v2669
  %2671 = vdwg.mxu0
  %2674 = vrot.lane.b32.xlu0 %v2469, 8
  %v2675 = vpop.permute.xlu0 %2674
  %2676 = vrot.lane.b32.xlu0 %v2472, 8
  %v2677 = vpop.permute.xlu0 %2676
  %2682 = vrot.lane.b32.xlu0 %v2568, 16
  %v2683 = vpop.permute.xlu0 %2682
  %2684 = vrot.lane.b32.xlu0 %v2571, 16
  %v2685 = vpop.permute.xlu0 %2684
  %2690 = vrot.lane.b32.xlu0 %v2667, 24
  %v2691 = vpop.permute.xlu0 %2690
  %2692 = vrot.lane.b32.xlu0 %v2670, 24
  %v2693 = vpop.permute.xlu0 %2692
  %v2696 = vsel %vm934, %v2369, %v2675
  %v2697 = vsel %vm934, %v2372, %v2677
  %v2698 = vsel %vm1351, %v2696, %v2683
  %v2699 = vsel %vm1351, %v2697, %v2685
  %v2700 = vsel %vm1354, %v2698, %v2691
  %v2701 = vsel %vm1354, %v2699, %v2693
  %v2703 = vsel %vm934, %v2200, 0
  %v2706 = vsel %vm934, %v2203, 0
  %v2709 = vsel %vm934, %v2239, 0
  %v2712 = vsel %vm934, %v2242, 0
  %2714 = vmatpush.xpose.msra.mxu0 0.0
  %2715 = vmatpush.xpose.msra.mxu0 0.0
  %2716 = vmatpush.xpose.msra.mxu0 0.0
  %2717 = vmatpush.xpose.msra.mxu0 0.0
  %2718 = vmatpush.xpose.msra.mxu0 0.0
  %2719 = vmatpush.xpose.msra.mxu0 0.0
  %2720 = vmatpush.xpose.msra.mxu0 0.0
  %2721 = vmatpush.xpose.msra.mxu0 0.0
  %2722 = vmatpush.xpose.msra.mxu0 0.0
  %2723 = vmatpush.xpose.msra.mxu0 0.0
  %2724 = vmatpush.xpose.msra.mxu0 0.0
  %2725 = vmatpush.xpose.msra.mxu0 0.0
  %2726 = vmatpush.xpose.msra.mxu0 0.0
  %2727 = vmatpush.xpose.msra.mxu0 0.0
  %2728 = vmatpush.xpose.msra.mxu0 %v2712
  %2729 = vmatpush.xpose.msra.mxu0 %v2709
  %2730 = vmatmul.f32.gmra.mxu0 %v2703
  %v2731 = vpop.f32.mrf.mxu0
  %v2732 = vadd.f32 0.0, %v2731
  %2733 = vmatmul.f32.gmra.mxu0 %v2706
  %v2734 = vpop.f32.mrf.mxu0
  %v2735 = vadd.f32 0.0, %v2734
  %2736 = vdwg.mxu0
  %v2737 = vmul.f32 %v2732, 0.35355338
  %v2738 = vmul.f32 %v2735, 0.35355338
  %v2739 = vsel %vm972, %v2737, -inf
  %2740 = vmax.xlane.f32.xlu0 %v2739
  %v2741 = vpop.xlane.xlu0 %2740
  %v2742 = vsel %vm972, %v2738, -inf
  %2743 = vmax.xlane.f32.xlu0 %v2742
  %v2744 = vpop.xlane.xlu0 %2743
  %v2745 = vsub.f32 %v2737, %v2741
  %v2746 = vsub.f32 %v2738, %v2744
  %v2747 = vmul.f32 %v2745, 1.442695
  %v2748 = vpow.pop %v2747
  %v2749 = vmul.f32 %v2746, 1.442695
  %v2750 = vpow.pop %v2749
  %v2751 = vsel %vm972, %v2748, 0.0
  %2752 = vadd.xlane.f32.xlu0 %v2751
  %v2753 = vpop.xlane.xlu0 %2752
  %v2754 = vsel %vm972, %v2750, 0.0
  %2755 = vadd.xlane.f32.xlu0 %v2754
  %v2756 = vpop.xlane.xlu0 %2755
  %v2757 = vrcp.pop %v2753
  %v2758 = vrcp.pop %v2756
  %v2759 = vmul.f32 %v2748, %v2757
  %v2760 = vmul.f32 %v2750, %v2758
  %v2762 = vsel %vm972, %v2759, 0
  %v2765 = vsel %vm972, %v2760, 0
  %v2768 = vsel %vm193, %v2281, 0
  %2770 = vmatpush.msra.mxu0 0.0
  %2771 = vmatpush.msra.mxu0 0.0
  %2772 = vmatpush.msra.mxu0 0.0
  %2773 = vmatpush.msra.mxu0 0.0
  %2774 = vmatpush.msra.mxu0 0.0
  %2775 = vmatpush.msra.mxu0 0.0
  %2776 = vmatpush.msra.mxu0 0.0
  %2777 = vmatpush.msra.mxu0 0.0
  %2778 = vmatpush.msra.mxu0 0.0
  %2779 = vmatpush.msra.mxu0 0.0
  %2780 = vmatpush.msra.mxu0 0.0
  %2781 = vmatpush.msra.mxu0 0.0
  %2782 = vmatpush.msra.mxu0 0.0
  %2783 = vmatpush.msra.mxu0 0.0
  %2784 = vmatpush.msra.mxu0 %v2768
  %2785 = vmatpush.msra.mxu0 %v2278
  %2786 = vmatmul.f32.gmra.mxu0 %v2762
  %v2787 = vpop.f32.mrf.mxu0
  %v2788 = vadd.f32 0.0, %v2787
  %2789 = vmatmul.f32.gmra.mxu0 %v2765
  %v2790 = vpop.f32.mrf.mxu0
  %v2791 = vadd.f32 0.0, %v2790
  %2792 = vdwg.mxu0
  %2793 = vrot.lane.b32.xlu0 %v2200, 120
  %v2794 = vpop.permute.xlu0 %2793
  %2795 = vrot.lane.b32.xlu0 %v2203, 120
  %v2796 = vpop.permute.xlu0 %2795
  %2797 = vrot.lane.b32.xlu0 %v2239, 120
  %v2798 = vpop.permute.xlu0 %2797
  %2799 = vrot.lane.b32.xlu0 %v2242, 120
  %v2800 = vpop.permute.xlu0 %2799
  %v2801 = vsel %vm934, %v2794, 0
  %v2803 = vsel %vm934, %v2796, 0
  %v2805 = vsel %vm934, %v2798, 0
  %v2807 = vsel %vm934, %v2800, 0
  %2809 = vmatpush.xpose.msra.mxu0 0.0
  %2810 = vmatpush.xpose.msra.mxu0 0.0
  %2811 = vmatpush.xpose.msra.mxu0 0.0
  %2812 = vmatpush.xpose.msra.mxu0 0.0
  %2813 = vmatpush.xpose.msra.mxu0 0.0
  %2814 = vmatpush.xpose.msra.mxu0 0.0
  %2815 = vmatpush.xpose.msra.mxu0 0.0
  %2816 = vmatpush.xpose.msra.mxu0 0.0
  %2817 = vmatpush.xpose.msra.mxu0 0.0
  %2818 = vmatpush.xpose.msra.mxu0 0.0
  %2819 = vmatpush.xpose.msra.mxu0 0.0
  %2820 = vmatpush.xpose.msra.mxu0 0.0
  %2821 = vmatpush.xpose.msra.mxu0 0.0
  %2822 = vmatpush.xpose.msra.mxu0 0.0
  %2823 = vmatpush.xpose.msra.mxu0 %v2807
  %2824 = vmatpush.xpose.msra.mxu0 %v2805
  %2825 = vmatmul.f32.gmra.mxu0 %v2801
  %v2826 = vpop.f32.mrf.mxu0
  %v2827 = vadd.f32 0.0, %v2826
  %2828 = vmatmul.f32.gmra.mxu0 %v2803
  %v2829 = vpop.f32.mrf.mxu0
  %v2830 = vadd.f32 0.0, %v2829
  %2831 = vdwg.mxu0
  %v2832 = vmul.f32 %v2827, 0.35355338
  %v2833 = vmul.f32 %v2830, 0.35355338
  %v2834 = vsel %vm972, %v2832, -inf
  %2835 = vmax.xlane.f32.xlu0 %v2834
  %v2836 = vpop.xlane.xlu0 %2835
  %v2837 = vsel %vm972, %v2833, -inf
  %2838 = vmax.xlane.f32.xlu0 %v2837
  %v2839 = vpop.xlane.xlu0 %2838
  %v2840 = vsub.f32 %v2832, %v2836
  %v2841 = vsub.f32 %v2833, %v2839
  %v2842 = vmul.f32 %v2840, 1.442695
  %v2843 = vpow.pop %v2842
  %v2844 = vmul.f32 %v2841, 1.442695
  %v2845 = vpow.pop %v2844
  %v2846 = vsel %vm972, %v2843, 0.0
  %2847 = vadd.xlane.f32.xlu0 %v2846
  %v2848 = vpop.xlane.xlu0 %2847
  %v2849 = vsel %vm972, %v2845, 0.0
  %2850 = vadd.xlane.f32.xlu0 %v2849
  %v2851 = vpop.xlane.xlu0 %2850
  %v2852 = vrcp.pop %v2848
  %v2853 = vrcp.pop %v2851
  %v2854 = vmul.f32 %v2843, %v2852
  %v2855 = vmul.f32 %v2845, %v2853
  %2857 = vrot.lane.b32.xlu0 %v2278, 120
  %v2858 = vpop.permute.xlu0 %2857
  %2859 = vrot.lane.b32.xlu0 %v2281, 120
  %v2860 = vpop.permute.xlu0 %2859
  %v2863 = vsel %vm972, %v2854, 0
  %v2866 = vsel %vm972, %v2855, 0
  %v2868 = vsel %vm193, %v2860, 0
  %2870 = vmatpush.msra.mxu0 0.0
  %2871 = vmatpush.msra.mxu0 0.0
  %2872 = vmatpush.msra.mxu0 0.0
  %2873 = vmatpush.msra.mxu0 0.0
  %2874 = vmatpush.msra.mxu0 0.0
  %2875 = vmatpush.msra.mxu0 0.0
  %2876 = vmatpush.msra.mxu0 0.0
  %2877 = vmatpush.msra.mxu0 0.0
  %2878 = vmatpush.msra.mxu0 0.0
  %2879 = vmatpush.msra.mxu0 0.0
  %2880 = vmatpush.msra.mxu0 0.0
  %2881 = vmatpush.msra.mxu0 0.0
  %2882 = vmatpush.msra.mxu0 0.0
  %2883 = vmatpush.msra.mxu0 0.0
  %2884 = vmatpush.msra.mxu0 %v2868
  %2885 = vmatpush.msra.mxu0 %v2858
  %2886 = vmatmul.f32.gmra.mxu0 %v2863
  %v2887 = vpop.f32.mrf.mxu0
  %v2888 = vadd.f32 0.0, %v2887
  %2889 = vmatmul.f32.gmra.mxu0 %v2866
  %v2890 = vpop.f32.mrf.mxu0
  %v2891 = vadd.f32 0.0, %v2890
  %2892 = vdwg.mxu0
  %2893 = vrot.lane.b32.xlu0 %v2200, 112
  %v2894 = vpop.permute.xlu0 %2893
  %2895 = vrot.lane.b32.xlu0 %v2203, 112
  %v2896 = vpop.permute.xlu0 %2895
  %2897 = vrot.lane.b32.xlu0 %v2239, 112
  %v2898 = vpop.permute.xlu0 %2897
  %2899 = vrot.lane.b32.xlu0 %v2242, 112
  %v2900 = vpop.permute.xlu0 %2899
  %v2901 = vsel %vm934, %v2894, 0
  %v2903 = vsel %vm934, %v2896, 0
  %v2905 = vsel %vm934, %v2898, 0
  %v2907 = vsel %vm934, %v2900, 0
  %2909 = vmatpush.xpose.msra.mxu0 0.0
  %2910 = vmatpush.xpose.msra.mxu0 0.0
  %2911 = vmatpush.xpose.msra.mxu0 0.0
  %2912 = vmatpush.xpose.msra.mxu0 0.0
  %2913 = vmatpush.xpose.msra.mxu0 0.0
  %2914 = vmatpush.xpose.msra.mxu0 0.0
  %2915 = vmatpush.xpose.msra.mxu0 0.0
  %2916 = vmatpush.xpose.msra.mxu0 0.0
  %2917 = vmatpush.xpose.msra.mxu0 0.0
  %2918 = vmatpush.xpose.msra.mxu0 0.0
  %2919 = vmatpush.xpose.msra.mxu0 0.0
  %2920 = vmatpush.xpose.msra.mxu0 0.0
  %2921 = vmatpush.xpose.msra.mxu0 0.0
  %2922 = vmatpush.xpose.msra.mxu0 0.0
  %2923 = vmatpush.xpose.msra.mxu0 %v2907
  %2924 = vmatpush.xpose.msra.mxu0 %v2905
  %2925 = vmatmul.f32.gmra.mxu0 %v2901
  %v2926 = vpop.f32.mrf.mxu0
  %v2927 = vadd.f32 0.0, %v2926
  %2928 = vmatmul.f32.gmra.mxu0 %v2903
  %v2929 = vpop.f32.mrf.mxu0
  %v2930 = vadd.f32 0.0, %v2929
  %2931 = vdwg.mxu0
  %v2932 = vmul.f32 %v2927, 0.35355338
  %v2933 = vmul.f32 %v2930, 0.35355338
  %v2934 = vsel %vm972, %v2932, -inf
  %2935 = vmax.xlane.f32.xlu0 %v2934
  %v2936 = vpop.xlane.xlu0 %2935
  %v2937 = vsel %vm972, %v2933, -inf
  %2938 = vmax.xlane.f32.xlu0 %v2937
  %v2939 = vpop.xlane.xlu0 %2938
  %v2940 = vsub.f32 %v2932, %v2936
  %v2941 = vsub.f32 %v2933, %v2939
  %v2942 = vmul.f32 %v2940, 1.442695
  %v2943 = vpow.pop %v2942
  %v2944 = vmul.f32 %v2941, 1.442695
  %v2945 = vpow.pop %v2944
  %v2946 = vsel %vm972, %v2943, 0.0
  %2947 = vadd.xlane.f32.xlu0 %v2946
  %v2948 = vpop.xlane.xlu0 %2947
  %v2949 = vsel %vm972, %v2945, 0.0
  %2950 = vadd.xlane.f32.xlu0 %v2949
  %v2951 = vpop.xlane.xlu0 %2950
  %v2952 = vrcp.pop %v2948
  %v2953 = vrcp.pop %v2951
  %v2954 = vmul.f32 %v2943, %v2952
  %v2955 = vmul.f32 %v2945, %v2953
  %2956 = vrot.lane.b32.xlu0 %v2278, 112
  %v2957 = vpop.permute.xlu0 %2956
  %2958 = vrot.lane.b32.xlu0 %v2281, 112
  %v2959 = vpop.permute.xlu0 %2958
  %v2962 = vsel %vm972, %v2954, 0
  %v2965 = vsel %vm972, %v2955, 0
  %v2967 = vsel %vm193, %v2959, 0
  %2969 = vmatpush.msra.mxu0 0.0
  %2970 = vmatpush.msra.mxu0 0.0
  %2971 = vmatpush.msra.mxu0 0.0
  %2972 = vmatpush.msra.mxu0 0.0
  %2973 = vmatpush.msra.mxu0 0.0
  %2974 = vmatpush.msra.mxu0 0.0
  %2975 = vmatpush.msra.mxu0 0.0
  %2976 = vmatpush.msra.mxu0 0.0
  %2977 = vmatpush.msra.mxu0 0.0
  %2978 = vmatpush.msra.mxu0 0.0
  %2979 = vmatpush.msra.mxu0 0.0
  %2980 = vmatpush.msra.mxu0 0.0
  %2981 = vmatpush.msra.mxu0 0.0
  %2982 = vmatpush.msra.mxu0 0.0
  %2983 = vmatpush.msra.mxu0 %v2967
  %2984 = vmatpush.msra.mxu0 %v2957
  %2985 = vmatmul.f32.gmra.mxu0 %v2962
  %v2986 = vpop.f32.mrf.mxu0
  %v2987 = vadd.f32 0.0, %v2986
  %2988 = vmatmul.f32.gmra.mxu0 %v2965
  %v2989 = vpop.f32.mrf.mxu0
  %v2990 = vadd.f32 0.0, %v2989
  %2991 = vdwg.mxu0
  %2992 = vrot.lane.b32.xlu0 %v2200, 104
  %v2993 = vpop.permute.xlu0 %2992
  %2994 = vrot.lane.b32.xlu0 %v2203, 104
  %v2995 = vpop.permute.xlu0 %2994
  %2996 = vrot.lane.b32.xlu0 %v2239, 104
  %v2997 = vpop.permute.xlu0 %2996
  %2998 = vrot.lane.b32.xlu0 %v2242, 104
  %v2999 = vpop.permute.xlu0 %2998
  %v3000 = vsel %vm934, %v2993, 0
  %v3002 = vsel %vm934, %v2995, 0
  %v3004 = vsel %vm934, %v2997, 0
  %v3006 = vsel %vm934, %v2999, 0
  %3008 = vmatpush.xpose.msra.mxu0 0.0
  %3009 = vmatpush.xpose.msra.mxu0 0.0
  %3010 = vmatpush.xpose.msra.mxu0 0.0
  %3011 = vmatpush.xpose.msra.mxu0 0.0
  %3012 = vmatpush.xpose.msra.mxu0 0.0
  %3013 = vmatpush.xpose.msra.mxu0 0.0
  %3014 = vmatpush.xpose.msra.mxu0 0.0
  %3015 = vmatpush.xpose.msra.mxu0 0.0
  %3016 = vmatpush.xpose.msra.mxu0 0.0
  %3017 = vmatpush.xpose.msra.mxu0 0.0
  %3018 = vmatpush.xpose.msra.mxu0 0.0
  %3019 = vmatpush.xpose.msra.mxu0 0.0
  %3020 = vmatpush.xpose.msra.mxu0 0.0
  %3021 = vmatpush.xpose.msra.mxu0 0.0
  %3022 = vmatpush.xpose.msra.mxu0 %v3006
  %3023 = vmatpush.xpose.msra.mxu0 %v3004
  %3024 = vmatmul.f32.gmra.mxu0 %v3000
  %v3025 = vpop.f32.mrf.mxu0
  %v3026 = vadd.f32 0.0, %v3025
  %3027 = vmatmul.f32.gmra.mxu0 %v3002
  %v3028 = vpop.f32.mrf.mxu0
  %v3029 = vadd.f32 0.0, %v3028
  %3030 = vdwg.mxu0
  %v3031 = vmul.f32 %v3026, 0.35355338
  %v3032 = vmul.f32 %v3029, 0.35355338
  %v3033 = vsel %vm972, %v3031, -inf
  %3034 = vmax.xlane.f32.xlu0 %v3033
  %v3035 = vpop.xlane.xlu0 %3034
  %v3036 = vsel %vm972, %v3032, -inf
  %3037 = vmax.xlane.f32.xlu0 %v3036
  %v3038 = vpop.xlane.xlu0 %3037
  %v3039 = vsub.f32 %v3031, %v3035
  %v3040 = vsub.f32 %v3032, %v3038
  %v3041 = vmul.f32 %v3039, 1.442695
  %v3042 = vpow.pop %v3041
  %v3043 = vmul.f32 %v3040, 1.442695
  %v3044 = vpow.pop %v3043
  %v3045 = vsel %vm972, %v3042, 0.0
  %3046 = vadd.xlane.f32.xlu0 %v3045
  %v3047 = vpop.xlane.xlu0 %3046
  %v3048 = vsel %vm972, %v3044, 0.0
  %3049 = vadd.xlane.f32.xlu0 %v3048
  %v3050 = vpop.xlane.xlu0 %3049
  %v3051 = vrcp.pop %v3047
  %v3052 = vrcp.pop %v3050
  %v3053 = vmul.f32 %v3042, %v3051
  %v3054 = vmul.f32 %v3044, %v3052
  %3055 = vrot.lane.b32.xlu0 %v2278, 104
  %v3056 = vpop.permute.xlu0 %3055
  %3057 = vrot.lane.b32.xlu0 %v2281, 104
  %v3058 = vpop.permute.xlu0 %3057
  %v3061 = vsel %vm972, %v3053, 0
  %v3064 = vsel %vm972, %v3054, 0
  %v3066 = vsel %vm193, %v3058, 0
  %3068 = vmatpush.msra.mxu0 0.0
  %3069 = vmatpush.msra.mxu0 0.0
  %3070 = vmatpush.msra.mxu0 0.0
  %3071 = vmatpush.msra.mxu0 0.0
  %3072 = vmatpush.msra.mxu0 0.0
  %3073 = vmatpush.msra.mxu0 0.0
  %3074 = vmatpush.msra.mxu0 0.0
  %3075 = vmatpush.msra.mxu0 0.0
  %3076 = vmatpush.msra.mxu0 0.0
  %3077 = vmatpush.msra.mxu0 0.0
  %3078 = vmatpush.msra.mxu0 0.0
  %3079 = vmatpush.msra.mxu0 0.0
  %3080 = vmatpush.msra.mxu0 0.0
  %3081 = vmatpush.msra.mxu0 0.0
  %3082 = vmatpush.msra.mxu0 %v3066
  %3083 = vmatpush.msra.mxu0 %v3056
  %3084 = vmatmul.f32.gmra.mxu0 %v3061
  %v3085 = vpop.f32.mrf.mxu0
  %v3086 = vadd.f32 0.0, %v3085
  %3087 = vmatmul.f32.gmra.mxu0 %v3064
  %v3088 = vpop.f32.mrf.mxu0
  %v3089 = vadd.f32 0.0, %v3088
  %3090 = vdwg.mxu0
  %3093 = vrot.lane.b32.xlu0 %v2888, 8
  %v3094 = vpop.permute.xlu0 %3093
  %3095 = vrot.lane.b32.xlu0 %v2891, 8
  %v3096 = vpop.permute.xlu0 %3095
  %3101 = vrot.lane.b32.xlu0 %v2987, 16
  %v3102 = vpop.permute.xlu0 %3101
  %3103 = vrot.lane.b32.xlu0 %v2990, 16
  %v3104 = vpop.permute.xlu0 %3103
  %3109 = vrot.lane.b32.xlu0 %v3086, 24
  %v3110 = vpop.permute.xlu0 %3109
  %3111 = vrot.lane.b32.xlu0 %v3089, 24
  %v3112 = vpop.permute.xlu0 %3111
  %v3115 = vsel %vm934, %v2788, %v3094
  %v3116 = vsel %vm934, %v2791, %v3096
  %v3117 = vsel %vm1351, %v3115, %v3102
  %v3118 = vsel %vm1351, %v3116, %v3104
  %v3119 = vsel %vm1354, %v3117, %v3110
  %v3120 = vsel %vm1354, %v3118, %v3112
  %s3121 = scalar_lea.vmem %s11, 32
  %v3122 = vld [vmem:[%s3121] sm:$0xff]
  %v3123 = vld [vmem:[%s3121 + $0x8] sm:$0xff]
  %v3124 = vld [vmem:[%s3121 + $0x10] sm:$0xff]
  %v3125 = vld [vmem:[%s3121 + $0x18] sm:$0xff]
  %s3126 = scalar_lea.vmem %s12, 1
  %v3127 = vld [vmem:[%s3126] sm:$0x1]
  %v3129 = vperm.slane %v3127, 0
  %v3132 = vsel %vm205, %v2700, 0
  %v3135 = vsel %vm205, %v2701, 0
  %v3138 = vsel %vm205, %v3119, 0
  %v3141 = vsel %vm205, %v3120, 0
  %3143 = vmatpush.msra.mxu0 0.0
  %3144 = vmatpush.msra.mxu0 0.0
  %3145 = vmatpush.msra.mxu0 0.0
  %3146 = vmatpush.msra.mxu0 0.0
  %3147 = vmatpush.msra.mxu0 0.0
  %3148 = vmatpush.msra.mxu0 0.0
  %3149 = vmatpush.msra.mxu0 0.0
  %3150 = vmatpush.msra.mxu0 0.0
  %3151 = vmatpush.msra.mxu0 0.0
  %3152 = vmatpush.msra.mxu0 0.0
  %3153 = vmatpush.msra.mxu0 0.0
  %3154 = vmatpush.msra.mxu0 0.0
  %3155 = vmatpush.msra.mxu0 %v3125
  %3156 = vmatpush.msra.mxu0 %v3124
  %3157 = vmatpush.msra.mxu0 %v3123
  %3158 = vmatpush.msra.mxu0 %v3122
  %3159 = vmatmul.f32.gmra.mxu0 %v3132
  %v3160 = vpop.f32.mrf.mxu0
  %v3161 = vadd.f32 %v3129, %v3160
  %3162 = vmatmul.f32.gmra.mxu0 %v3135
  %v3163 = vpop.f32.mrf.mxu0
  %v3164 = vadd.f32 %v3129, %v3163
  %3165 = vmatmul.f32.gmra.mxu0 %v3138
  %v3166 = vpop.f32.mrf.mxu0
  %v3167 = vadd.f32 %v3129, %v3166
  %3168 = vmatmul.f32.gmra.mxu0 %v3141
  %v3169 = vpop.f32.mrf.mxu0
  %v3170 = vadd.f32 %v3129, %v3169
  %3171 = vdwg.mxu0
  %v3172 = vadd.f32 %v2150, %v3161
  %v3173 = vadd.f32 %v2151, %v3164
  %v3174 = vadd.f32 %v2152, %v3167
  %v3175 = vadd.f32 %v2153, %v3170
  %s3176 = scalar_lea.vmem %s13, 1
  %v3177 = vld [vmem:[%s3176] sm:$0x1]
  %s3178 = scalar_lea.vmem %s14, 1
  %v3179 = vld [vmem:[%s3178] sm:$0x1]
  %v3180 = vsel %vm205, %v3172, 0.0
  %3181 = vadd.xlane.f32.xlu0 %v3180
  %v3182 = vpop.xlane.xlu0 %3181
  %v3183 = vsel %vm205, %v3173, 0.0
  %3184 = vadd.xlane.f32.xlu0 %v3183
  %v3185 = vpop.xlane.xlu0 %3184
  %v3186 = vsel %vm205, %v3174, 0.0
  %3187 = vadd.xlane.f32.xlu0 %v3186
  %v3188 = vpop.xlane.xlu0 %3187
  %v3189 = vsel %vm205, %v3175, 0.0
  %3190 = vadd.xlane.f32.xlu0 %v3189
  %v3191 = vpop.xlane.xlu0 %3190
  %v3192 = vmul.f32 %v3182, %v1849
  %v3193 = vmul.f32 %v3185, %v1849
  %v3194 = vmul.f32 %v3188, %v1849
  %v3195 = vmul.f32 %v3191, %v1849
  %v3196 = vsub.f32 %v3172, %v3192
  %v3197 = vsub.f32 %v3173, %v3193
  %v3198 = vsub.f32 %v3174, %v3194
  %v3199 = vsub.f32 %v3175, %v3195
  %v3200 = vmul.f32 %v3196, %v3196
  %v3201 = vmul.f32 %v3197, %v3197
  %v3202 = vmul.f32 %v3198, %v3198
  %v3203 = vmul.f32 %v3199, %v3199
  %v3204 = vsel %vm205, %v3200, 0.0
  %3205 = vadd.xlane.f32.xlu0 %v3204
  %v3206 = vpop.xlane.xlu0 %3205
  %v3207 = vsel %vm205, %v3201, 0.0
  %3208 = vadd.xlane.f32.xlu0 %v3207
  %v3209 = vpop.xlane.xlu0 %3208
  %v3210 = vsel %vm205, %v3202, 0.0
  %3211 = vadd.xlane.f32.xlu0 %v3210
  %v3212 = vpop.xlane.xlu0 %3211
  %v3213 = vsel %vm205, %v3203, 0.0
  %3214 = vadd.xlane.f32.xlu0 %v3213
  %v3215 = vpop.xlane.xlu0 %3214
  %v3216 = vmul.f32 %v3206, %v1849
  %v3217 = vmul.f32 %v3209, %v1849
  %v3218 = vmul.f32 %v3212, %v1849
  %v3219 = vmul.f32 %v3215, %v1849
  %v3220 = vadd.f32 %v3216, 1e-05
  %v3221 = vadd.f32 %v3217, 1e-05
  %v3222 = vadd.f32 %v3218, 1e-05
  %v3223 = vadd.f32 %v3219, 1e-05
  %v3224 = vrsqrt.pop %v3220
  %v3225 = vmul.f32 %v3224, %v3220
  %v3226 = vmul.f32 %v3225, %v3224
  %v3227 = vmul.f32 0.5, %v3226
  %v3228 = vsub.f32 1.5, %v3227
  %v3229 = vmul.f32 %v3224, %v3228
  %vm3230 = vweird.f32 %v3220
  %vm3231 = vweird.f32 %v3224
  %vm3232 = vmor %vm3230, %vm3231
  %v3233 = vsel %vm3232, %v3224, %v3229
  %v3234 = vrsqrt.pop %v3221
  %v3235 = vmul.f32 %v3234, %v3221
  %v3236 = vmul.f32 %v3235, %v3234
  %v3237 = vmul.f32 0.5, %v3236
  %v3238 = vsub.f32 1.5, %v3237
  %v3239 = vmul.f32 %v3234, %v3238
  %vm3240 = vweird.f32 %v3221
  %vm3241 = vweird.f32 %v3234
  %vm3242 = vmor %vm3240, %vm3241
  %v3243 = vsel %vm3242, %v3234, %v3239
  %v3244 = vrsqrt.pop %v3222
  %v3245 = vmul.f32 %v3244, %v3222
  %v3246 = vmul.f32 %v3245, %v3244
  %v3247 = vmul.f32 0.5, %v3246
  %v3248 = vsub.f32 1.5, %v3247
  %v3249 = vmul.f32 %v3244, %v3248
  %vm3250 = vweird.f32 %v3222
  %vm3251 = vweird.f32 %v3244
  %vm3252 = vmor %vm3250, %vm3251
  %v3253 = vsel %vm3252, %v3244, %v3249
  %v3254 = vrsqrt.pop %v3223
  %v3255 = vmul.f32 %v3254, %v3223
  %v3256 = vmul.f32 %v3255, %v3254
  %v3257 = vmul.f32 0.5, %v3256
  %v3258 = vsub.f32 1.5, %v3257
  %v3259 = vmul.f32 %v3254, %v3258
  %vm3260 = vweird.f32 %v3223
  %vm3261 = vweird.f32 %v3254
  %vm3262 = vmor %vm3260, %vm3261
  %v3263 = vsel %vm3262, %v3254, %v3259
  %v3264 = vmul.f32 %v3196, %v3233
  %v3265 = vmul.f32 %v3197, %v3243
  %v3266 = vmul.f32 %v3198, %v3253
  %v3267 = vmul.f32 %v3199, %v3263
  %v3269 = vperm.slane %v3177, 0
  %v3271 = vmul.f32 %v3264, %v3269
  %v3272 = vmul.f32 %v3265, %v3269
  %v3273 = vmul.f32 %v3266, %v3269
  %v3274 = vmul.f32 %v3267, %v3269
  %v3276 = vperm.slane %v3179, 0
  %v3278 = vadd.f32 %v3271, %v3276
  %v3279 = vadd.f32 %v3272, %v3276
  %v3280 = vadd.f32 %v3273, %v3276
  %v3281 = vadd.f32 %v3274, %v3276
  %s3282 = scalar_lea.vmem %s15, 32
  %v3283 = vld [vmem:[%s3282] sm:$0xff]
  %v3284 = vld [vmem:[%s3282 + $0x8] sm:$0xff]
  %v3285 = vld [vmem:[%s3282 + $0x10] sm:$0xff]
  %v3286 = vld [vmem:[%s3282 + $0x18] sm:$0xff]
  %s3287 = scalar_lea.vmem %s16, 1
  %v3288 = vld [vmem:[%s3287] sm:$0x1]
  %v3290 = vperm.slane %v3288, 0
  %v3293 = vsel %vm205, %v3278, 0
  %v3296 = vsel %vm205, %v3279, 0
  %v3299 = vsel %vm205, %v3280, 0
  %v3302 = vsel %vm205, %v3281, 0
  %3304 = vmatpush.msra.mxu0 0.0
  %3305 = vmatpush.msra.mxu0 0.0
  %3306 = vmatpush.msra.mxu0 0.0
  %3307 = vmatpush.msra.mxu0 0.0
  %3308 = vmatpush.msra.mxu0 0.0
  %3309 = vmatpush.msra.mxu0 0.0
  %3310 = vmatpush.msra.mxu0 0.0
  %3311 = vmatpush.msra.mxu0 0.0
  %3312 = vmatpush.msra.mxu0 0.0
  %3313 = vmatpush.msra.mxu0 0.0
  %3314 = vmatpush.msra.mxu0 0.0
  %3315 = vmatpush.msra.mxu0 0.0
  %3316 = vmatpush.msra.mxu0 %v3286
  %3317 = vmatpush.msra.mxu0 %v3285
  %3318 = vmatpush.msra.mxu0 %v3284
  %3319 = vmatpush.msra.mxu0 %v3283
  %3320 = vmatmul.f32.gmra.mxu0 %v3293
  %v3321 = vpop.f32.mrf.mxu0
  %v3322 = vadd.f32 %v3290, %v3321
  %3323 = vmatmul.f32.gmra.mxu0 %v3296
  %v3324 = vpop.f32.mrf.mxu0
  %v3325 = vadd.f32 %v3290, %v3324
  %3326 = vmatmul.f32.gmra.mxu0 %v3299
  %v3327 = vpop.f32.mrf.mxu0
  %v3328 = vadd.f32 %v3290, %v3327
  %3329 = vmatmul.f32.gmra.mxu0 %v3302
  %v3330 = vpop.f32.mrf.mxu0
  %v3331 = vadd.f32 %v3290, %v3330
  %3332 = vdwg.mxu0
  %v3333 = vmax.f32 %v3322, 0.0
  %v3334 = vmax.f32 %v3325, 0.0
  %v3335 = vmax.f32 %v3328, 0.0
  %v3336 = vmax.f32 %v3331, 0.0
  %s3337 = scalar_lea.vmem %s17, 64
  %v3338 = vld [vmem:[%s3337] sm:$0xff]
  %v3339 = vld [vmem:[%s3337 + $0x8] sm:$0xff]
  %v3340 = vld [vmem:[%s3337 + $0x10] sm:$0xff]
  %v3341 = vld [vmem:[%s3337 + $0x18] sm:$0xff]
  %v3342 = vld [vmem:[%s3337 + $0x20] sm:$0xff]
  %v3343 = vld [vmem:[%s3337 + $0x28] sm:$0xff]
  %v3344 = vld [vmem:[%s3337 + $0x30] sm:$0xff]
  %v3345 = vld [vmem:[%s3337 + $0x38] sm:$0xff]
  %s3346 = scalar_lea.vmem %s18, 1
  %v3347 = vld [vmem:[%s3346] sm:$0x1]
  %v3349 = vperm.slane %v3347, 0
  %v3352 = vsel %vm208, %v3333, 0
  %v3355 = vsel %vm208, %v3334, 0
  %v3358 = vsel %vm208, %v3335, 0
  %v3361 = vsel %vm208, %v3336, 0
  %3363 = vmatpush.msra.mxu0 0.0
  %3364 = vmatpush.msra.mxu0 0.0
  %3365 = vmatpush.msra.mxu0 0.0
  %3366 = vmatpush.msra.mxu0 0.0
  %3367 = vmatpush.msra.mxu0 0.0
  %3368 = vmatpush.msra.mxu0 0.0
  %3369 = vmatpush.msra.mxu0 0.0
  %3370 = vmatpush.msra.mxu0 0.0
  %3371 = vmatpush.msra.mxu0 %v3345
  %3372 = vmatpush.msra.mxu0 %v3344
  %3373 = vmatpush.msra.mxu0 %v3343
  %3374 = vmatpush.msra.mxu0 %v3342
  %3375 = vmatpush.msra.mxu0 %v3341
  %3376 = vmatpush.msra.mxu0 %v3340
  %3377 = vmatpush.msra.mxu0 %v3339
  %3378 = vmatpush.msra.mxu0 %v3338
  %3379 = vmatmul.f32.gmra.mxu0 %v3352
  %v3380 = vpop.f32.mrf.mxu0
  %v3381 = vadd.f32 %v3349, %v3380
  %3382 = vmatmul.f32.gmra.mxu0 %v3355
  %v3383 = vpop.f32.mrf.mxu0
  %v3384 = vadd.f32 %v3349, %v3383
  %3385 = vmatmul.f32.gmra.mxu0 %v3358
  %v3386 = vpop.f32.mrf.mxu0
  %v3387 = vadd.f32 %v3349, %v3386
  %3388 = vmatmul.f32.gmra.mxu0 %v3361
  %v3389 = vpop.f32.mrf.mxu0
  %v3390 = vadd.f32 %v3349, %v3389
  %3391 = vdwg.mxu0
  %v3392 = vadd.f32 %v3278, %v3381
  %v3393 = vadd.f32 %v3279, %v3384
  %v3394 = vadd.f32 %v3280, %v3387
  %v3395 = vadd.f32 %v3281, %v3390
  %s3396 = scalar_lea.vmem %s19, 1
  %v3397 = vld [vmem:[%s3396] sm:$0x1]
  %s3398 = scalar_lea.vmem %s20, 1
  %v3399 = vld [vmem:[%s3398] sm:$0x1]
  %v3400 = vsel %vm205, %v3392, 0.0
  %3401 = vadd.xlane.f32.xlu0 %v3400
  %v3402 = vpop.xlane.xlu0 %3401
  %v3403 = vsel %vm205, %v3393, 0.0
  %3404 = vadd.xlane.f32.xlu0 %v3403
  %v3405 = vpop.xlane.xlu0 %3404
  %v3406 = vsel %vm205, %v3394, 0.0
  %3407 = vadd.xlane.f32.xlu0 %v3406
  %v3408 = vpop.xlane.xlu0 %3407
  %v3409 = vsel %vm205, %v3395, 0.0
  %3410 = vadd.xlane.f32.xlu0 %v3409
  %v3411 = vpop.xlane.xlu0 %3410
  %v3412 = vmul.f32 %v3402, %v1849
  %v3413 = vmul.f32 %v3405, %v1849
  %v3414 = vmul.f32 %v3408, %v1849
  %v3415 = vmul.f32 %v3411, %v1849
  %v3416 = vsub.f32 %v3392, %v3412
  %v3417 = vsub.f32 %v3393, %v3413
  %v3418 = vsub.f32 %v3394, %v3414
  %v3419 = vsub.f32 %v3395, %v3415
  %v3420 = vmul.f32 %v3416, %v3416
  %v3421 = vmul.f32 %v3417, %v3417
  %v3422 = vmul.f32 %v3418, %v3418
  %v3423 = vmul.f32 %v3419, %v3419
  %v3424 = vsel %vm205, %v3420, 0.0
  %3425 = vadd.xlane.f32.xlu0 %v3424
  %v3426 = vpop.xlane.xlu0 %3425
  %v3427 = vsel %vm205, %v3421, 0.0
  %3428 = vadd.xlane.f32.xlu0 %v3427
  %v3429 = vpop.xlane.xlu0 %3428
  %v3430 = vsel %vm205, %v3422, 0.0
  %3431 = vadd.xlane.f32.xlu0 %v3430
  %v3432 = vpop.xlane.xlu0 %3431
  %v3433 = vsel %vm205, %v3423, 0.0
  %3434 = vadd.xlane.f32.xlu0 %v3433
  %v3435 = vpop.xlane.xlu0 %3434
  %v3436 = vmul.f32 %v3426, %v1849
  %v3437 = vmul.f32 %v3429, %v1849
  %v3438 = vmul.f32 %v3432, %v1849
  %v3439 = vmul.f32 %v3435, %v1849
  %v3440 = vadd.f32 %v3436, 1e-05
  %v3441 = vadd.f32 %v3437, 1e-05
  %v3442 = vadd.f32 %v3438, 1e-05
  %v3443 = vadd.f32 %v3439, 1e-05
  %v3444 = vrsqrt.pop %v3440
  %v3445 = vmul.f32 %v3444, %v3440
  %v3446 = vmul.f32 %v3445, %v3444
  %v3447 = vmul.f32 0.5, %v3446
  %v3448 = vsub.f32 1.5, %v3447
  %v3449 = vmul.f32 %v3444, %v3448
  %vm3450 = vweird.f32 %v3440
  %vm3451 = vweird.f32 %v3444
  %vm3452 = vmor %vm3450, %vm3451
  %v3453 = vsel %vm3452, %v3444, %v3449
  %v3454 = vrsqrt.pop %v3441
  %v3455 = vmul.f32 %v3454, %v3441
  %v3456 = vmul.f32 %v3455, %v3454
  %v3457 = vmul.f32 0.5, %v3456
  %v3458 = vsub.f32 1.5, %v3457
  %v3459 = vmul.f32 %v3454, %v3458
  %vm3460 = vweird.f32 %v3441
  %vm3461 = vweird.f32 %v3454
  %vm3462 = vmor %vm3460, %vm3461
  %v3463 = vsel %vm3462, %v3454, %v3459
  %v3464 = vrsqrt.pop %v3442
  %v3465 = vmul.f32 %v3464, %v3442
  %v3466 = vmul.f32 %v3465, %v3464
  %v3467 = vmul.f32 0.5, %v3466
  %v3468 = vsub.f32 1.5, %v3467
  %v3469 = vmul.f32 %v3464, %v3468
  %vm3470 = vweird.f32 %v3442
  %vm3471 = vweird.f32 %v3464
  %vm3472 = vmor %vm3470, %vm3471
  %v3473 = vsel %vm3472, %v3464, %v3469
  %v3474 = vrsqrt.pop %v3443
  %v3475 = vmul.f32 %v3474, %v3443
  %v3476 = vmul.f32 %v3475, %v3474
  %v3477 = vmul.f32 0.5, %v3476
  %v3478 = vsub.f32 1.5, %v3477
  %v3479 = vmul.f32 %v3474, %v3478
  %vm3480 = vweird.f32 %v3443
  %vm3481 = vweird.f32 %v3474
  %vm3482 = vmor %vm3480, %vm3481
  %v3483 = vsel %vm3482, %v3474, %v3479
  %v3484 = vmul.f32 %v3416, %v3453
  %v3485 = vmul.f32 %v3417, %v3463
  %v3486 = vmul.f32 %v3418, %v3473
  %v3487 = vmul.f32 %v3419, %v3483
  %v3489 = vperm.slane %v3397, 0
  %v3491 = vmul.f32 %v3484, %v3489
  %v3492 = vmul.f32 %v3485, %v3489
  %v3493 = vmul.f32 %v3486, %v3489
  %v3494 = vmul.f32 %v3487, %v3489
  %v3496 = vperm.slane %v3399, 0
  %v3498 = vadd.f32 %v3491, %v3496
  %v3499 = vadd.f32 %v3492, %v3496
  %v3500 = vadd.f32 %v3493, %v3496
  %v3501 = vadd.f32 %v3494, %v3496
  %v3502 = vsel %vm205, %v3498, -inf
  %vm3503 = vcmask 253952
  %v3504 = vsel %vm3503, %v3499, -inf
  %v3505 = vmax.f32 %v3502, %v3504
  %v3506 = vrot.slane %v3505, 4
  %v3507 = vmax.f32 %v3505, %v3506
  %v3508 = vrot.slane %v3507, 2
  %v3509 = vmax.f32 %v3507, %v3508
  %v3510 = vrot.slane %v3509, 1
  %v3511 = vmax.f32 %v3509, %v3510
  %v3512 = vsel %vm205, %v3500, -inf
  %v3513 = vsel %vm3503, %v3501, -inf
  %v3514 = vmax.f32 %v3512, %v3513
  %v3515 = vrot.slane %v3514, 4
  %v3516 = vmax.f32 %v3514, %v3515
  %v3517 = vrot.slane %v3516, 2
  %v3518 = vmax.f32 %v3516, %v3517
  %v3519 = vrot.slane %v3518, 1
  %v3520 = vmax.f32 %v3518, %v3519
  %v3521 = vsel %vm193, %v3511, %v3520
  %v3522 = vld [vmem:[%s21] sm:$0xff]
  %v3523 = vld [vmem:[%s21 + $0x8] sm:$0xff]
  %v3524 = vld [vmem:[%s21 + $0x10] sm:$0xff]
  %v3525 = vld [vmem:[%s21 + $0x18] sm:$0xff]
  %v3526 = vld [vmem:[%s22] sm:$0x1]
  %v3528 = vperm.slane %v3526, 0
  %v3531 = vsel %vm205, %v3521, 0
  %3533 = vmatpush.msra.mxu0 0.0
  %3534 = vmatpush.msra.mxu0 0.0
  %3535 = vmatpush.msra.mxu0 0.0
  %3536 = vmatpush.msra.mxu0 0.0
  %3537 = vmatpush.msra.mxu0 0.0
  %3538 = vmatpush.msra.mxu0 0.0
  %3539 = vmatpush.msra.mxu0 0.0
  %3540 = vmatpush.msra.mxu0 0.0
  %3541 = vmatpush.msra.mxu0 0.0
  %3542 = vmatpush.msra.mxu0 0.0
  %3543 = vmatpush.msra.mxu0 0.0
  %3544 = vmatpush.msra.mxu0 0.0
  %3545 = vmatpush.msra.mxu0 %v3525
  %3546 = vmatpush.msra.mxu0 %v3524
  %3547 = vmatpush.msra.mxu0 %v3523
  %3548 = vmatpush.msra.mxu0 %v3522
  %3549 = vmatmul.f32.gmra.mxu0 %v3531
  %v3550 = vpop.f32.mrf.mxu0
  %v3551 = vadd.f32 %v3528, %v3550
  %3552 = vdwg.mxu0
  %v3553 = vmax.f32 %v3551, 0.0
  %v3554 = vld [vmem:[%s23] sm:$0xff]
  %v3555 = vld [vmem:[%s23 + $0x8] sm:$0xff]
  %v3556 = vld [vmem:[%s23 + $0x10] sm:$0xff]
  %v3557 = vld [vmem:[%s23 + $0x18] sm:$0xff]
  %v3558 = vld [vmem:[%s23 + $0x20] sm:$0xff]
  %v3559 = vld [vmem:[%s23 + $0x28] sm:$0xff]
  %v3560 = vld [vmem:[%s23 + $0x30] sm:$0xff]
  %v3561 = vld [vmem:[%s23 + $0x38] sm:$0xff]
  %v3562 = vld [vmem:[#allocation2] sm:$0x1]
  %v3564 = vperm.slane %v3562, 0
  %v3567 = vsel %vm208, %v3553, 0
  %3569 = vmatpush.msra.mxu0 0.0
  %3570 = vmatpush.msra.mxu0 0.0
  %3571 = vmatpush.msra.mxu0 0.0
  %3572 = vmatpush.msra.mxu0 0.0
  %3573 = vmatpush.msra.mxu0 0.0
  %3574 = vmatpush.msra.mxu0 0.0
  %3575 = vmatpush.msra.mxu0 0.0
  %3576 = vmatpush.msra.mxu0 0.0
  %3577 = vmatpush.msra.mxu0 %v3561
  %3578 = vmatpush.msra.mxu0 %v3560
  %3579 = vmatpush.msra.mxu0 %v3559
  %3580 = vmatpush.msra.mxu0 %v3558
  %3581 = vmatpush.msra.mxu0 %v3557
  %3582 = vmatpush.msra.mxu0 %v3556
  %3583 = vmatpush.msra.mxu0 %v3555
  %3584 = vmatpush.msra.mxu0 %v3554
  %3585 = vmatmul.f32.gmra.mxu0 %v3567
  %v3586 = vpop.f32.mrf.mxu0
  %v3587 = vadd.f32 %v3564, %v3586
  %3588 = vdwg.mxu0
  %v3589 = vsub.f32 0.0, %v3587
  %v3590 = vmul.f32 %v3589, 1.442695
  %v3591 = vpow.pop %v3590
  %v3592 = vadd.f32 %v3591, 1.0
  %v3593 = vrcp.pop %v3592
  %vm3594 = vcmask 1024
  %3595 = vst.msk [vmem:[%s25] sm:$0x3] %vm3594, %v3593
  // Predicated region
  $region102: #{forward.1} parent=0 // pred_check
    _
  $region103: #{forward.1} parent=0 // pred_check_branch
    %3597 = sbr.rel (0) target = $region105
  $region104: #{forward.1} parent=0 // pred_region
    _
  $region105: #{forward.1} parent=0 // pred_fallthru
    _
  // Predicated region
  $region106: #{forward.1} parent=0 // pred_check
    _
  $region107: #{forward.1} parent=0 // pred_check_branch
    %3599 = sbr.rel (0) target = $region109
  $region108: #{forward.1} parent=0 // pred_region
    _
  $region109: #{forward.1} parent=0 // pred_fallthru
    _

</llo_original>
